<compile_context>
chip_gen: v5e
topology: v5e:2x2
jax: 0.10.0
libtpu: 0.0.40
codegen_flags: <defaults>
</compile_context>

<pallas_src>
import functools

import jax
import jax.numpy as jnp
from jax.experimental import pallas as pl
from jax.experimental.pallas import tpu as pltpu

G = 128  # padded lane width of one gate group (and of the packed hidden state)


def _sigmoid(v):
    return 1.0 / (1.0 + jnp.exp(-v))


def _make_kernel(B, T, H, num_layers, num_classes, bi):
    per_layer = 4 if bi else 3  # w_same, (w_cross), bias, w_hh_blk

    def kernel(*refs):
        x_ref = refs[0]
        w_refs = refs[1:-1]
        out_ref = refs[-1]

        seq = x_ref[...]  # (T*B, K_in) time-major stack; block s = time s

        h_final = None
        for layer in range(num_layers):
            base = layer * per_layer
            if bi:
                w_same_ref = w_refs[base]
                w_cross_ref = w_refs[base + 1]
                b_ref = w_refs[base + 2]
                w_hh_ref = w_refs[base + 3]
            else:
                w_same_ref = w_refs[base]
                w_cross_ref = None
                b_ref = w_refs[base + 1]
                w_hh_ref = w_refs[base + 2]

            # ---- hoisted input projection: all T steps, both directions ----
            p_same = jnp.dot(seq, w_same_ref[...],
                             preferred_element_type=jnp.float32) + b_ref[...]
            if bi:
                p_cross = jnp.dot(seq, w_cross_ref[...],
                                  preferred_element_type=jnp.float32)
            # xz[s]: gate input for fused step s (fwd @ time s, bwd @ time T-1-s)
            xz = []
            for s in range(T):
                v = p_same[s * B:(s + 1) * B]
                if bi:
                    v = v + p_cross[(T - 1 - s) * B:(T - s) * B]
                xz.append(v)

            w_hh = w_hh_ref[...]  # (G, 4G) block-diagonal over directions

            h = jnp.zeros((B, G), jnp.float32)
            c = jnp.zeros((B, G), jnp.float32)
            is_last = layer == num_layers - 1
            outs = []
            for s in range(T):
                gates = jnp.dot(h, w_hh,
                                preferred_element_type=jnp.float32) + xz[s]
                # PyTorch gate order [i, f, g, o]; each group is 128-lane
                # aligned so the slices are free (no relayout).
                i_g = _sigmoid(gates[:, 0 * G:1 * G])
                f_g = _sigmoid(gates[:, 1 * G:2 * G])
                g_g = jnp.tanh(gates[:, 2 * G:3 * G])
                o_g = _sigmoid(gates[:, 3 * G:4 * G])
                c = f_g * c + i_g * g_g
                h = o_g * jnp.tanh(c)
                if not is_last:
                    outs.append(h)
            h_final = h  # lanes [0:H] = fwd h(T-1), [H:2H] = bwd h(0)
            if not is_last:
                # Next-layer stack: block s = [yf(s) | yb(T-1-s) | 0] (padded).
                seq = jnp.concatenate(outs, axis=0)  # (T*B, G)
            # TODO(synk): nn.LSTM inter-layer dropout(0.2) is a training-time
            # op; identity here (inference semantics).

        # ---- MLP head: ReLU(fc2(ReLU(fc1(feature)))); dropout(0.1) identity ----
        head = num_layers * per_layer
        fc1_w = w_refs[head][...]       # (G, 128), K-padded
        fc1_b = w_refs[head + 1][...]   # (1, 128)
        fc2_w = w_refs[head + 2][...]   # (128, 128), N-padded
        fc2_b = w_refs[head + 3][...]   # (1, 128), N-padded
        h1 = jnp.dot(h_final, fc1_w, preferred_element_type=jnp.float32) + fc1_b
        h1 = jnp.maximum(h1, 0.0)
        h2 = jnp.dot(h1, fc2_w, preferred_element_type=jnp.float32) + fc2_b
        h2 = jnp.maximum(h2, 0.0)
        out_ref[...] = h2[:, 0:num_classes].astype(out_ref.dtype)

    return kernel


def init_params(key, num_classes, input_size, hidden_size, num_layers, bi=True):
    """PyTorch-style init (U(-k, k), k = 1/sqrt(fan)).

    Returns (fused_params, raw_params).  fused_params hold the padded /
    direction-fused layouts consumed by the kernel; raw_params hold the plain
    PyTorch-layout weights used by the pure-JAX reference check.
    """
    H = hidden_size
    num_dirs = 2 if bi else 1
    assert num_dirs * H <= G, "hidden_size too large for the padded gate layout"
    k_l = 1.0 / float(H) ** 0.5

    raw_lstm = []
    fused_lstm = []
    for layer in range(num_layers):
        in_dim = input_size if layer == 0 else num_dirs * H
        raw_dirs = []
        for _ in range(num_dirs):
            key, k1, k2, k3, k4 = jax.random.split(key, 5)
            w_ih = jax.random.uniform(k1, (4 * H, in_dim), jnp.float32, -k_l, k_l)
            w_hh = jax.random.uniform(k2, (4 * H, H), jnp.float32, -k_l, k_l)
            bias = (jax.random.uniform(k3, (4 * H,), jnp.float32, -k_l, k_l)
                    + jax.random.uniform(k4, (4 * H,), jnp.float32, -k_l, k_l))
            raw_dirs.append((w_ih, w_hh, bias))
        raw_lstm.append(raw_dirs)

        # ---- build padded / fused layouts ----
        k_in = in_dim if layer == 0 else G   # layer >= 1 consumes the padded h
        w_same = jnp.zeros((k_in, 4 * G), jnp.float32)
        w_cross = jnp.zeros((k_in, 4 * G), jnp.float32) if bi else None
        b_pad = jnp.zeros((1, 4 * G), jnp.float32)
        w_hh_blk = jnp.zeros((G, 4 * G), jnp.float32)

        w_ih_f, w_hh_f, b_f = raw_dirs[0]
        if bi:
            w_ih_b, w_hh_b, b_b = raw_dirs[1]
        for k in range(4):
            gc = k * G
            # recurrent weights: block-diagonal over directions
            w_hh_blk = w_hh_blk.at[0:H, gc:gc + H].set(
                w_hh_f[k * H:(k + 1) * H, :].T)
            b_pad = b_pad.at[0, gc:gc + H].set(b_f[k * H:(k + 1) * H])
            if bi:
                w_hh_blk = w_hh_blk.at[H:2 * H, gc + H:gc + 2 * H].set(
                    w_hh_b[k * H:(k + 1) * H, :].T)
                b_pad = b_pad.at[0, gc + H:gc + 2 * H].set(
                    b_b[k * H:(k + 1) * H])
            # input-projection weights
            if layer == 0:
                w_same = w_same.at[:, gc:gc + H].set(
                    w_ih_f[k * H:(k + 1) * H, :].T)
                if bi:
                    w_cross = w_cross.at[:, gc + H:gc + 2 * H].set(
                        w_ih_b[k * H:(k + 1) * H, :].T)
            else:
                wf_t = w_ih_f[k * H:(k + 1) * H, :].T   # (in_dim, H)
                if bi:
                    wb_t = w_ih_b[k * H:(k + 1) * H, :].T
                    # "same": yf(s) -> fwd gates @ s ; yb(T-1-s) -> bwd gates
                    w_same = w_same.at[0:H, gc:gc + H].set(wf_t[0:H])
                    w_same = w_same.at[H:2 * H, gc + H:gc + 2 * H].set(
                        wb_t[H:2 * H])
                    # "cross": yb -> fwd gates ; yf -> bwd gates (time-mirrored)
                    w_cross = w_cross.at[H:2 * H, gc:gc + H].set(wf_t[H:2 * H])
                    w_cross = w_cross.at[0:H, gc + H:gc + 2 * H].set(wb_t[0:H])
                else:
                    w_same = w_same.at[0:H, gc:gc + H].set(wf_t)
        fused = [w_same]
        if bi:
            fused.append(w_cross)
        fused.extend([b_pad, w_hh_blk])
        fused_lstm.append(fused)

    feat_dim = num_dirs * H
    k1_fc = 1.0 / float(feat_dim) ** 0.5
    k2_fc = 1.0 / float(128) ** 0.5
    key, a, b_, c_, d_ = jax.random.split(key, 5)
    fc1_w = jax.random.uniform(a, (128, feat_dim), jnp.float32, -k1_fc, k1_fc)
    fc1_b = jax.random.uniform(b_, (128,), jnp.float32, -k1_fc, k1_fc)
    fc2_w = jax.random.uniform(c_, (num_classes, 128), jnp.float32, -k2_fc, k2_fc)
    fc2_b = jax.random.uniform(d_, (num_classes,), jnp.float32, -k2_fc, k2_fc)

    fc1_w_pad = jnp.zeros((G, 128), jnp.float32).at[0:feat_dim, :].set(fc1_w.T)
    fc2_w_pad = jnp.zeros((128, 128), jnp.float32).at[:, 0:num_classes].set(fc2_w.T)
    fc2_b_pad = jnp.zeros((1, 128), jnp.float32).at[0, 0:num_classes].set(fc2_b)

    fused_params = {
        "lstm": fused_lstm,
        "head": [fc1_w_pad, fc1_b.reshape(1, -1), fc2_w_pad, fc2_b_pad],
    }
    raw_params = {"lstm": raw_lstm, "head": (fc1_w, fc1_b, fc2_w, fc2_b)}
    return fused_params, raw_params


@functools.partial(
    jax.jit,
    static_argnames=("hidden_size", "num_layers", "num_classes", "bi"))
def lstm_model_forward(x_btd, params, *, hidden_size, num_layers, num_classes,
                       bi):
    """x_btd: (B, T, input_size) -> (B, num_classes), one fused pallas_call."""
    B, T, D = x_btd.shape
    kernel = _make_kernel(B, T, hidden_size, num_layers, num_classes, bi)
    # Present the input as a lane-dense time-major (T*B, D) stack; this tiny
    # transpose/reshape is layout plumbing done once in XLA.
    x_stack = jnp.transpose(x_btd.astype(jnp.float32), (1, 0, 2)).reshape(T * B, D)

    flat = [x_stack]
    for layer_w in params["lstm"]:
        flat.extend(layer_w)
    flat.extend(params["head"])

    vmem = pl.BlockSpec(memory_space=pltpu.MemorySpace.VMEM)
    return pl.pallas_call(
        kernel,
        out_shape=jax.ShapeDtypeStruct((B, num_classes), jnp.float32),
        in_specs=[vmem] * len(flat),
        out_specs=vmem,
    )(*flat)


def _reference_forward(x, raw, hidden_size, num_layers, bi):
    """Pure-JAX reference matching torch.nn.LSTM + head semantics."""
    B, T, _ = x.shape
    H = hidden_size
    num_dirs = 2 if bi else 1
    seq = x
    for layer in range(num_layers):
        per_dir = []
        for d in range(num_dirs):
            w_ih, w_hh, bias = raw["lstm"][layer][d]
            h = jnp.zeros((B, H), jnp.float32)
            c = jnp.zeros((B, H), jnp.float32)
            order = range(T) if d == 0 else range(T - 1, -1, -1)
            ys = [None] * T
            for t in order:
                g = seq[:, t, :] @ w_ih.T + h @ w_hh.T + bias
                i = _sigmoid(g[:, 0 * H:1 * H])
                f = _sigmoid(g[:, 1 * H:2 * H])
                gg = jnp.tanh(g[:, 2 * H:3 * H])
                o = _sigmoid(g[:, 3 * H:4 * H])
                c = f * c + i * gg
                h = o * jnp.tanh(c)
                ys[t] = h
            per_dir.append(jnp.stack(ys, axis=1))
        seq = jnp.concatenate(per_dir, axis=-1)
    if bi:
        feat = jnp.concatenate([seq[:, -1, :H], seq[:, 0, H:]], axis=-1)
    else:
        feat = seq[:, -1, :]
    fc1_w, fc1_b, fc2_w, fc2_b = raw["head"]
    h1 = jnp.maximum(feat @ fc1_w.T + fc1_b, 0.0)
    h2 = h1 @ fc2_w.T + fc2_b
    return jnp.maximum(h2, 0.0)


if __name__ == "__main__":
    num_classes = 5
    input_size = 16
    hidden_size = 32
    num_layers = 2
    batch = 2
    seq_len = 8
    bi = True

    key = jax.random.PRNGKey(0)
    key, pk, xk = jax.random.split(key, 3)
    params, raw = init_params(pk, num_classes, input_size, hidden_size,
                              num_layers, bi=bi)
    x = jax.random.normal(xk, (batch, seq_len, input_size), jnp.float32)

    out = lstm_model_forward(x, params, hidden_size=hidden_size,
                             num_layers=num_layers, num_classes=num_classes,
                             bi=bi)
    out = jax.block_until_ready(out)
    assert out.shape == (batch, num_classes)
    assert bool(jnp.all(jnp.isfinite(out)))

    ref = _reference_forward(x, raw, hidden_size, num_layers, bi)
    max_err = float(jnp.max(jnp.abs(out - ref)))
    assert bool(jnp.allclose(out, ref, atol=2e-2, rtol=2e-2)), (
        f"kernel/reference mismatch, max abs err = {max_err}")
    print("KERNEL_OK")
</pallas_src>

<mosaic_0001>
module attributes {stable_mosaic.version = 11 : i64} {
  func.func @kernel(%arg0: memref<16x16xf32, #tpu.memory_space<vmem>>, %arg1: memref<16x512xf32, #tpu.memory_space<vmem>>, %arg2: memref<16x512xf32, #tpu.memory_space<vmem>>, %arg3: memref<1x512xf32, #tpu.memory_space<vmem>>, %arg4: memref<128x512xf32, #tpu.memory_space<vmem>>, %arg5: memref<128x512xf32, #tpu.memory_space<vmem>>, %arg6: memref<128x512xf32, #tpu.memory_space<vmem>>, %arg7: memref<1x512xf32, #tpu.memory_space<vmem>>, %arg8: memref<128x512xf32, #tpu.memory_space<vmem>>, %arg9: memref<128x128xf32, #tpu.memory_space<vmem>>, %arg10: memref<1x128xf32, #tpu.memory_space<vmem>>, %arg11: memref<128x128xf32, #tpu.memory_space<vmem>>, %arg12: memref<1x128xf32, #tpu.memory_space<vmem>>, %arg13: memref<2x5xf32, #tpu.memory_space<vmem>>) attributes {dimension_semantics = [], scalar_prefetch = 0 : i64, scratch_operands = 0 : i64, tpu.core_type = #tpu.core_type<tc>} {
    %c0 = arith.constant 0 : index
    %c0_0 = arith.constant 0 : index
    %0 = vector.load %arg0[%c0, %c0_0] : memref<16x16xf32, #tpu.memory_space<vmem>>, vector<16x16xf32>
    %c0_1 = arith.constant 0 : index
    %c0_2 = arith.constant 0 : index
    %1 = vector.load %arg1[%c0_1, %c0_2] : memref<16x512xf32, #tpu.memory_space<vmem>>, vector<16x512xf32>
    %cst = arith.constant dense<0.000000e+00> : vector<16x512xf32>
    %2 = tpu.matmul %0, %1, %cst {dimension_numbers = #tpu.dot_dimension_numbers<[1], [0], [0], [1], [0, 0, 1, 1], [], []>} : vector<16x16xf32>, vector<16x512xf32>, vector<16x512xf32> -> vector<16x512xf32>
    %c0_3 = arith.constant 0 : index
    %c0_4 = arith.constant 0 : index
    %3 = vector.load %arg3[%c0_3, %c0_4] : memref<1x512xf32, #tpu.memory_space<vmem>>, vector<1x512xf32>
    %4 = vector.broadcast %3 : vector<1x512xf32> to vector<16x512xf32>
    %5 = arith.addf %2, %4 : vector<16x512xf32>
    %c0_5 = arith.constant 0 : index
    %c0_6 = arith.constant 0 : index
    %6 = vector.load %arg2[%c0_5, %c0_6] : memref<16x512xf32, #tpu.memory_space<vmem>>, vector<16x512xf32>
    %cst_7 = arith.constant dense<0.000000e+00> : vector<16x512xf32>
    %7 = tpu.matmul %0, %6, %cst_7 {dimension_numbers = #tpu.dot_dimension_numbers<[1], [0], [0], [1], [0, 0, 1, 1], [], []>} : vector<16x16xf32>, vector<16x512xf32>, vector<16x512xf32> -> vector<16x512xf32>
    %8 = vector.extract_strided_slice %5 {offsets = [0, 0], sizes = [2, 512], strides = [1, 1]} : vector<16x512xf32> to vector<2x512xf32>
    %9 = vector.extract_strided_slice %7 {offsets = [14, 0], sizes = [2, 512], strides = [1, 1]} : vector<16x512xf32> to vector<2x512xf32>
    %10 = arith.addf %8, %9 : vector<2x512xf32>
    %11 = vector.extract_strided_slice %5 {offsets = [2, 0], sizes = [2, 512], strides = [1, 1]} : vector<16x512xf32> to vector<2x512xf32>
    %12 = vector.extract_strided_slice %7 {offsets = [12, 0], sizes = [2, 512], strides = [1, 1]} : vector<16x512xf32> to vector<2x512xf32>
    %13 = arith.addf %11, %12 : vector<2x512xf32>
    %14 = vector.extract_strided_slice %5 {offsets = [4, 0], sizes = [2, 512], strides = [1, 1]} : vector<16x512xf32> to vector<2x512xf32>
    %15 = vector.extract_strided_slice %7 {offsets = [10, 0], sizes = [2, 512], strides = [1, 1]} : vector<16x512xf32> to vector<2x512xf32>
    %16 = arith.addf %14, %15 : vector<2x512xf32>
    %17 = vector.extract_strided_slice %5 {offsets = [6, 0], sizes = [2, 512], strides = [1, 1]} : vector<16x512xf32> to vector<2x512xf32>
    %18 = vector.extract_strided_slice %7 {offsets = [8, 0], sizes = [2, 512], strides = [1, 1]} : vector<16x512xf32> to vector<2x512xf32>
    %19 = arith.addf %17, %18 : vector<2x512xf32>
    %20 = vector.extract_strided_slice %5 {offsets = [8, 0], sizes = [2, 512], strides = [1, 1]} : vector<16x512xf32> to vector<2x512xf32>
    %21 = vector.extract_strided_slice %7 {offsets = [6, 0], sizes = [2, 512], strides = [1, 1]} : vector<16x512xf32> to vector<2x512xf32>
    %22 = arith.addf %20, %21 : vector<2x512xf32>
    %23 = vector.extract_strided_slice %5 {offsets = [10, 0], sizes = [2, 512], strides = [1, 1]} : vector<16x512xf32> to vector<2x512xf32>
    %24 = vector.extract_strided_slice %7 {offsets = [4, 0], sizes = [2, 512], strides = [1, 1]} : vector<16x512xf32> to vector<2x512xf32>
    %25 = arith.addf %23, %24 : vector<2x512xf32>
    %26 = vector.extract_strided_slice %5 {offsets = [12, 0], sizes = [2, 512], strides = [1, 1]} : vector<16x512xf32> to vector<2x512xf32>
    %27 = vector.extract_strided_slice %7 {offsets = [2, 0], sizes = [2, 512], strides = [1, 1]} : vector<16x512xf32> to vector<2x512xf32>
    %28 = arith.addf %26, %27 : vector<2x512xf32>
    %29 = vector.extract_strided_slice %5 {offsets = [14, 0], sizes = [2, 512], strides = [1, 1]} : vector<16x512xf32> to vector<2x512xf32>
    %30 = vector.extract_strided_slice %7 {offsets = [0, 0], sizes = [2, 512], strides = [1, 1]} : vector<16x512xf32> to vector<2x512xf32>
    %31 = arith.addf %29, %30 : vector<2x512xf32>
    %c0_8 = arith.constant 0 : index
    %c0_9 = arith.constant 0 : index
    %32 = vector.load %arg4[%c0_8, %c0_9] : memref<128x512xf32, #tpu.memory_space<vmem>>, vector<128x512xf32>
    %cst_10 = arith.constant 0.000000e+00 : f32
    %33 = vector.broadcast %cst_10 : f32 to vector<2x128xf32>
    %cst_11 = arith.constant 0.000000e+00 : f32
    %34 = vector.broadcast %cst_11 : f32 to vector<2x128xf32>
    %cst_12 = arith.constant dense<0.000000e+00> : vector<2x512xf32>
    %35 = tpu.matmul %33, %32, %cst_12 {dimension_numbers = #tpu.dot_dimension_numbers<[1], [0], [0], [1], [0, 0, 1, 1], [], []>} : vector<2x128xf32>, vector<128x512xf32>, vector<2x512xf32> -> vector<2x512xf32>
    %36 = arith.addf %35, %10 : vector<2x512xf32>
    %37 = vector.extract_strided_slice %36 {offsets = [0, 0], sizes = [2, 128], strides = [1, 1]} : vector<2x512xf32> to vector<2x128xf32>
    %cst_13 = arith.constant 0.000000e+00 : f32
    %38 = vector.broadcast %cst_13 : f32 to vector<2x128xf32>
    %39 = arith.subf %38, %37 : vector<2x128xf32>
    %40 = math.exp %39 : vector<2x128xf32>
    %cst_14 = arith.constant 1.000000e+00 : f32
    %41 = vector.broadcast %cst_14 : f32 to vector<2x128xf32>
    %42 = arith.addf %41, %40 : vector<2x128xf32>
    %cst_15 = arith.constant 1.000000e+00 : f32
    %43 = vector.broadcast %cst_15 : f32 to vector<2x128xf32>
    %44 = arith.divf %43, %42 : vector<2x128xf32>
    %45 = vector.extract_strided_slice %36 {offsets = [0, 128], sizes = [2, 128], strides = [1, 1]} : vector<2x512xf32> to vector<2x128xf32>
    %cst_16 = arith.constant 0.000000e+00 : f32
    %46 = vector.broadcast %cst_16 : f32 to vector<2x128xf32>
    %47 = arith.subf %46, %45 : vector<2x128xf32>
    %48 = math.exp %47 : vector<2x128xf32>
    %cst_17 = arith.constant 1.000000e+00 : f32
    %49 = vector.broadcast %cst_17 : f32 to vector<2x128xf32>
    %50 = arith.addf %49, %48 : vector<2x128xf32>
    %cst_18 = arith.constant 1.000000e+00 : f32
    %51 = vector.broadcast %cst_18 : f32 to vector<2x128xf32>
    %52 = arith.divf %51, %50 : vector<2x128xf32>
    %53 = vector.extract_strided_slice %36 {offsets = [0, 256], sizes = [2, 128], strides = [1, 1]} : vector<2x512xf32> to vector<2x128xf32>
    %54 = math.tanh %53 : vector<2x128xf32>
    %55 = vector.extract_strided_slice %36 {offsets = [0, 384], sizes = [2, 128], strides = [1, 1]} : vector<2x512xf32> to vector<2x128xf32>
    %cst_19 = arith.constant 0.000000e+00 : f32
    %56 = vector.broadcast %cst_19 : f32 to vector<2x128xf32>
    %57 = arith.subf %56, %55 : vector<2x128xf32>
    %58 = math.exp %57 : vector<2x128xf32>
    %cst_20 = arith.constant 1.000000e+00 : f32
    %59 = vector.broadcast %cst_20 : f32 to vector<2x128xf32>
    %60 = arith.addf %59, %58 : vector<2x128xf32>
    %cst_21 = arith.constant 1.000000e+00 : f32
    %61 = vector.broadcast %cst_21 : f32 to vector<2x128xf32>
    %62 = arith.divf %61, %60 : vector<2x128xf32>
    %63 = arith.mulf %52, %34 : vector<2x128xf32>
    %64 = arith.mulf %44, %54 : vector<2x128xf32>
    %65 = arith.addf %63, %64 : vector<2x128xf32>
    %66 = math.tanh %65 : vector<2x128xf32>
    %67 = arith.mulf %62, %66 : vector<2x128xf32>
    %cst_22 = arith.constant dense<0.000000e+00> : vector<2x512xf32>
    %68 = tpu.matmul %67, %32, %cst_22 {dimension_numbers = #tpu.dot_dimension_numbers<[1], [0], [0], [1], [0, 0, 1, 1], [], []>} : vector<2x128xf32>, vector<128x512xf32>, vector<2x512xf32> -> vector<2x512xf32>
    %69 = arith.addf %68, %13 : vector<2x512xf32>
    %70 = vector.extract_strided_slice %69 {offsets = [0, 0], sizes = [2, 128], strides = [1, 1]} : vector<2x512xf32> to vector<2x128xf32>
    %cst_23 = arith.constant 0.000000e+00 : f32
    %71 = vector.broadcast %cst_23 : f32 to vector<2x128xf32>
    %72 = arith.subf %71, %70 : vector<2x128xf32>
    %73 = math.exp %72 : vector<2x128xf32>
    %cst_24 = arith.constant 1.000000e+00 : f32
    %74 = vector.broadcast %cst_24 : f32 to vector<2x128xf32>
    %75 = arith.addf %74, %73 : vector<2x128xf32>
    %cst_25 = arith.constant 1.000000e+00 : f32
    %76 = vector.broadcast %cst_25 : f32 to vector<2x128xf32>
    %77 = arith.divf %76, %75 : vector<2x128xf32>
    %78 = vector.extract_strided_slice %69 {offsets = [0, 128], sizes = [2, 128], strides = [1, 1]} : vector<2x512xf32> to vector<2x128xf32>
    %cst_26 = arith.constant 0.000000e+00 : f32
    %79 = vector.broadcast %cst_26 : f32 to vector<2x128xf32>
    %80 = arith.subf %79, %78 : vector<2x128xf32>
    %81 = math.exp %80 : vector<2x128xf32>
    %cst_27 = arith.constant 1.000000e+00 : f32
    %82 = vector.broadcast %cst_27 : f32 to vector<2x128xf32>
    %83 = arith.addf %82, %81 : vector<2x128xf32>
    %cst_28 = arith.constant 1.000000e+00 : f32
    %84 = vector.broadcast %cst_28 : f32 to vector<2x128xf32>
    %85 = arith.divf %84, %83 : vector<2x128xf32>
    %86 = vector.extract_strided_slice %69 {offsets = [0, 256], sizes = [2, 128], strides = [1, 1]} : vector<2x512xf32> to vector<2x128xf32>
    %87 = math.tanh %86 : vector<2x128xf32>
    %88 = vector.extract_strided_slice %69 {offsets = [0, 384], sizes = [2, 128], strides = [1, 1]} : vector<2x512xf32> to vector<2x128xf32>
    %cst_29 = arith.constant 0.000000e+00 : f32
    %89 = vector.broadcast %cst_29 : f32 to vector<2x128xf32>
    %90 = arith.subf %89, %88 : vector<2x128xf32>
    %91 = math.exp %90 : vector<2x128xf32>
    %cst_30 = arith.constant 1.000000e+00 : f32
    %92 = vector.broadcast %cst_30 : f32 to vector<2x128xf32>
    %93 = arith.addf %92, %91 : vector<2x128xf32>
    %cst_31 = arith.constant 1.000000e+00 : f32
    %94 = vector.broadcast %cst_31 : f32 to vector<2x128xf32>
    %95 = arith.divf %94, %93 : vector<2x128xf32>
    %96 = arith.mulf %85, %65 : vector<2x128xf32>
    %97 = arith.mulf %77, %87 : vector<2x128xf32>
    %98 = arith.addf %96, %97 : vector<2x128xf32>
    %99 = math.tanh %98 : vector<2x128xf32>
    %100 = arith.mulf %95, %99 : vector<2x128xf32>
    %cst_32 = arith.constant dense<0.000000e+00> : vector<2x512xf32>
    %101 = tpu.matmul %100, %32, %cst_32 {dimension_numbers = #tpu.dot_dimension_numbers<[1], [0], [0], [1], [0, 0, 1, 1], [], []>} : vector<2x128xf32>, vector<128x512xf32>, vector<2x512xf32> -> vector<2x512xf32>
    %102 = arith.addf %101, %16 : vector<2x512xf32>
    %103 = vector.extract_strided_slice %102 {offsets = [0, 0], sizes = [2, 128], strides = [1, 1]} : vector<2x512xf32> to vector<2x128xf32>
    %cst_33 = arith.constant 0.000000e+00 : f32
    %104 = vector.broadcast %cst_33 : f32 to vector<2x128xf32>
    %105 = arith.subf %104, %103 : vector<2x128xf32>
    %106 = math.exp %105 : vector<2x128xf32>
    %cst_34 = arith.constant 1.000000e+00 : f32
    %107 = vector.broadcast %cst_34 : f32 to vector<2x128xf32>
    %108 = arith.addf %107, %106 : vector<2x128xf32>
    %cst_35 = arith.constant 1.000000e+00 : f32
    %109 = vector.broadcast %cst_35 : f32 to vector<2x128xf32>
    %110 = arith.divf %109, %108 : vector<2x128xf32>
    %111 = vector.extract_strided_slice %102 {offsets = [0, 128], sizes = [2, 128], strides = [1, 1]} : vector<2x512xf32> to vector<2x128xf32>
    %cst_36 = arith.constant 0.000000e+00 : f32
    %112 = vector.broadcast %cst_36 : f32 to vector<2x128xf32>
    %113 = arith.subf %112, %111 : vector<2x128xf32>
    %114 = math.exp %113 : vector<2x128xf32>
    %cst_37 = arith.constant 1.000000e+00 : f32
    %115 = vector.broadcast %cst_37 : f32 to vector<2x128xf32>
    %116 = arith.addf %115, %114 : vector<2x128xf32>
    %cst_38 = arith.constant 1.000000e+00 : f32
    %117 = vector.broadcast %cst_38 : f32 to vector<2x128xf32>
    %118 = arith.divf %117, %116 : vector<2x128xf32>
    %119 = vector.extract_strided_slice %102 {offsets = [0, 256], sizes = [2, 128], strides = [1, 1]} : vector<2x512xf32> to vector<2x128xf32>
    %120 = math.tanh %119 : vector<2x128xf32>
    %121 = vector.extract_strided_slice %102 {offsets = [0, 384], sizes = [2, 128], strides = [1, 1]} : vector<2x512xf32> to vector<2x128xf32>
    %cst_39 = arith.constant 0.000000e+00 : f32
    %122 = vector.broadcast %cst_39 : f32 to vector<2x128xf32>
    %123 = arith.subf %122, %121 : vector<2x128xf32>
    %124 = math.exp %123 : vector<2x128xf32>
    %cst_40 = arith.constant 1.000000e+00 : f32
    %125 = vector.broadcast %cst_40 : f32 to vector<2x128xf32>
    %126 = arith.addf %125, %124 : vector<2x128xf32>
    %cst_41 = arith.constant 1.000000e+00 : f32
    %127 = vector.broadcast %cst_41 : f32 to vector<2x128xf32>
    %128 = arith.divf %127, %126 : vector<2x128xf32>
    %129 = arith.mulf %118, %98 : vector<2x128xf32>
    %130 = arith.mulf %110, %120 : vector<2x128xf32>
    %131 = arith.addf %129, %130 : vector<2x128xf32>
    %132 = math.tanh %131 : vector<2x128xf32>
    %133 = arith.mulf %128, %132 : vector<2x128xf32>
    %cst_42 = arith.constant dense<0.000000e+00> : vector<2x512xf32>
    %134 = tpu.matmul %133, %32, %cst_42 {dimension_numbers = #tpu.dot_dimension_numbers<[1], [0], [0], [1], [0, 0, 1, 1], [], []>} : vector<2x128xf32>, vector<128x512xf32>, vector<2x512xf32> -> vector<2x512xf32>
    %135 = arith.addf %134, %19 : vector<2x512xf32>
    %136 = vector.extract_strided_slice %135 {offsets = [0, 0], sizes = [2, 128], strides = [1, 1]} : vector<2x512xf32> to vector<2x128xf32>
    %cst_43 = arith.constant 0.000000e+00 : f32
    %137 = vector.broadcast %cst_43 : f32 to vector<2x128xf32>
    %138 = arith.subf %137, %136 : vector<2x128xf32>
    %139 = math.exp %138 : vector<2x128xf32>
    %cst_44 = arith.constant 1.000000e+00 : f32
    %140 = vector.broadcast %cst_44 : f32 to vector<2x128xf32>
    %141 = arith.addf %140, %139 : vector<2x128xf32>
    %cst_45 = arith.constant 1.000000e+00 : f32
    %142 = vector.broadcast %cst_45 : f32 to vector<2x128xf32>
    %143 = arith.divf %142, %141 : vector<2x128xf32>
    %144 = vector.extract_strided_slice %135 {offsets = [0, 128], sizes = [2, 128], strides = [1, 1]} : vector<2x512xf32> to vector<2x128xf32>
    %cst_46 = arith.constant 0.000000e+00 : f32
    %145 = vector.broadcast %cst_46 : f32 to vector<2x128xf32>
    %146 = arith.subf %145, %144 : vector<2x128xf32>
    %147 = math.exp %146 : vector<2x128xf32>
    %cst_47 = arith.constant 1.000000e+00 : f32
    %148 = vector.broadcast %cst_47 : f32 to vector<2x128xf32>
    %149 = arith.addf %148, %147 : vector<2x128xf32>
    %cst_48 = arith.constant 1.000000e+00 : f32
    %150 = vector.broadcast %cst_48 : f32 to vector<2x128xf32>
    %151 = arith.divf %150, %149 : vector<2x128xf32>
    %152 = vector.extract_strided_slice %135 {offsets = [0, 256], sizes = [2, 128], strides = [1, 1]} : vector<2x512xf32> to vector<2x128xf32>
    %153 = math.tanh %152 : vector<2x128xf32>
    %154 = vector.extract_strided_slice %135 {offsets = [0, 384], sizes = [2, 128], strides = [1, 1]} : vector<2x512xf32> to vector<2x128xf32>
    %cst_49 = arith.constant 0.000000e+00 : f32
    %155 = vector.broadcast %cst_49 : f32 to vector<2x128xf32>
    %156 = arith.subf %155, %154 : vector<2x128xf32>
    %157 = math.exp %156 : vector<2x128xf32>
    %cst_50 = arith.constant 1.000000e+00 : f32
    %158 = vector.broadcast %cst_50 : f32 to vector<2x128xf32>
    %159 = arith.addf %158, %157 : vector<2x128xf32>
    %cst_51 = arith.constant 1.000000e+00 : f32
    %160 = vector.broadcast %cst_51 : f32 to vector<2x128xf32>
    %161 = arith.divf %160, %159 : vector<2x128xf32>
    %162 = arith.mulf %151, %131 : vector<2x128xf32>
    %163 = arith.mulf %143, %153 : vector<2x128xf32>
    %164 = arith.addf %162, %163 : vector<2x128xf32>
    %165 = math.tanh %164 : vector<2x128xf32>
    %166 = arith.mulf %161, %165 : vector<2x128xf32>
    %cst_52 = arith.constant dense<0.000000e+00> : vector<2x512xf32>
    %167 = tpu.matmul %166, %32, %cst_52 {dimension_numbers = #tpu.dot_dimension_numbers<[1], [0], [0], [1], [0, 0, 1, 1], [], []>} : vector<2x128xf32>, vector<128x512xf32>, vector<2x512xf32> -> vector<2x512xf32>
    %168 = arith.addf %167, %22 : vector<2x512xf32>
    %169 = vector.extract_strided_slice %168 {offsets = [0, 0], sizes = [2, 128], strides = [1, 1]} : vector<2x512xf32> to vector<2x128xf32>
    %cst_53 = arith.constant 0.000000e+00 : f32
    %170 = vector.broadcast %cst_53 : f32 to vector<2x128xf32>
    %171 = arith.subf %170, %169 : vector<2x128xf32>
    %172 = math.exp %171 : vector<2x128xf32>
    %cst_54 = arith.constant 1.000000e+00 : f32
    %173 = vector.broadcast %cst_54 : f32 to vector<2x128xf32>
    %174 = arith.addf %173, %172 : vector<2x128xf32>
    %cst_55 = arith.constant 1.000000e+00 : f32
    %175 = vector.broadcast %cst_55 : f32 to vector<2x128xf32>
    %176 = arith.divf %175, %174 : vector<2x128xf32>
    %177 = vector.extract_strided_slice %168 {offsets = [0, 128], sizes = [2, 128], strides = [1, 1]} : vector<2x512xf32> to vector<2x128xf32>
    %cst_56 = arith.constant 0.000000e+00 : f32
    %178 = vector.broadcast %cst_56 : f32 to vector<2x128xf32>
    %179 = arith.subf %178, %177 : vector<2x128xf32>
    %180 = math.exp %179 : vector<2x128xf32>
    %cst_57 = arith.constant 1.000000e+00 : f32
    %181 = vector.broadcast %cst_57 : f32 to vector<2x128xf32>
    %182 = arith.addf %181, %180 : vector<2x128xf32>
    %cst_58 = arith.constant 1.000000e+00 : f32
    %183 = vector.broadcast %cst_58 : f32 to vector<2x128xf32>
    %184 = arith.divf %183, %182 : vector<2x128xf32>
    %185 = vector.extract_strided_slice %168 {offsets = [0, 256], sizes = [2, 128], strides = [1, 1]} : vector<2x512xf32> to vector<2x128xf32>
    %186 = math.tanh %185 : vector<2x128xf32>
    %187 = vector.extract_strided_slice %168 {offsets = [0, 384], sizes = [2, 128], strides = [1, 1]} : vector<2x512xf32> to vector<2x128xf32>
    %cst_59 = arith.constant 0.000000e+00 : f32
    %188 = vector.broadcast %cst_59 : f32 to vector<2x128xf32>
    %189 = arith.subf %188, %187 : vector<2x128xf32>
    %190 = math.exp %189 : vector<2x128xf32>
    %cst_60 = arith.constant 1.000000e+00 : f32
    %191 = vector.broadcast %cst_60 : f32 to vector<2x128xf32>
    %192 = arith.addf %191, %190 : vector<2x128xf32>
    %cst_61 = arith.constant 1.000000e+00 : f32
    %193 = vector.broadcast %cst_61 : f32 to vector<2x128xf32>
    %194 = arith.divf %193, %192 : vector<2x128xf32>
    %195 = arith.mulf %184, %164 : vector<2x128xf32>
    %196 = arith.mulf %176, %186 : vector<2x128xf32>
    %197 = arith.addf %195, %196 : vector<2x128xf32>
    %198 = math.tanh %197 : vector<2x128xf32>
    %199 = arith.mulf %194, %198 : vector<2x128xf32>
    %cst_62 = arith.constant dense<0.000000e+00> : vector<2x512xf32>
    %200 = tpu.matmul %199, %32, %cst_62 {dimension_numbers = #tpu.dot_dimension_numbers<[1], [0], [0], [1], [0, 0, 1, 1], [], []>} : vector<2x128xf32>, vector<128x512xf32>, vector<2x512xf32> -> vector<2x512xf32>
    %201 = arith.addf %200, %25 : vector<2x512xf32>
    %202 = vector.extract_strided_slice %201 {offsets = [0, 0], sizes = [2, 128], strides = [1, 1]} : vector<2x512xf32> to vector<2x128xf32>
    %cst_63 = arith.constant 0.000000e+00 : f32
    %203 = vector.broadcast %cst_63 : f32 to vector<2x128xf32>
    %204 = arith.subf %203, %202 : vector<2x128xf32>
    %205 = math.exp %204 : vector<2x128xf32>
    %cst_64 = arith.constant 1.000000e+00 : f32
    %206 = vector.broadcast %cst_64 : f32 to vector<2x128xf32>
    %207 = arith.addf %206, %205 : vector<2x128xf32>
    %cst_65 = arith.constant 1.000000e+00 : f32
    %208 = vector.broadcast %cst_65 : f32 to vector<2x128xf32>
    %209 = arith.divf %208, %207 : vector<2x128xf32>
    %210 = vector.extract_strided_slice %201 {offsets = [0, 128], sizes = [2, 128], strides = [1, 1]} : vector<2x512xf32> to vector<2x128xf32>
    %cst_66 = arith.constant 0.000000e+00 : f32
    %211 = vector.broadcast %cst_66 : f32 to vector<2x128xf32>
    %212 = arith.subf %211, %210 : vector<2x128xf32>
    %213 = math.exp %212 : vector<2x128xf32>
    %cst_67 = arith.constant 1.000000e+00 : f32
    %214 = vector.broadcast %cst_67 : f32 to vector<2x128xf32>
    %215 = arith.addf %214, %213 : vector<2x128xf32>
    %cst_68 = arith.constant 1.000000e+00 : f32
    %216 = vector.broadcast %cst_68 : f32 to vector<2x128xf32>
    %217 = arith.divf %216, %215 : vector<2x128xf32>
    %218 = vector.extract_strided_slice %201 {offsets = [0, 256], sizes = [2, 128], strides = [1, 1]} : vector<2x512xf32> to vector<2x128xf32>
    %219 = math.tanh %218 : vector<2x128xf32>
    %220 = vector.extract_strided_slice %201 {offsets = [0, 384], sizes = [2, 128], strides = [1, 1]} : vector<2x512xf32> to vector<2x128xf32>
    %cst_69 = arith.constant 0.000000e+00 : f32
    %221 = vector.broadcast %cst_69 : f32 to vector<2x128xf32>
    %222 = arith.subf %221, %220 : vector<2x128xf32>
    %223 = math.exp %222 : vector<2x128xf32>
    %cst_70 = arith.constant 1.000000e+00 : f32
    %224 = vector.broadcast %cst_70 : f32 to vector<2x128xf32>
    %225 = arith.addf %224, %223 : vector<2x128xf32>
    %cst_71 = arith.constant 1.000000e+00 : f32
    %226 = vector.broadcast %cst_71 : f32 to vector<2x128xf32>
    %227 = arith.divf %226, %225 : vector<2x128xf32>
    %228 = arith.mulf %217, %197 : vector<2x128xf32>
    %229 = arith.mulf %209, %219 : vector<2x128xf32>
    %230 = arith.addf %228, %229 : vector<2x128xf32>
    %231 = math.tanh %230 : vector<2x128xf32>
    %232 = arith.mulf %227, %231 : vector<2x128xf32>
    %cst_72 = arith.constant dense<0.000000e+00> : vector<2x512xf32>
    %233 = tpu.matmul %232, %32, %cst_72 {dimension_numbers = #tpu.dot_dimension_numbers<[1], [0], [0], [1], [0, 0, 1, 1], [], []>} : vector<2x128xf32>, vector<128x512xf32>, vector<2x512xf32> -> vector<2x512xf32>
    %234 = arith.addf %233, %28 : vector<2x512xf32>
    %235 = vector.extract_strided_slice %234 {offsets = [0, 0], sizes = [2, 128], strides = [1, 1]} : vector<2x512xf32> to vector<2x128xf32>
    %cst_73 = arith.constant 0.000000e+00 : f32
    %236 = vector.broadcast %cst_73 : f32 to vector<2x128xf32>
    %237 = arith.subf %236, %235 : vector<2x128xf32>
    %238 = math.exp %237 : vector<2x128xf32>
    %cst_74 = arith.constant 1.000000e+00 : f32
    %239 = vector.broadcast %cst_74 : f32 to vector<2x128xf32>
    %240 = arith.addf %239, %238 : vector<2x128xf32>
    %cst_75 = arith.constant 1.000000e+00 : f32
    %241 = vector.broadcast %cst_75 : f32 to vector<2x128xf32>
    %242 = arith.divf %241, %240 : vector<2x128xf32>
    %243 = vector.extract_strided_slice %234 {offsets = [0, 128], sizes = [2, 128], strides = [1, 1]} : vector<2x512xf32> to vector<2x128xf32>
    %cst_76 = arith.constant 0.000000e+00 : f32
    %244 = vector.broadcast %cst_76 : f32 to vector<2x128xf32>
    %245 = arith.subf %244, %243 : vector<2x128xf32>
    %246 = math.exp %245 : vector<2x128xf32>
    %cst_77 = arith.constant 1.000000e+00 : f32
    %247 = vector.broadcast %cst_77 : f32 to vector<2x128xf32>
    %248 = arith.addf %247, %246 : vector<2x128xf32>
    %cst_78 = arith.constant 1.000000e+00 : f32
    %249 = vector.broadcast %cst_78 : f32 to vector<2x128xf32>
    %250 = arith.divf %249, %248 : vector<2x128xf32>
    %251 = vector.extract_strided_slice %234 {offsets = [0, 256], sizes = [2, 128], strides = [1, 1]} : vector<2x512xf32> to vector<2x128xf32>
    %252 = math.tanh %251 : vector<2x128xf32>
    %253 = vector.extract_strided_slice %234 {offsets = [0, 384], sizes = [2, 128], strides = [1, 1]} : vector<2x512xf32> to vector<2x128xf32>
    %cst_79 = arith.constant 0.000000e+00 : f32
    %254 = vector.broadcast %cst_79 : f32 to vector<2x128xf32>
    %255 = arith.subf %254, %253 : vector<2x128xf32>
    %256 = math.exp %255 : vector<2x128xf32>
    %cst_80 = arith.constant 1.000000e+00 : f32
    %257 = vector.broadcast %cst_80 : f32 to vector<2x128xf32>
    %258 = arith.addf %257, %256 : vector<2x128xf32>
    %cst_81 = arith.constant 1.000000e+00 : f32
    %259 = vector.broadcast %cst_81 : f32 to vector<2x128xf32>
    %260 = arith.divf %259, %258 : vector<2x128xf32>
    %261 = arith.mulf %250, %230 : vector<2x128xf32>
    %262 = arith.mulf %242, %252 : vector<2x128xf32>
    %263 = arith.addf %261, %262 : vector<2x128xf32>
    %264 = math.tanh %263 : vector<2x128xf32>
    %265 = arith.mulf %260, %264 : vector<2x128xf32>
    %cst_82 = arith.constant dense<0.000000e+00> : vector<2x512xf32>
    %266 = tpu.matmul %265, %32, %cst_82 {dimension_numbers = #tpu.dot_dimension_numbers<[1], [0], [0], [1], [0, 0, 1, 1], [], []>} : vector<2x128xf32>, vector<128x512xf32>, vector<2x512xf32> -> vector<2x512xf32>
    %267 = arith.addf %266, %31 : vector<2x512xf32>
    %268 = vector.extract_strided_slice %267 {offsets = [0, 0], sizes = [2, 128], strides = [1, 1]} : vector<2x512xf32> to vector<2x128xf32>
    %cst_83 = arith.constant 0.000000e+00 : f32
    %269 = vector.broadcast %cst_83 : f32 to vector<2x128xf32>
    %270 = arith.subf %269, %268 : vector<2x128xf32>
    %271 = math.exp %270 : vector<2x128xf32>
    %cst_84 = arith.constant 1.000000e+00 : f32
    %272 = vector.broadcast %cst_84 : f32 to vector<2x128xf32>
    %273 = arith.addf %272, %271 : vector<2x128xf32>
    %cst_85 = arith.constant 1.000000e+00 : f32
    %274 = vector.broadcast %cst_85 : f32 to vector<2x128xf32>
    %275 = arith.divf %274, %273 : vector<2x128xf32>
    %276 = vector.extract_strided_slice %267 {offsets = [0, 128], sizes = [2, 128], strides = [1, 1]} : vector<2x512xf32> to vector<2x128xf32>
    %cst_86 = arith.constant 0.000000e+00 : f32
    %277 = vector.broadcast %cst_86 : f32 to vector<2x128xf32>
    %278 = arith.subf %277, %276 : vector<2x128xf32>
    %279 = math.exp %278 : vector<2x128xf32>
    %cst_87 = arith.constant 1.000000e+00 : f32
    %280 = vector.broadcast %cst_87 : f32 to vector<2x128xf32>
    %281 = arith.addf %280, %279 : vector<2x128xf32>
    %cst_88 = arith.constant 1.000000e+00 : f32
    %282 = vector.broadcast %cst_88 : f32 to vector<2x128xf32>
    %283 = arith.divf %282, %281 : vector<2x128xf32>
    %284 = vector.extract_strided_slice %267 {offsets = [0, 256], sizes = [2, 128], strides = [1, 1]} : vector<2x512xf32> to vector<2x128xf32>
    %285 = math.tanh %284 : vector<2x128xf32>
    %286 = vector.extract_strided_slice %267 {offsets = [0, 384], sizes = [2, 128], strides = [1, 1]} : vector<2x512xf32> to vector<2x128xf32>
    %cst_89 = arith.constant 0.000000e+00 : f32
    %287 = vector.broadcast %cst_89 : f32 to vector<2x128xf32>
    %288 = arith.subf %287, %286 : vector<2x128xf32>
    %289 = math.exp %288 : vector<2x128xf32>
    %cst_90 = arith.constant 1.000000e+00 : f32
    %290 = vector.broadcast %cst_90 : f32 to vector<2x128xf32>
    %291 = arith.addf %290, %289 : vector<2x128xf32>
    %cst_91 = arith.constant 1.000000e+00 : f32
    %292 = vector.broadcast %cst_91 : f32 to vector<2x128xf32>
    %293 = arith.divf %292, %291 : vector<2x128xf32>
    %294 = arith.mulf %283, %263 : vector<2x128xf32>
    %295 = arith.mulf %275, %285 : vector<2x128xf32>
    %296 = arith.addf %294, %295 : vector<2x128xf32>
    %297 = math.tanh %296 : vector<2x128xf32>
    %298 = arith.mulf %293, %297 : vector<2x128xf32>
    %299 = tpu.concatenate %67, %100, %133, %166, %199, %232, %265, %298 in 0 : vector<2x128xf32>, vector<2x128xf32>, vector<2x128xf32>, vector<2x128xf32>, vector<2x128xf32>, vector<2x128xf32>, vector<2x128xf32>, vector<2x128xf32> -> vector<16x128xf32>
    %c0_92 = arith.constant 0 : index
    %c0_93 = arith.constant 0 : index
    %300 = vector.load %arg5[%c0_92, %c0_93] : memref<128x512xf32, #tpu.memory_space<vmem>>, vector<128x512xf32>
    %cst_94 = arith.constant dense<0.000000e+00> : vector<16x512xf32>
    %301 = tpu.matmul %299, %300, %cst_94 {dimension_numbers = #tpu.dot_dimension_numbers<[1], [0], [0], [1], [0, 0, 1, 1], [], []>} : vector<16x128xf32>, vector<128x512xf32>, vector<16x512xf32> -> vector<16x512xf32>
    %c0_95 = arith.constant 0 : index
    %c0_96 = arith.constant 0 : index
    %302 = vector.load %arg7[%c0_95, %c0_96] : memref<1x512xf32, #tpu.memory_space<vmem>>, vector<1x512xf32>
    %303 = vector.broadcast %302 : vector<1x512xf32> to vector<16x512xf32>
    %304 = arith.addf %301, %303 : vector<16x512xf32>
    %c0_97 = arith.constant 0 : index
    %c0_98 = arith.constant 0 : index
    %305 = vector.load %arg6[%c0_97, %c0_98] : memref<128x512xf32, #tpu.memory_space<vmem>>, vector<128x512xf32>
    %cst_99 = arith.constant dense<0.000000e+00> : vector<16x512xf32>
    %306 = tpu.matmul %299, %305, %cst_99 {dimension_numbers = #tpu.dot_dimension_numbers<[1], [0], [0], [1], [0, 0, 1, 1], [], []>} : vector<16x128xf32>, vector<128x512xf32>, vector<16x512xf32> -> vector<16x512xf32>
    %307 = vector.extract_strided_slice %304 {offsets = [0, 0], sizes = [2, 512], strides = [1, 1]} : vector<16x512xf32> to vector<2x512xf32>
    %308 = vector.extract_strided_slice %306 {offsets = [14, 0], sizes = [2, 512], strides = [1, 1]} : vector<16x512xf32> to vector<2x512xf32>
    %309 = arith.addf %307, %308 : vector<2x512xf32>
    %310 = vector.extract_strided_slice %304 {offsets = [2, 0], sizes = [2, 512], strides = [1, 1]} : vector<16x512xf32> to vector<2x512xf32>
    %311 = vector.extract_strided_slice %306 {offsets = [12, 0], sizes = [2, 512], strides = [1, 1]} : vector<16x512xf32> to vector<2x512xf32>
    %312 = arith.addf %310, %311 : vector<2x512xf32>
    %313 = vector.extract_strided_slice %304 {offsets = [4, 0], sizes = [2, 512], strides = [1, 1]} : vector<16x512xf32> to vector<2x512xf32>
    %314 = vector.extract_strided_slice %306 {offsets = [10, 0], sizes = [2, 512], strides = [1, 1]} : vector<16x512xf32> to vector<2x512xf32>
    %315 = arith.addf %313, %314 : vector<2x512xf32>
    %316 = vector.extract_strided_slice %304 {offsets = [6, 0], sizes = [2, 512], strides = [1, 1]} : vector<16x512xf32> to vector<2x512xf32>
    %317 = vector.extract_strided_slice %306 {offsets = [8, 0], sizes = [2, 512], strides = [1, 1]} : vector<16x512xf32> to vector<2x512xf32>
    %318 = arith.addf %316, %317 : vector<2x512xf32>
    %319 = vector.extract_strided_slice %304 {offsets = [8, 0], sizes = [2, 512], strides = [1, 1]} : vector<16x512xf32> to vector<2x512xf32>
    %320 = vector.extract_strided_slice %306 {offsets = [6, 0], sizes = [2, 512], strides = [1, 1]} : vector<16x512xf32> to vector<2x512xf32>
    %321 = arith.addf %319, %320 : vector<2x512xf32>
    %322 = vector.extract_strided_slice %304 {offsets = [10, 0], sizes = [2, 512], strides = [1, 1]} : vector<16x512xf32> to vector<2x512xf32>
    %323 = vector.extract_strided_slice %306 {offsets = [4, 0], sizes = [2, 512], strides = [1, 1]} : vector<16x512xf32> to vector<2x512xf32>
    %324 = arith.addf %322, %323 : vector<2x512xf32>
    %325 = vector.extract_strided_slice %304 {offsets = [12, 0], sizes = [2, 512], strides = [1, 1]} : vector<16x512xf32> to vector<2x512xf32>
    %326 = vector.extract_strided_slice %306 {offsets = [2, 0], sizes = [2, 512], strides = [1, 1]} : vector<16x512xf32> to vector<2x512xf32>
    %327 = arith.addf %325, %326 : vector<2x512xf32>
    %328 = vector.extract_strided_slice %304 {offsets = [14, 0], sizes = [2, 512], strides = [1, 1]} : vector<16x512xf32> to vector<2x512xf32>
    %329 = vector.extract_strided_slice %306 {offsets = [0, 0], sizes = [2, 512], strides = [1, 1]} : vector<16x512xf32> to vector<2x512xf32>
    %330 = arith.addf %328, %329 : vector<2x512xf32>
    %c0_100 = arith.constant 0 : index
    %c0_101 = arith.constant 0 : index
    %331 = vector.load %arg8[%c0_100, %c0_101] : memref<128x512xf32, #tpu.memory_space<vmem>>, vector<128x512xf32>
    %cst_102 = arith.constant 0.000000e+00 : f32
    %332 = vector.broadcast %cst_102 : f32 to vector<2x128xf32>
    %cst_103 = arith.constant 0.000000e+00 : f32
    %333 = vector.broadcast %cst_103 : f32 to vector<2x128xf32>
    %cst_104 = arith.constant dense<0.000000e+00> : vector<2x512xf32>
    %334 = tpu.matmul %332, %331, %cst_104 {dimension_numbers = #tpu.dot_dimension_numbers<[1], [0], [0], [1], [0, 0, 1, 1], [], []>} : vector<2x128xf32>, vector<128x512xf32>, vector<2x512xf32> -> vector<2x512xf32>
    %335 = arith.addf %334, %309 : vector<2x512xf32>
    %336 = vector.extract_strided_slice %335 {offsets = [0, 0], sizes = [2, 128], strides = [1, 1]} : vector<2x512xf32> to vector<2x128xf32>
    %cst_105 = arith.constant 0.000000e+00 : f32
    %337 = vector.broadcast %cst_105 : f32 to vector<2x128xf32>
    %338 = arith.subf %337, %336 : vector<2x128xf32>
    %339 = math.exp %338 : vector<2x128xf32>
    %cst_106 = arith.constant 1.000000e+00 : f32
    %340 = vector.broadcast %cst_106 : f32 to vector<2x128xf32>
    %341 = arith.addf %340, %339 : vector<2x128xf32>
    %cst_107 = arith.constant 1.000000e+00 : f32
    %342 = vector.broadcast %cst_107 : f32 to vector<2x128xf32>
    %343 = arith.divf %342, %341 : vector<2x128xf32>
    %344 = vector.extract_strided_slice %335 {offsets = [0, 128], sizes = [2, 128], strides = [1, 1]} : vector<2x512xf32> to vector<2x128xf32>
    %cst_108 = arith.constant 0.000000e+00 : f32
    %345 = vector.broadcast %cst_108 : f32 to vector<2x128xf32>
    %346 = arith.subf %345, %344 : vector<2x128xf32>
    %347 = math.exp %346 : vector<2x128xf32>
    %cst_109 = arith.constant 1.000000e+00 : f32
    %348 = vector.broadcast %cst_109 : f32 to vector<2x128xf32>
    %349 = arith.addf %348, %347 : vector<2x128xf32>
    %cst_110 = arith.constant 1.000000e+00 : f32
    %350 = vector.broadcast %cst_110 : f32 to vector<2x128xf32>
    %351 = arith.divf %350, %349 : vector<2x128xf32>
    %352 = vector.extract_strided_slice %335 {offsets = [0, 256], sizes = [2, 128], strides = [1, 1]} : vector<2x512xf32> to vector<2x128xf32>
    %353 = math.tanh %352 : vector<2x128xf32>
    %354 = vector.extract_strided_slice %335 {offsets = [0, 384], sizes = [2, 128], strides = [1, 1]} : vector<2x512xf32> to vector<2x128xf32>
    %cst_111 = arith.constant 0.000000e+00 : f32
    %355 = vector.broadcast %cst_111 : f32 to vector<2x128xf32>
    %356 = arith.subf %355, %354 : vector<2x128xf32>
    %357 = math.exp %356 : vector<2x128xf32>
    %cst_112 = arith.constant 1.000000e+00 : f32
    %358 = vector.broadcast %cst_112 : f32 to vector<2x128xf32>
    %359 = arith.addf %358, %357 : vector<2x128xf32>
    %cst_113 = arith.constant 1.000000e+00 : f32
    %360 = vector.broadcast %cst_113 : f32 to vector<2x128xf32>
    %361 = arith.divf %360, %359 : vector<2x128xf32>
    %362 = arith.mulf %351, %333 : vector<2x128xf32>
    %363 = arith.mulf %343, %353 : vector<2x128xf32>
    %364 = arith.addf %362, %363 : vector<2x128xf32>
    %365 = math.tanh %364 : vector<2x128xf32>
    %366 = arith.mulf %361, %365 : vector<2x128xf32>
    %cst_114 = arith.constant dense<0.000000e+00> : vector<2x512xf32>
    %367 = tpu.matmul %366, %331, %cst_114 {dimension_numbers = #tpu.dot_dimension_numbers<[1], [0], [0], [1], [0, 0, 1, 1], [], []>} : vector<2x128xf32>, vector<128x512xf32>, vector<2x512xf32> -> vector<2x512xf32>
    %368 = arith.addf %367, %312 : vector<2x512xf32>
    %369 = vector.extract_strided_slice %368 {offsets = [0, 0], sizes = [2, 128], strides = [1, 1]} : vector<2x512xf32> to vector<2x128xf32>
    %cst_115 = arith.constant 0.000000e+00 : f32
    %370 = vector.broadcast %cst_115 : f32 to vector<2x128xf32>
    %371 = arith.subf %370, %369 : vector<2x128xf32>
    %372 = math.exp %371 : vector<2x128xf32>
    %cst_116 = arith.constant 1.000000e+00 : f32
    %373 = vector.broadcast %cst_116 : f32 to vector<2x128xf32>
    %374 = arith.addf %373, %372 : vector<2x128xf32>
    %cst_117 = arith.constant 1.000000e+00 : f32
    %375 = vector.broadcast %cst_117 : f32 to vector<2x128xf32>
    %376 = arith.divf %375, %374 : vector<2x128xf32>
    %377 = vector.extract_strided_slice %368 {offsets = [0, 128], sizes = [2, 128], strides = [1, 1]} : vector<2x512xf32> to vector<2x128xf32>
    %cst_118 = arith.constant 0.000000e+00 : f32
    %378 = vector.broadcast %cst_118 : f32 to vector<2x128xf32>
    %379 = arith.subf %378, %377 : vector<2x128xf32>
    %380 = math.exp %379 : vector<2x128xf32>
    %cst_119 = arith.constant 1.000000e+00 : f32
    %381 = vector.broadcast %cst_119 : f32 to vector<2x128xf32>
    %382 = arith.addf %381, %380 : vector<2x128xf32>
    %cst_120 = arith.constant 1.000000e+00 : f32
    %383 = vector.broadcast %cst_120 : f32 to vector<2x128xf32>
    %384 = arith.divf %383, %382 : vector<2x128xf32>
    %385 = vector.extract_strided_slice %368 {offsets = [0, 256], sizes = [2, 128], strides = [1, 1]} : vector<2x512xf32> to vector<2x128xf32>
    %386 = math.tanh %385 : vector<2x128xf32>
    %387 = vector.extract_strided_slice %368 {offsets = [0, 384], sizes = [2, 128], strides = [1, 1]} : vector<2x512xf32> to vector<2x128xf32>
    %cst_121 = arith.constant 0.000000e+00 : f32
    %388 = vector.broadcast %cst_121 : f32 to vector<2x128xf32>
    %389 = arith.subf %388, %387 : vector<2x128xf32>
    %390 = math.exp %389 : vector<2x128xf32>
    %cst_122 = arith.constant 1.000000e+00 : f32
    %391 = vector.broadcast %cst_122 : f32 to vector<2x128xf32>
    %392 = arith.addf %391, %390 : vector<2x128xf32>
    %cst_123 = arith.constant 1.000000e+00 : f32
    %393 = vector.broadcast %cst_123 : f32 to vector<2x128xf32>
    %394 = arith.divf %393, %392 : vector<2x128xf32>
    %395 = arith.mulf %384, %364 : vector<2x128xf32>
    %396 = arith.mulf %376, %386 : vector<2x128xf32>
    %397 = arith.addf %395, %396 : vector<2x128xf32>
    %398 = math.tanh %397 : vector<2x128xf32>
    %399 = arith.mulf %394, %398 : vector<2x128xf32>
    %cst_124 = arith.constant dense<0.000000e+00> : vector<2x512xf32>
    %400 = tpu.matmul %399, %331, %cst_124 {dimension_numbers = #tpu.dot_dimension_numbers<[1], [0], [0], [1], [0, 0, 1, 1], [], []>} : vector<2x128xf32>, vector<128x512xf32>, vector<2x512xf32> -> vector<2x512xf32>
    %401 = arith.addf %400, %315 : vector<2x512xf32>
    %402 = vector.extract_strided_slice %401 {offsets = [0, 0], sizes = [2, 128], strides = [1, 1]} : vector<2x512xf32> to vector<2x128xf32>
    %cst_125 = arith.constant 0.000000e+00 : f32
    %403 = vector.broadcast %cst_125 : f32 to vector<2x128xf32>
    %404 = arith.subf %403, %402 : vector<2x128xf32>
    %405 = math.exp %404 : vector<2x128xf32>
    %cst_126 = arith.constant 1.000000e+00 : f32
    %406 = vector.broadcast %cst_126 : f32 to vector<2x128xf32>
    %407 = arith.addf %406, %405 : vector<2x128xf32>
    %cst_127 = arith.constant 1.000000e+00 : f32
    %408 = vector.broadcast %cst_127 : f32 to vector<2x128xf32>
    %409 = arith.divf %408, %407 : vector<2x128xf32>
    %410 = vector.extract_strided_slice %401 {offsets = [0, 128], sizes = [2, 128], strides = [1, 1]} : vector<2x512xf32> to vector<2x128xf32>
    %cst_128 = arith.constant 0.000000e+00 : f32
    %411 = vector.broadcast %cst_128 : f32 to vector<2x128xf32>
    %412 = arith.subf %411, %410 : vector<2x128xf32>
    %413 = math.exp %412 : vector<2x128xf32>
    %cst_129 = arith.constant 1.000000e+00 : f32
    %414 = vector.broadcast %cst_129 : f32 to vector<2x128xf32>
    %415 = arith.addf %414, %413 : vector<2x128xf32>
    %cst_130 = arith.constant 1.000000e+00 : f32
    %416 = vector.broadcast %cst_130 : f32 to vector<2x128xf32>
    %417 = arith.divf %416, %415 : vector<2x128xf32>
    %418 = vector.extract_strided_slice %401 {offsets = [0, 256], sizes = [2, 128], strides = [1, 1]} : vector<2x512xf32> to vector<2x128xf32>
    %419 = math.tanh %418 : vector<2x128xf32>
    %420 = vector.extract_strided_slice %401 {offsets = [0, 384], sizes = [2, 128], strides = [1, 1]} : vector<2x512xf32> to vector<2x128xf32>
    %cst_131 = arith.constant 0.000000e+00 : f32
    %421 = vector.broadcast %cst_131 : f32 to vector<2x128xf32>
    %422 = arith.subf %421, %420 : vector<2x128xf32>
    %423 = math.exp %422 : vector<2x128xf32>
    %cst_132 = arith.constant 1.000000e+00 : f32
    %424 = vector.broadcast %cst_132 : f32 to vector<2x128xf32>
    %425 = arith.addf %424, %423 : vector<2x128xf32>
    %cst_133 = arith.constant 1.000000e+00 : f32
    %426 = vector.broadcast %cst_133 : f32 to vector<2x128xf32>
    %427 = arith.divf %426, %425 : vector<2x128xf32>
    %428 = arith.mulf %417, %397 : vector<2x128xf32>
    %429 = arith.mulf %409, %419 : vector<2x128xf32>
    %430 = arith.addf %428, %429 : vector<2x128xf32>
    %431 = math.tanh %430 : vector<2x128xf32>
    %432 = arith.mulf %427, %431 : vector<2x128xf32>
    %cst_134 = arith.constant dense<0.000000e+00> : vector<2x512xf32>
    %433 = tpu.matmul %432, %331, %cst_134 {dimension_numbers = #tpu.dot_dimension_numbers<[1], [0], [0], [1], [0, 0, 1, 1], [], []>} : vector<2x128xf32>, vector<128x512xf32>, vector<2x512xf32> -> vector<2x512xf32>
    %434 = arith.addf %433, %318 : vector<2x512xf32>
    %435 = vector.extract_strided_slice %434 {offsets = [0, 0], sizes = [2, 128], strides = [1, 1]} : vector<2x512xf32> to vector<2x128xf32>
    %cst_135 = arith.constant 0.000000e+00 : f32
    %436 = vector.broadcast %cst_135 : f32 to vector<2x128xf32>
    %437 = arith.subf %436, %435 : vector<2x128xf32>
    %438 = math.exp %437 : vector<2x128xf32>
    %cst_136 = arith.constant 1.000000e+00 : f32
    %439 = vector.broadcast %cst_136 : f32 to vector<2x128xf32>
    %440 = arith.addf %439, %438 : vector<2x128xf32>
    %cst_137 = arith.constant 1.000000e+00 : f32
    %441 = vector.broadcast %cst_137 : f32 to vector<2x128xf32>
    %442 = arith.divf %441, %440 : vector<2x128xf32>
    %443 = vector.extract_strided_slice %434 {offsets = [0, 128], sizes = [2, 128], strides = [1, 1]} : vector<2x512xf32> to vector<2x128xf32>
    %cst_138 = arith.constant 0.000000e+00 : f32
    %444 = vector.broadcast %cst_138 : f32 to vector<2x128xf32>
    %445 = arith.subf %444, %443 : vector<2x128xf32>
    %446 = math.exp %445 : vector<2x128xf32>
    %cst_139 = arith.constant 1.000000e+00 : f32
    %447 = vector.broadcast %cst_139 : f32 to vector<2x128xf32>
    %448 = arith.addf %447, %446 : vector<2x128xf32>
    %cst_140 = arith.constant 1.000000e+00 : f32
    %449 = vector.broadcast %cst_140 : f32 to vector<2x128xf32>
    %450 = arith.divf %449, %448 : vector<2x128xf32>
    %451 = vector.extract_strided_slice %434 {offsets = [0, 256], sizes = [2, 128], strides = [1, 1]} : vector<2x512xf32> to vector<2x128xf32>
    %452 = math.tanh %451 : vector<2x128xf32>
    %453 = vector.extract_strided_slice %434 {offsets = [0, 384], sizes = [2, 128], strides = [1, 1]} : vector<2x512xf32> to vector<2x128xf32>
    %cst_141 = arith.constant 0.000000e+00 : f32
    %454 = vector.broadcast %cst_141 : f32 to vector<2x128xf32>
    %455 = arith.subf %454, %453 : vector<2x128xf32>
    %456 = math.exp %455 : vector<2x128xf32>
    %cst_142 = arith.constant 1.000000e+00 : f32
    %457 = vector.broadcast %cst_142 : f32 to vector<2x128xf32>
    %458 = arith.addf %457, %456 : vector<2x128xf32>
    %cst_143 = arith.constant 1.000000e+00 : f32
    %459 = vector.broadcast %cst_143 : f32 to vector<2x128xf32>
    %460 = arith.divf %459, %458 : vector<2x128xf32>
    %461 = arith.mulf %450, %430 : vector<2x128xf32>
    %462 = arith.mulf %442, %452 : vector<2x128xf32>
    %463 = arith.addf %461, %462 : vector<2x128xf32>
    %464 = math.tanh %463 : vector<2x128xf32>
    %465 = arith.mulf %460, %464 : vector<2x128xf32>
    %cst_144 = arith.constant dense<0.000000e+00> : vector<2x512xf32>
    %466 = tpu.matmul %465, %331, %cst_144 {dimension_numbers = #tpu.dot_dimension_numbers<[1], [0], [0], [1], [0, 0, 1, 1], [], []>} : vector<2x128xf32>, vector<128x512xf32>, vector<2x512xf32> -> vector<2x512xf32>
    %467 = arith.addf %466, %321 : vector<2x512xf32>
    %468 = vector.extract_strided_slice %467 {offsets = [0, 0], sizes = [2, 128], strides = [1, 1]} : vector<2x512xf32> to vector<2x128xf32>
    %cst_145 = arith.constant 0.000000e+00 : f32
    %469 = vector.broadcast %cst_145 : f32 to vector<2x128xf32>
    %470 = arith.subf %469, %468 : vector<2x128xf32>
    %471 = math.exp %470 : vector<2x128xf32>
    %cst_146 = arith.constant 1.000000e+00 : f32
    %472 = vector.broadcast %cst_146 : f32 to vector<2x128xf32>
    %473 = arith.addf %472, %471 : vector<2x128xf32>
    %cst_147 = arith.constant 1.000000e+00 : f32
    %474 = vector.broadcast %cst_147 : f32 to vector<2x128xf32>
    %475 = arith.divf %474, %473 : vector<2x128xf32>
    %476 = vector.extract_strided_slice %467 {offsets = [0, 128], sizes = [2, 128], strides = [1, 1]} : vector<2x512xf32> to vector<2x128xf32>
    %cst_148 = arith.constant 0.000000e+00 : f32
    %477 = vector.broadcast %cst_148 : f32 to vector<2x128xf32>
    %478 = arith.subf %477, %476 : vector<2x128xf32>
    %479 = math.exp %478 : vector<2x128xf32>
    %cst_149 = arith.constant 1.000000e+00 : f32
    %480 = vector.broadcast %cst_149 : f32 to vector<2x128xf32>
    %481 = arith.addf %480, %479 : vector<2x128xf32>
    %cst_150 = arith.constant 1.000000e+00 : f32
    %482 = vector.broadcast %cst_150 : f32 to vector<2x128xf32>
    %483 = arith.divf %482, %481 : vector<2x128xf32>
    %484 = vector.extract_strided_slice %467 {offsets = [0, 256], sizes = [2, 128], strides = [1, 1]} : vector<2x512xf32> to vector<2x128xf32>
    %485 = math.tanh %484 : vector<2x128xf32>
    %486 = vector.extract_strided_slice %467 {offsets = [0, 384], sizes = [2, 128], strides = [1, 1]} : vector<2x512xf32> to vector<2x128xf32>
    %cst_151 = arith.constant 0.000000e+00 : f32
    %487 = vector.broadcast %cst_151 : f32 to vector<2x128xf32>
    %488 = arith.subf %487, %486 : vector<2x128xf32>
    %489 = math.exp %488 : vector<2x128xf32>
    %cst_152 = arith.constant 1.000000e+00 : f32
    %490 = vector.broadcast %cst_152 : f32 to vector<2x128xf32>
    %491 = arith.addf %490, %489 : vector<2x128xf32>
    %cst_153 = arith.constant 1.000000e+00 : f32
    %492 = vector.broadcast %cst_153 : f32 to vector<2x128xf32>
    %493 = arith.divf %492, %491 : vector<2x128xf32>
    %494 = arith.mulf %483, %463 : vector<2x128xf32>
    %495 = arith.mulf %475, %485 : vector<2x128xf32>
    %496 = arith.addf %494, %495 : vector<2x128xf32>
    %497 = math.tanh %496 : vector<2x128xf32>
    %498 = arith.mulf %493, %497 : vector<2x128xf32>
    %cst_154 = arith.constant dense<0.000000e+00> : vector<2x512xf32>
    %499 = tpu.matmul %498, %331, %cst_154 {dimension_numbers = #tpu.dot_dimension_numbers<[1], [0], [0], [1], [0, 0, 1, 1], [], []>} : vector<2x128xf32>, vector<128x512xf32>, vector<2x512xf32> -> vector<2x512xf32>
    %500 = arith.addf %499, %324 : vector<2x512xf32>
    %501 = vector.extract_strided_slice %500 {offsets = [0, 0], sizes = [2, 128], strides = [1, 1]} : vector<2x512xf32> to vector<2x128xf32>
    %cst_155 = arith.constant 0.000000e+00 : f32
    %502 = vector.broadcast %cst_155 : f32 to vector<2x128xf32>
    %503 = arith.subf %502, %501 : vector<2x128xf32>
    %504 = math.exp %503 : vector<2x128xf32>
    %cst_156 = arith.constant 1.000000e+00 : f32
    %505 = vector.broadcast %cst_156 : f32 to vector<2x128xf32>
    %506 = arith.addf %505, %504 : vector<2x128xf32>
    %cst_157 = arith.constant 1.000000e+00 : f32
    %507 = vector.broadcast %cst_157 : f32 to vector<2x128xf32>
    %508 = arith.divf %507, %506 : vector<2x128xf32>
    %509 = vector.extract_strided_slice %500 {offsets = [0, 128], sizes = [2, 128], strides = [1, 1]} : vector<2x512xf32> to vector<2x128xf32>
    %cst_158 = arith.constant 0.000000e+00 : f32
    %510 = vector.broadcast %cst_158 : f32 to vector<2x128xf32>
    %511 = arith.subf %510, %509 : vector<2x128xf32>
    %512 = math.exp %511 : vector<2x128xf32>
    %cst_159 = arith.constant 1.000000e+00 : f32
    %513 = vector.broadcast %cst_159 : f32 to vector<2x128xf32>
    %514 = arith.addf %513, %512 : vector<2x128xf32>
    %cst_160 = arith.constant 1.000000e+00 : f32
    %515 = vector.broadcast %cst_160 : f32 to vector<2x128xf32>
    %516 = arith.divf %515, %514 : vector<2x128xf32>
    %517 = vector.extract_strided_slice %500 {offsets = [0, 256], sizes = [2, 128], strides = [1, 1]} : vector<2x512xf32> to vector<2x128xf32>
    %518 = math.tanh %517 : vector<2x128xf32>
    %519 = vector.extract_strided_slice %500 {offsets = [0, 384], sizes = [2, 128], strides = [1, 1]} : vector<2x512xf32> to vector<2x128xf32>
    %cst_161 = arith.constant 0.000000e+00 : f32
    %520 = vector.broadcast %cst_161 : f32 to vector<2x128xf32>
    %521 = arith.subf %520, %519 : vector<2x128xf32>
    %522 = math.exp %521 : vector<2x128xf32>
    %cst_162 = arith.constant 1.000000e+00 : f32
    %523 = vector.broadcast %cst_162 : f32 to vector<2x128xf32>
    %524 = arith.addf %523, %522 : vector<2x128xf32>
    %cst_163 = arith.constant 1.000000e+00 : f32
    %525 = vector.broadcast %cst_163 : f32 to vector<2x128xf32>
    %526 = arith.divf %525, %524 : vector<2x128xf32>
    %527 = arith.mulf %516, %496 : vector<2x128xf32>
    %528 = arith.mulf %508, %518 : vector<2x128xf32>
    %529 = arith.addf %527, %528 : vector<2x128xf32>
    %530 = math.tanh %529 : vector<2x128xf32>
    %531 = arith.mulf %526, %530 : vector<2x128xf32>
    %cst_164 = arith.constant dense<0.000000e+00> : vector<2x512xf32>
    %532 = tpu.matmul %531, %331, %cst_164 {dimension_numbers = #tpu.dot_dimension_numbers<[1], [0], [0], [1], [0, 0, 1, 1], [], []>} : vector<2x128xf32>, vector<128x512xf32>, vector<2x512xf32> -> vector<2x512xf32>
    %533 = arith.addf %532, %327 : vector<2x512xf32>
    %534 = vector.extract_strided_slice %533 {offsets = [0, 0], sizes = [2, 128], strides = [1, 1]} : vector<2x512xf32> to vector<2x128xf32>
    %cst_165 = arith.constant 0.000000e+00 : f32
    %535 = vector.broadcast %cst_165 : f32 to vector<2x128xf32>
    %536 = arith.subf %535, %534 : vector<2x128xf32>
    %537 = math.exp %536 : vector<2x128xf32>
    %cst_166 = arith.constant 1.000000e+00 : f32
    %538 = vector.broadcast %cst_166 : f32 to vector<2x128xf32>
    %539 = arith.addf %538, %537 : vector<2x128xf32>
    %cst_167 = arith.constant 1.000000e+00 : f32
    %540 = vector.broadcast %cst_167 : f32 to vector<2x128xf32>
    %541 = arith.divf %540, %539 : vector<2x128xf32>
    %542 = vector.extract_strided_slice %533 {offsets = [0, 128], sizes = [2, 128], strides = [1, 1]} : vector<2x512xf32> to vector<2x128xf32>
    %cst_168 = arith.constant 0.000000e+00 : f32
    %543 = vector.broadcast %cst_168 : f32 to vector<2x128xf32>
    %544 = arith.subf %543, %542 : vector<2x128xf32>
    %545 = math.exp %544 : vector<2x128xf32>
    %cst_169 = arith.constant 1.000000e+00 : f32
    %546 = vector.broadcast %cst_169 : f32 to vector<2x128xf32>
    %547 = arith.addf %546, %545 : vector<2x128xf32>
    %cst_170 = arith.constant 1.000000e+00 : f32
    %548 = vector.broadcast %cst_170 : f32 to vector<2x128xf32>
    %549 = arith.divf %548, %547 : vector<2x128xf32>
    %550 = vector.extract_strided_slice %533 {offsets = [0, 256], sizes = [2, 128], strides = [1, 1]} : vector<2x512xf32> to vector<2x128xf32>
    %551 = math.tanh %550 : vector<2x128xf32>
    %552 = vector.extract_strided_slice %533 {offsets = [0, 384], sizes = [2, 128], strides = [1, 1]} : vector<2x512xf32> to vector<2x128xf32>
    %cst_171 = arith.constant 0.000000e+00 : f32
    %553 = vector.broadcast %cst_171 : f32 to vector<2x128xf32>
    %554 = arith.subf %553, %552 : vector<2x128xf32>
    %555 = math.exp %554 : vector<2x128xf32>
    %cst_172 = arith.constant 1.000000e+00 : f32
    %556 = vector.broadcast %cst_172 : f32 to vector<2x128xf32>
    %557 = arith.addf %556, %555 : vector<2x128xf32>
    %cst_173 = arith.constant 1.000000e+00 : f32
    %558 = vector.broadcast %cst_173 : f32 to vector<2x128xf32>
    %559 = arith.divf %558, %557 : vector<2x128xf32>
    %560 = arith.mulf %549, %529 : vector<2x128xf32>
    %561 = arith.mulf %541, %551 : vector<2x128xf32>
    %562 = arith.addf %560, %561 : vector<2x128xf32>
    %563 = math.tanh %562 : vector<2x128xf32>
    %564 = arith.mulf %559, %563 : vector<2x128xf32>
    %cst_174 = arith.constant dense<0.000000e+00> : vector<2x512xf32>
    %565 = tpu.matmul %564, %331, %cst_174 {dimension_numbers = #tpu.dot_dimension_numbers<[1], [0], [0], [1], [0, 0, 1, 1], [], []>} : vector<2x128xf32>, vector<128x512xf32>, vector<2x512xf32> -> vector<2x512xf32>
    %566 = arith.addf %565, %330 : vector<2x512xf32>
    %567 = vector.extract_strided_slice %566 {offsets = [0, 0], sizes = [2, 128], strides = [1, 1]} : vector<2x512xf32> to vector<2x128xf32>
    %cst_175 = arith.constant 0.000000e+00 : f32
    %568 = vector.broadcast %cst_175 : f32 to vector<2x128xf32>
    %569 = arith.subf %568, %567 : vector<2x128xf32>
    %570 = math.exp %569 : vector<2x128xf32>
    %cst_176 = arith.constant 1.000000e+00 : f32
    %571 = vector.broadcast %cst_176 : f32 to vector<2x128xf32>
    %572 = arith.addf %571, %570 : vector<2x128xf32>
    %cst_177 = arith.constant 1.000000e+00 : f32
    %573 = vector.broadcast %cst_177 : f32 to vector<2x128xf32>
    %574 = arith.divf %573, %572 : vector<2x128xf32>
    %575 = vector.extract_strided_slice %566 {offsets = [0, 128], sizes = [2, 128], strides = [1, 1]} : vector<2x512xf32> to vector<2x128xf32>
    %cst_178 = arith.constant 0.000000e+00 : f32
    %576 = vector.broadcast %cst_178 : f32 to vector<2x128xf32>
    %577 = arith.subf %576, %575 : vector<2x128xf32>
    %578 = math.exp %577 : vector<2x128xf32>
    %cst_179 = arith.constant 1.000000e+00 : f32
    %579 = vector.broadcast %cst_179 : f32 to vector<2x128xf32>
    %580 = arith.addf %579, %578 : vector<2x128xf32>
    %cst_180 = arith.constant 1.000000e+00 : f32
    %581 = vector.broadcast %cst_180 : f32 to vector<2x128xf32>
    %582 = arith.divf %581, %580 : vector<2x128xf32>
    %583 = vector.extract_strided_slice %566 {offsets = [0, 256], sizes = [2, 128], strides = [1, 1]} : vector<2x512xf32> to vector<2x128xf32>
    %584 = math.tanh %583 : vector<2x128xf32>
    %585 = vector.extract_strided_slice %566 {offsets = [0, 384], sizes = [2, 128], strides = [1, 1]} : vector<2x512xf32> to vector<2x128xf32>
    %cst_181 = arith.constant 0.000000e+00 : f32
    %586 = vector.broadcast %cst_181 : f32 to vector<2x128xf32>
    %587 = arith.subf %586, %585 : vector<2x128xf32>
    %588 = math.exp %587 : vector<2x128xf32>
    %cst_182 = arith.constant 1.000000e+00 : f32
    %589 = vector.broadcast %cst_182 : f32 to vector<2x128xf32>
    %590 = arith.addf %589, %588 : vector<2x128xf32>
    %cst_183 = arith.constant 1.000000e+00 : f32
    %591 = vector.broadcast %cst_183 : f32 to vector<2x128xf32>
    %592 = arith.divf %591, %590 : vector<2x128xf32>
    %593 = arith.mulf %582, %562 : vector<2x128xf32>
    %594 = arith.mulf %574, %584 : vector<2x128xf32>
    %595 = arith.addf %593, %594 : vector<2x128xf32>
    %596 = math.tanh %595 : vector<2x128xf32>
    %597 = arith.mulf %592, %596 : vector<2x128xf32>
    %c0_184 = arith.constant 0 : index
    %c0_185 = arith.constant 0 : index
    %598 = vector.load %arg9[%c0_184, %c0_185] : memref<128x128xf32, #tpu.memory_space<vmem>>, vector<128x128xf32>
    %c0_186 = arith.constant 0 : index
    %c0_187 = arith.constant 0 : index
    %599 = vector.load %arg10[%c0_186, %c0_187] : memref<1x128xf32, #tpu.memory_space<vmem>>, vector<1x128xf32>
    %c0_188 = arith.constant 0 : index
    %c0_189 = arith.constant 0 : index
    %600 = vector.load %arg11[%c0_188, %c0_189] : memref<128x128xf32, #tpu.memory_space<vmem>>, vector<128x128xf32>
    %c0_190 = arith.constant 0 : index
    %c0_191 = arith.constant 0 : index
    %601 = vector.load %arg12[%c0_190, %c0_191] : memref<1x128xf32, #tpu.memory_space<vmem>>, vector<1x128xf32>
    %cst_192 = arith.constant dense<0.000000e+00> : vector<2x128xf32>
    %602 = tpu.matmul %597, %598, %cst_192 {dimension_numbers = #tpu.dot_dimension_numbers<[1], [0], [0], [1], [0, 0, 1, 1], [], []>} : vector<2x128xf32>, vector<128x128xf32>, vector<2x128xf32> -> vector<2x128xf32>
    %603 = vector.broadcast %599 : vector<1x128xf32> to vector<2x128xf32>
    %604 = arith.addf %602, %603 : vector<2x128xf32>
    %cst_193 = arith.constant 0.000000e+00 : f32
    %605 = vector.broadcast %cst_193 : f32 to vector<2x128xf32>
    %606 = arith.maximumf %604, %605 : vector<2x128xf32>
    %cst_194 = arith.constant dense<0.000000e+00> : vector<2x128xf32>
    %607 = tpu.matmul %606, %600, %cst_194 {dimension_numbers = #tpu.dot_dimension_numbers<[1], [0], [0], [1], [0, 0, 1, 1], [], []>} : vector<2x128xf32>, vector<128x128xf32>, vector<2x128xf32> -> vector<2x128xf32>
    %608 = vector.broadcast %601 : vector<1x128xf32> to vector<2x128xf32>
    %609 = arith.addf %607, %608 : vector<2x128xf32>
    %cst_195 = arith.constant 0.000000e+00 : f32
    %610 = vector.broadcast %cst_195 : f32 to vector<2x128xf32>
    %611 = arith.maximumf %609, %610 : vector<2x128xf32>
    %612 = vector.extract_strided_slice %611 {offsets = [0, 0], sizes = [2, 5], strides = [1, 1]} : vector<2x128xf32> to vector<2x5xf32>
    %c0_196 = arith.constant 0 : index
    %c0_197 = arith.constant 0 : index
    %613 = vector.load %arg13[%c0_196, %c0_197] : memref<2x5xf32, #tpu.memory_space<vmem>>, vector<2x5xf32>
    tpu.vector_store %arg13[%c0_196, %c0_197], %612 {strides = array<i32>} : memref<2x5xf32, #tpu.memory_space<vmem>>, vector<2x5xf32>,
    return
  }
}

</mosaic_0001>

<llo_original>
// kernel: lstm_model_forward.1
$region0: #{lstm_model_forward.1}
  #allocation0 [shape = 'u32[]', space=smem, size = 0x4, offset = 0x4, fixed_abs, tag = 'smem constant byte address 0x4 - core index']
  #allocation1 [shape = 'u32[72,128]{1,0:T(1,128)}', space=vmem, size = 0x9000, scoped, tag = 'internal scratch']
  %s0 = inlined_call_operand.vmem [shape: f32[16,16], index: 0, kind: input, shape index: {}]
  %s1 = inlined_call_operand.hbm [shape: f32[16,512], index: 1, kind: input, shape index: {}]
  %s2 = inlined_call_operand.hbm [shape: f32[16,512], index: 2, kind: input, shape index: {}]
  %s3 = inlined_call_operand.vmem [shape: f32[1,512], index: 3, kind: input, shape index: {}]
  %s4 = inlined_call_operand.hbm [shape: f32[128,512], index: 4, kind: input, shape index: {}]
  %s5 = inlined_call_operand.hbm [shape: f32[128,512], index: 5, kind: input, shape index: {}]
  %s6 = inlined_call_operand.hbm [shape: f32[128,512], index: 6, kind: input, shape index: {}]
  %s7 = inlined_call_operand.vmem [shape: f32[1,512], index: 7, kind: input, shape index: {}]
  %s8 = inlined_call_operand.hbm [shape: f32[128,512], index: 8, kind: input, shape index: {}]
  %s9 = inlined_call_operand.hbm [shape: f32[128,128], index: 9, kind: input, shape index: {}]
  %s10 = inlined_call_operand.vmem [shape: f32[1,128], index: 10, kind: input, shape index: {}]
  %s11 = inlined_call_operand.hbm [shape: f32[128,128], index: 11, kind: input, shape index: {}]
  %s12 = inlined_call_operand.vmem [shape: f32[1,128], index: 12, kind: input, shape index: {}]
  %s13 = inlined_call_operand.hbm [shape: f32[2,5], index: 13, kind: output, shape index: {}]
  %s14 = sld [smem:[#allocation0]]
  $region94: #{lstm_model_forward.1} parent=0
    _
  %s16 = ssub.s32 1, %s14
  %s17 = scalar_select 0, %s16, %s14
  $region1: #{lstm_model_forward.1} parent=0
    #allocation2 [shape = 'u8[32768]{0}', space=vmem, size = 0x8000, scoped, tag = 'input window, operand 1, single buffered']
    #allocation3 [shape = 's32[1]{0}', space=sflag, size = 0x4, scoped, tag = 'scoped memory for lstm_model_forward.1']
    #allocation4 [shape = 's32[1]{0}', space=sflag, size = 0x4, scoped, tag = 'scoped memory for lstm_model_forward.1']
    #allocation5 [shape = 'u8[32768]{0}', space=vmem, size = 0x8000, scoped, tag = 'input window, operand 2, single buffered']
    #allocation6 [shape = 's32[1]{0}', space=sflag, size = 0x4, scoped, tag = 'scoped memory for lstm_model_forward.1']
    #allocation7 [shape = 'u8[262144]{0}', space=vmem, size = 0x40000, scoped, tag = 'input window, operand 4, single buffered']
    #allocation8 [shape = 'u8[262144]{0}', space=vmem, size = 0x40000, scoped, tag = 'input window, operand 5, single buffered']
    #allocation9 [shape = 's32[1]{0}', space=sflag, size = 0x4, scoped, tag = 'scoped memory for lstm_model_forward.1']
    #allocation10 [shape = 'u8[262144]{0}', space=vmem, size = 0x40000, scoped, tag = 'input window, operand 6, single buffered']
    #allocation11 [shape = 'u8[262144]{0}', space=vmem, size = 0x40000, scoped, tag = 'input window, operand 8, single buffered']
    #allocation12 [shape = 's32[1]{0}', space=sflag, size = 0x4, scoped, tag = 'scoped memory for lstm_model_forward.1']
    #allocation13 [shape = 'u8[65536]{0}', space=vmem, size = 0x10000, scoped, tag = 'input window, operand 9, single buffered']
    #allocation14 [shape = 'u8[65536]{0}', space=vmem, size = 0x10000, scoped, tag = 'input window, operand 11, single buffered']
    #allocation15 [shape = 's32[1]{0}', space=sflag, size = 0x4, scoped, tag = 'scoped memory for lstm_model_forward.1']
    #allocation16 [shape = 'u8[1024]{0}', space=vmem, size = 0x400, scoped, tag = 'output window, operand 0, single buffered']
    %18 = vsyncpa [#allocation3], 0
    %19 = vsyncpa [#allocation6], 0
    %20 = vsyncpa [#allocation9], 0
    %21 = vsyncpa [#allocation12], 0
    %22 = vsyncpa [#allocation15], 0
    %23 = vsyncpa [#allocation4], 0
    // Predicated region
    $region2: #{lstm_model_forward.1} parent=1 // pred_check
      _
    $region3: #{lstm_model_forward.1} parent=1 // pred_check_branch
      %25 = sbr.rel (0) target = $region5
    $region4: #{lstm_model_forward.1} parent=1 // pred_region
      _
    $region5: #{lstm_model_forward.1} parent=1 // pred_fallthru
      _
    // Predicated region
    $region6: #{lstm_model_forward.1} parent=1 // pred_check
      _
    $region7: #{lstm_model_forward.1} parent=1 // pred_check_branch
      %27 = sbr.rel (0) target = $region9
    $region8: #{lstm_model_forward.1} parent=1 // pred_region
      %29 = vsyncadd [#allocation3], 0
      %s30 = sshll.u32 %s1, 4
      %s31 = int_to_ptr.hbm [resolvable:$true] %s30
      %s32 = sshll.u32 [#allocation2], 4
      %s33 = int_to_ptr.vmem [resolvable:$true] %s32
      %38 = dma.hbm_to_vmem [thread:$0]  %s31, 1024, %s33, [#allocation3], 512, 512, 32
    $region9: #{lstm_model_forward.1} parent=1 // pred_fallthru
      _
    // Predicated region
    $region10: #{lstm_model_forward.1} parent=1 // pred_check
      _
    $region11: #{lstm_model_forward.1} parent=1 // pred_check_branch
      %40 = sbr.rel (0) target = $region13
    $region12: #{lstm_model_forward.1} parent=1 // pred_region
      %42 = vsyncadd [#allocation6], 0
      %s43 = sshll.u32 %s2, 4
      %s44 = int_to_ptr.hbm [resolvable:$true] %s43
      %s45 = sshll.u32 [#allocation5], 4
      %s46 = int_to_ptr.vmem [resolvable:$true] %s45
      %51 = dma.hbm_to_vmem [thread:$0]  %s44, 1024, %s46, [#allocation6], 512, 512, 32
    $region13: #{lstm_model_forward.1} parent=1 // pred_fallthru
      _
    // Predicated region
    $region14: #{lstm_model_forward.1} parent=1 // pred_check
      _
    $region15: #{lstm_model_forward.1} parent=1 // pred_check_branch
      %53 = sbr.rel (0) target = $region17
    $region16: #{lstm_model_forward.1} parent=1 // pred_region
      _
    $region17: #{lstm_model_forward.1} parent=1 // pred_fallthru
      _
    // Predicated region
    $region18: #{lstm_model_forward.1} parent=1 // pred_check
      _
    $region19: #{lstm_model_forward.1} parent=1 // pred_check_branch
      %55 = sbr.rel (0) target = $region21
    $region20: #{lstm_model_forward.1} parent=1 // pred_region
      %57 = vsyncadd [#allocation6], 0
      %s58 = sshll.u32 %s4, 4
      %s59 = int_to_ptr.hbm [resolvable:$true] %s58
      %s60 = sshll.u32 [#allocation7], 4
      %s61 = int_to_ptr.vmem [resolvable:$true] %s60
      %66 = dma.hbm_to_vmem [thread:$0]  %s59, 8192, %s61, [#allocation6], 512, 512, 32
    $region21: #{lstm_model_forward.1} parent=1 // pred_fallthru
      _
    // Predicated region
    $region22: #{lstm_model_forward.1} parent=1 // pred_check
      _
    $region23: #{lstm_model_forward.1} parent=1 // pred_check_branch
      %68 = sbr.rel (0) target = $region25
    $region24: #{lstm_model_forward.1} parent=1 // pred_region
      %70 = vsyncadd [#allocation9], 0
      %s71 = sshll.u32 %s5, 4
      %s72 = int_to_ptr.hbm [resolvable:$true] %s71
      %s73 = sshll.u32 [#allocation8], 4
      %s74 = int_to_ptr.vmem [resolvable:$true] %s73
      %79 = dma.hbm_to_vmem [thread:$0]  %s72, 8192, %s74, [#allocation9], 512, 512, 32
    $region25: #{lstm_model_forward.1} parent=1 // pred_fallthru
      _
    // Predicated region
    $region26: #{lstm_model_forward.1} parent=1 // pred_check
      _
    $region27: #{lstm_model_forward.1} parent=1 // pred_check_branch
      %81 = sbr.rel (0) target = $region29
    $region28: #{lstm_model_forward.1} parent=1 // pred_region
      %83 = vsyncadd [#allocation9], 0
      %s84 = sshll.u32 %s6, 4
      %s85 = int_to_ptr.hbm [resolvable:$true] %s84
      %s86 = sshll.u32 [#allocation10], 4
      %s87 = int_to_ptr.vmem [resolvable:$true] %s86
      %92 = dma.hbm_to_vmem [thread:$0]  %s85, 8192, %s87, [#allocation9], 512, 512, 32
    $region29: #{lstm_model_forward.1} parent=1 // pred_fallthru
      _
    // Predicated region
    $region30: #{lstm_model_forward.1} parent=1 // pred_check
      _
    $region31: #{lstm_model_forward.1} parent=1 // pred_check_branch
      %94 = sbr.rel (0) target = $region33
    $region32: #{lstm_model_forward.1} parent=1 // pred_region
      _
    $region33: #{lstm_model_forward.1} parent=1 // pred_fallthru
      _
    // Predicated region
    $region34: #{lstm_model_forward.1} parent=1 // pred_check
      _
    $region35: #{lstm_model_forward.1} parent=1 // pred_check_branch
      %96 = sbr.rel (0) target = $region37
    $region36: #{lstm_model_forward.1} parent=1 // pred_region
      %98 = vsyncadd [#allocation12], 0
      %s99 = sshll.u32 %s8, 4
      %s100 = int_to_ptr.hbm [resolvable:$true] %s99
      %s101 = sshll.u32 [#allocation11], 4
      %s102 = int_to_ptr.vmem [resolvable:$true] %s101
      %107 = dma.hbm_to_vmem [thread:$0]  %s100, 8192, %s102, [#allocation12], 512, 512, 32
    $region37: #{lstm_model_forward.1} parent=1 // pred_fallthru
      _
    // Predicated region
    $region38: #{lstm_model_forward.1} parent=1 // pred_check
      _
    $region39: #{lstm_model_forward.1} parent=1 // pred_check_branch
      %109 = sbr.rel (0) target = $region41
    $region40: #{lstm_model_forward.1} parent=1 // pred_region
      %111 = vsyncadd [#allocation12], 0
      %s112 = sshll.u32 %s9, 4
      %s113 = int_to_ptr.hbm [resolvable:$true] %s112
      %s114 = sshll.u32 [#allocation13], 4
      %s115 = int_to_ptr.vmem [resolvable:$true] %s114
      %120 = dma.hbm_to_vmem [thread:$0]  %s113, 2048, %s115, [#allocation12], 128, 128, 8
    $region41: #{lstm_model_forward.1} parent=1 // pred_fallthru
      _
    // Predicated region
    $region42: #{lstm_model_forward.1} parent=1 // pred_check
      _
    $region43: #{lstm_model_forward.1} parent=1 // pred_check_branch
      %122 = sbr.rel (0) target = $region45
    $region44: #{lstm_model_forward.1} parent=1 // pred_region
      _
    $region45: #{lstm_model_forward.1} parent=1 // pred_fallthru
      _
    // Predicated region
    $region46: #{lstm_model_forward.1} parent=1 // pred_check
      _
    $region47: #{lstm_model_forward.1} parent=1 // pred_check_branch
      %124 = sbr.rel (0) target = $region49
    $region48: #{lstm_model_forward.1} parent=1 // pred_region
      %126 = vsyncadd [#allocation15], 0
      %s127 = sshll.u32 %s11, 4
      %s128 = int_to_ptr.hbm [resolvable:$true] %s127
      %s129 = sshll.u32 [#allocation14], 4
      %s130 = int_to_ptr.vmem [resolvable:$true] %s129
      %135 = dma.hbm_to_vmem [thread:$0]  %s128, 2048, %s130, [#allocation15], 128, 128, 8
    $region49: #{lstm_model_forward.1} parent=1 // pred_fallthru
      _
    // Predicated region
    $region50: #{lstm_model_forward.1} parent=1 // pred_check
      _
    $region51: #{lstm_model_forward.1} parent=1 // pred_check_branch
      %137 = sbr.rel (0) target = $region53
    $region52: #{lstm_model_forward.1} parent=1 // pred_region
      _
    $region53: #{lstm_model_forward.1} parent=1 // pred_fallthru
      _
    // Predicated region
    $region54: #{lstm_model_forward.1} parent=1 // pred_check
      _
    $region55: #{lstm_model_forward.1} parent=1 // pred_check_branch
      %139 = sbr.rel (0) target = $region57
    $region56: #{lstm_model_forward.1} parent=1 // pred_region
      %141 = dma.done [#allocation3], 1024
    $region57: #{lstm_model_forward.1} parent=1 // pred_fallthru
      _
    // Predicated region
    $region58: #{lstm_model_forward.1} parent=1 // pred_check
      _
    $region59: #{lstm_model_forward.1} parent=1 // pred_check_branch
      %143 = sbr.rel (0) target = $region61
    $region60: #{lstm_model_forward.1} parent=1 // pred_region
      %145 = dma.done [#allocation6], 1024
    $region61: #{lstm_model_forward.1} parent=1 // pred_fallthru
      _
    // Predicated region
    $region62: #{lstm_model_forward.1} parent=1 // pred_check
      _
    $region63: #{lstm_model_forward.1} parent=1 // pred_check_branch
      %147 = sbr.rel (0) target = $region65
    $region64: #{lstm_model_forward.1} parent=1 // pred_region
      %149 = dma.done [#allocation6], 8192
    $region65: #{lstm_model_forward.1} parent=1 // pred_fallthru
      _
    // Predicated region
    $region66: #{lstm_model_forward.1} parent=1 // pred_check
      _
    $region67: #{lstm_model_forward.1} parent=1 // pred_check_branch
      %151 = sbr.rel (0) target = $region69
    $region68: #{lstm_model_forward.1} parent=1 // pred_region
      %153 = dma.done [#allocation9], 8192
    $region69: #{lstm_model_forward.1} parent=1 // pred_fallthru
      _
    // Predicated region
    $region70: #{lstm_model_forward.1} parent=1 // pred_check
      _
    $region71: #{lstm_model_forward.1} parent=1 // pred_check_branch
      %155 = sbr.rel (0) target = $region73
    $region72: #{lstm_model_forward.1} parent=1 // pred_region
      %157 = dma.done [#allocation9], 8192
    $region73: #{lstm_model_forward.1} parent=1 // pred_fallthru
      _
    // Predicated region
    $region74: #{lstm_model_forward.1} parent=1 // pred_check
      _
    $region75: #{lstm_model_forward.1} parent=1 // pred_check_branch
      %159 = sbr.rel (0) target = $region77
    $region76: #{lstm_model_forward.1} parent=1 // pred_region
      %161 = dma.done [#allocation12], 8192
    $region77: #{lstm_model_forward.1} parent=1 // pred_fallthru
      _
    // Predicated region
    $region78: #{lstm_model_forward.1} parent=1 // pred_check
      _
    $region79: #{lstm_model_forward.1} parent=1 // pred_check_branch
      %163 = sbr.rel (0) target = $region81
    $region80: #{lstm_model_forward.1} parent=1 // pred_region
      %165 = dma.done [#allocation12], 2048
    $region81: #{lstm_model_forward.1} parent=1 // pred_fallthru
      _
    // Predicated region
    $region82: #{lstm_model_forward.1} parent=1 // pred_check
      _
    $region83: #{lstm_model_forward.1} parent=1 // pred_check_branch
      %167 = sbr.rel (0) target = $region85
    $region84: #{lstm_model_forward.1} parent=1 // pred_region
      %169 = dma.done [#allocation15], 2048
    $region85: #{lstm_model_forward.1} parent=1 // pred_fallthru
      _
    %v170 = vld [vmem:[%s0] sm:$0xff]
    %v171 = vld [vmem:[%s0 + $0x8] sm:$0xff]
    %v172 = vld [vmem:[#allocation2] sm:$0xff]
    %v173 = vld [vmem:[#allocation2 + $0x8] sm:$0xff]
    %v174 = vld [vmem:[#allocation2 + $0x10] sm:$0xff]
    %v175 = vld [vmem:[#allocation2 + $0x18] sm:$0xff]
    %v176 = vld [vmem:[#allocation2 + $0x20] sm:$0xff]
    %v177 = vld [vmem:[#allocation2 + $0x28] sm:$0xff]
    %v178 = vld [vmem:[#allocation2 + $0x30] sm:$0xff]
    %v179 = vld [vmem:[#allocation2 + $0x38] sm:$0xff]
    %v180 = vld [vmem:[%s3] sm:$0xf]
    %v182 = vperm.slane %v180, 0
    %v183 = vperm.slane %v180, 1
    %v184 = vperm.slane %v180, 2
    %v185 = vperm.slane %v180, 3
    %vm190 = vcmask 130048
    %v192 = vsel %vm190, %v170, 0
    %v195 = vsel %vm190, %v171, 0
    %197 = vmatpush.msra.mxu0 0.0
    %198 = vmatpush.msra.mxu0 0.0
    %199 = vmatpush.msra.mxu0 0.0
    %200 = vmatpush.msra.mxu0 0.0
    %201 = vmatpush.msra.mxu0 0.0
    %202 = vmatpush.msra.mxu0 0.0
    %203 = vmatpush.msra.mxu0 0.0
    %204 = vmatpush.msra.mxu0 0.0
    %205 = vmatpush.msra.mxu0 0.0
    %206 = vmatpush.msra.mxu0 0.0
    %207 = vmatpush.msra.mxu0 0.0
    %208 = vmatpush.msra.mxu0 0.0
    %209 = vmatpush.msra.mxu0 0.0
    %210 = vmatpush.msra.mxu0 0.0
    %211 = vmatpush.msra.mxu0 %v176
    %212 = vmatpush.msra.mxu0 %v172
    %213 = vmatmul.f32.gmra.mxu0 %v192
    %v214 = vpop.f32.mrf.mxu0
    %v215 = vadd.f32 %v182, %v214
    %216 = vmatmul.f32.gmra.mxu0 %v195
    %v217 = vpop.f32.mrf.mxu0
    %v218 = vadd.f32 %v182, %v217
    %219 = vdwg.mxu0
    %220 = vmatpush.msra.mxu0 0.0
    %221 = vmatpush.msra.mxu0 0.0
    %222 = vmatpush.msra.mxu0 0.0
    %223 = vmatpush.msra.mxu0 0.0
    %224 = vmatpush.msra.mxu0 0.0
    %225 = vmatpush.msra.mxu0 0.0
    %226 = vmatpush.msra.mxu0 0.0
    %227 = vmatpush.msra.mxu0 0.0
    %228 = vmatpush.msra.mxu0 0.0
    %229 = vmatpush.msra.mxu0 0.0
    %230 = vmatpush.msra.mxu0 0.0
    %231 = vmatpush.msra.mxu0 0.0
    %232 = vmatpush.msra.mxu0 0.0
    %233 = vmatpush.msra.mxu0 0.0
    %234 = vmatpush.msra.mxu0 %v177
    %235 = vmatpush.msra.mxu0 %v173
    %236 = vmatmul.f32.gmra.mxu0 %v192
    %v237 = vpop.f32.mrf.mxu0
    %v238 = vadd.f32 %v183, %v237
    %239 = vmatmul.f32.gmra.mxu0 %v195
    %v240 = vpop.f32.mrf.mxu0
    %v241 = vadd.f32 %v183, %v240
    %242 = vdwg.mxu0
    %243 = vmatpush.msra.mxu0 0.0
    %244 = vmatpush.msra.mxu0 0.0
    %245 = vmatpush.msra.mxu0 0.0
    %246 = vmatpush.msra.mxu0 0.0
    %247 = vmatpush.msra.mxu0 0.0
    %248 = vmatpush.msra.mxu0 0.0
    %249 = vmatpush.msra.mxu0 0.0
    %250 = vmatpush.msra.mxu0 0.0
    %251 = vmatpush.msra.mxu0 0.0
    %252 = vmatpush.msra.mxu0 0.0
    %253 = vmatpush.msra.mxu0 0.0
    %254 = vmatpush.msra.mxu0 0.0
    %255 = vmatpush.msra.mxu0 0.0
    %256 = vmatpush.msra.mxu0 0.0
    %257 = vmatpush.msra.mxu0 %v178
    %258 = vmatpush.msra.mxu0 %v174
    %259 = vmatmul.f32.gmra.mxu0 %v192
    %v260 = vpop.f32.mrf.mxu0
    %v261 = vadd.f32 %v184, %v260
    %262 = vmatmul.f32.gmra.mxu0 %v195
    %v263 = vpop.f32.mrf.mxu0
    %v264 = vadd.f32 %v184, %v263
    %265 = vdwg.mxu0
    %266 = vmatpush.msra.mxu0 0.0
    %267 = vmatpush.msra.mxu0 0.0
    %268 = vmatpush.msra.mxu0 0.0
    %269 = vmatpush.msra.mxu0 0.0
    %270 = vmatpush.msra.mxu0 0.0
    %271 = vmatpush.msra.mxu0 0.0
    %272 = vmatpush.msra.mxu0 0.0
    %273 = vmatpush.msra.mxu0 0.0
    %274 = vmatpush.msra.mxu0 0.0
    %275 = vmatpush.msra.mxu0 0.0
    %276 = vmatpush.msra.mxu0 0.0
    %277 = vmatpush.msra.mxu0 0.0
    %278 = vmatpush.msra.mxu0 0.0
    %279 = vmatpush.msra.mxu0 0.0
    %280 = vmatpush.msra.mxu0 %v179
    %281 = vmatpush.msra.mxu0 %v175
    %282 = vmatmul.f32.gmra.mxu0 %v192
    %v283 = vpop.f32.mrf.mxu0
    %v284 = vadd.f32 %v185, %v283
    %285 = vmatmul.f32.gmra.mxu0 %v195
    %v286 = vpop.f32.mrf.mxu0
    %v287 = vadd.f32 %v185, %v286
    %288 = vdwg.mxu0
    %v289 = vld [vmem:[#allocation5] sm:$0xff]
    %v290 = vld [vmem:[#allocation5 + $0x8] sm:$0xff]
    %v291 = vld [vmem:[#allocation5 + $0x10] sm:$0xff]
    %v292 = vld [vmem:[#allocation5 + $0x18] sm:$0xff]
    %v293 = vld [vmem:[#allocation5 + $0x20] sm:$0xff]
    %v294 = vld [vmem:[#allocation5 + $0x28] sm:$0xff]
    %v295 = vld [vmem:[#allocation5 + $0x30] sm:$0xff]
    %v296 = vld [vmem:[#allocation5 + $0x38] sm:$0xff]
    %297 = vmatpush.msra.mxu0 0.0
    %298 = vmatpush.msra.mxu0 0.0
    %299 = vmatpush.msra.mxu0 0.0
    %300 = vmatpush.msra.mxu0 0.0
    %301 = vmatpush.msra.mxu0 0.0
    %302 = vmatpush.msra.mxu0 0.0
    %303 = vmatpush.msra.mxu0 0.0
    %304 = vmatpush.msra.mxu0 0.0
    %305 = vmatpush.msra.mxu0 0.0
    %306 = vmatpush.msra.mxu0 0.0
    %307 = vmatpush.msra.mxu0 0.0
    %308 = vmatpush.msra.mxu0 0.0
    %309 = vmatpush.msra.mxu0 0.0
    %310 = vmatpush.msra.mxu0 0.0
    %311 = vmatpush.msra.mxu0 %v293
    %312 = vmatpush.msra.mxu0 %v289
    %313 = vmatmul.f32.gmra.mxu0 %v192
    %v314 = vpop.f32.mrf.mxu0
    %v315 = vadd.f32 0.0, %v314
    %316 = vmatmul.f32.gmra.mxu0 %v195
    %v317 = vpop.f32.mrf.mxu0
    %v318 = vadd.f32 0.0, %v317
    %319 = vdwg.mxu0
    %320 = vmatpush.msra.mxu0 0.0
    %321 = vmatpush.msra.mxu0 0.0
    %322 = vmatpush.msra.mxu0 0.0
    %323 = vmatpush.msra.mxu0 0.0
    %324 = vmatpush.msra.mxu0 0.0
    %325 = vmatpush.msra.mxu0 0.0
    %326 = vmatpush.msra.mxu0 0.0
    %327 = vmatpush.msra.mxu0 0.0
    %328 = vmatpush.msra.mxu0 0.0
    %329 = vmatpush.msra.mxu0 0.0
    %330 = vmatpush.msra.mxu0 0.0
    %331 = vmatpush.msra.mxu0 0.0
    %332 = vmatpush.msra.mxu0 0.0
    %333 = vmatpush.msra.mxu0 0.0
    %334 = vmatpush.msra.mxu0 %v294
    %335 = vmatpush.msra.mxu0 %v290
    %336 = vmatmul.f32.gmra.mxu0 %v192
    %v337 = vpop.f32.mrf.mxu0
    %v338 = vadd.f32 0.0, %v337
    %339 = vmatmul.f32.gmra.mxu0 %v195
    %v340 = vpop.f32.mrf.mxu0
    %v341 = vadd.f32 0.0, %v340
    %342 = vdwg.mxu0
    %343 = vmatpush.msra.mxu0 0.0
    %344 = vmatpush.msra.mxu0 0.0
    %345 = vmatpush.msra.mxu0 0.0
    %346 = vmatpush.msra.mxu0 0.0
    %347 = vmatpush.msra.mxu0 0.0
    %348 = vmatpush.msra.mxu0 0.0
    %349 = vmatpush.msra.mxu0 0.0
    %350 = vmatpush.msra.mxu0 0.0
    %351 = vmatpush.msra.mxu0 0.0
    %352 = vmatpush.msra.mxu0 0.0
    %353 = vmatpush.msra.mxu0 0.0
    %354 = vmatpush.msra.mxu0 0.0
    %355 = vmatpush.msra.mxu0 0.0
    %356 = vmatpush.msra.mxu0 0.0
    %357 = vmatpush.msra.mxu0 %v295
    %358 = vmatpush.msra.mxu0 %v291
    %359 = vmatmul.f32.gmra.mxu0 %v192
    %v360 = vpop.f32.mrf.mxu0
    %v361 = vadd.f32 0.0, %v360
    %362 = vmatmul.f32.gmra.mxu0 %v195
    %v363 = vpop.f32.mrf.mxu0
    %v364 = vadd.f32 0.0, %v363
    %365 = vdwg.mxu0
    %366 = vmatpush.msra.mxu0 0.0
    %367 = vmatpush.msra.mxu0 0.0
    %368 = vmatpush.msra.mxu0 0.0
    %369 = vmatpush.msra.mxu0 0.0
    %370 = vmatpush.msra.mxu0 0.0
    %371 = vmatpush.msra.mxu0 0.0
    %372 = vmatpush.msra.mxu0 0.0
    %373 = vmatpush.msra.mxu0 0.0
    %374 = vmatpush.msra.mxu0 0.0
    %375 = vmatpush.msra.mxu0 0.0
    %376 = vmatpush.msra.mxu0 0.0
    %377 = vmatpush.msra.mxu0 0.0
    %378 = vmatpush.msra.mxu0 0.0
    %379 = vmatpush.msra.mxu0 0.0
    %380 = vmatpush.msra.mxu0 %v296
    %381 = vmatpush.msra.mxu0 %v292
    %382 = vmatmul.f32.gmra.mxu0 %v192
    %v383 = vpop.f32.mrf.mxu0
    %v384 = vadd.f32 0.0, %v383
    %385 = vmatmul.f32.gmra.mxu0 %v195
    %v386 = vpop.f32.mrf.mxu0
    %v387 = vadd.f32 0.0, %v386
    %388 = vdwg.mxu0
    %v393 = vrot.slane %v318, 6
    %v394 = vrot.slane %v341, 6
    %v395 = vrot.slane %v364, 6
    %v396 = vrot.slane %v387, 6
    %v401 = vadd.f32 %v215, %v393
    %v402 = vadd.f32 %v238, %v394
    %v403 = vadd.f32 %v261, %v395
    %v404 = vadd.f32 %v284, %v396
    %v405 = vrot.slane %v318, 2
    %v406 = vrot.slane %v341, 2
    %v407 = vrot.slane %v364, 2
    %v408 = vrot.slane %v387, 2
    %v413 = vadd.f32 %v215, %v405
    %v414 = vadd.f32 %v238, %v406
    %v415 = vadd.f32 %v261, %v407
    %v416 = vadd.f32 %v284, %v408
    %v421 = vrot.slane %v315, 6
    %v422 = vrot.slane %v338, 6
    %v423 = vrot.slane %v361, 6
    %v424 = vrot.slane %v384, 6
    %v429 = vadd.f32 %v218, %v421
    %v430 = vadd.f32 %v241, %v422
    %v431 = vadd.f32 %v264, %v423
    %v432 = vadd.f32 %v287, %v424
    %v433 = vrot.slane %v315, 2
    %v434 = vrot.slane %v338, 2
    %v435 = vrot.slane %v361, 2
    %v436 = vrot.slane %v384, 2
    %v441 = vadd.f32 %v218, %v433
    %v442 = vadd.f32 %v241, %v434
    %v443 = vadd.f32 %v264, %v435
    %v444 = vadd.f32 %v287, %v436
    %v445 = vld [vmem:[#allocation7] sm:$0xff]
    %v446 = vld [vmem:[#allocation7 + $0x8] sm:$0xff]
    %v447 = vld [vmem:[#allocation7 + $0x10] sm:$0xff]
    %v448 = vld [vmem:[#allocation7 + $0x18] sm:$0xff]
    %v449 = vld [vmem:[#allocation7 + $0x20] sm:$0xff]
    %v450 = vld [vmem:[#allocation7 + $0x28] sm:$0xff]
    %v451 = vld [vmem:[#allocation7 + $0x30] sm:$0xff]
    %v452 = vld [vmem:[#allocation7 + $0x38] sm:$0xff]
    %v453 = vld [vmem:[#allocation7 + $0x40] sm:$0xff]
    %v454 = vld [vmem:[#allocation7 + $0x48] sm:$0xff]
    %v455 = vld [vmem:[#allocation7 + $0x50] sm:$0xff]
    %v456 = vld [vmem:[#allocation7 + $0x58] sm:$0xff]
    %v457 = vld [vmem:[#allocation7 + $0x60] sm:$0xff]
    %v458 = vld [vmem:[#allocation7 + $0x68] sm:$0xff]
    %v459 = vld [vmem:[#allocation7 + $0x70] sm:$0xff]
    %v460 = vld [vmem:[#allocation7 + $0x78] sm:$0xff]
    %v461 = vld [vmem:[#allocation7 + $0x80] sm:$0xff]
    %v462 = vld [vmem:[#allocation7 + $0x88] sm:$0xff]
    %v463 = vld [vmem:[#allocation7 + $0x90] sm:$0xff]
    %v464 = vld [vmem:[#allocation7 + $0x98] sm:$0xff]
    %v465 = vld [vmem:[#allocation7 + $0xa0] sm:$0xff]
    %v466 = vld [vmem:[#allocation7 + $0xa8] sm:$0xff]
    %v467 = vld [vmem:[#allocation7 + $0xb0] sm:$0xff]
    %v468 = vld [vmem:[#allocation7 + $0xb8] sm:$0xff]
    %v469 = vld [vmem:[#allocation7 + $0xc0] sm:$0xff]
    %v470 = vld [vmem:[#allocation7 + $0xc8] sm:$0xff]
    %v471 = vld [vmem:[#allocation7 + $0xd0] sm:$0xff]
    %v472 = vld [vmem:[#allocation7 + $0xd8] sm:$0xff]
    %v473 = vld [vmem:[#allocation7 + $0xe0] sm:$0xff]
    %v474 = vld [vmem:[#allocation7 + $0xe8] sm:$0xff]
    %v475 = vld [vmem:[#allocation7 + $0xf0] sm:$0xff]
    %v476 = vld [vmem:[#allocation7 + $0xf8] sm:$0xff]
    %v477 = vld [vmem:[#allocation7 + $0x100] sm:$0xff]
    %v478 = vld [vmem:[#allocation7 + $0x108] sm:$0xff]
    %v479 = vld [vmem:[#allocation7 + $0x110] sm:$0xff]
    %v480 = vld [vmem:[#allocation7 + $0x118] sm:$0xff]
    %v481 = vld [vmem:[#allocation7 + $0x120] sm:$0xff]
    %v482 = vld [vmem:[#allocation7 + $0x128] sm:$0xff]
    %v483 = vld [vmem:[#allocation7 + $0x130] sm:$0xff]
    %v484 = vld [vmem:[#allocation7 + $0x138] sm:$0xff]
    %v485 = vld [vmem:[#allocation7 + $0x140] sm:$0xff]
    %v486 = vld [vmem:[#allocation7 + $0x148] sm:$0xff]
    %v487 = vld [vmem:[#allocation7 + $0x150] sm:$0xff]
    %v488 = vld [vmem:[#allocation7 + $0x158] sm:$0xff]
    %v489 = vld [vmem:[#allocation7 + $0x160] sm:$0xff]
    %v490 = vld [vmem:[#allocation7 + $0x168] sm:$0xff]
    %v491 = vld [vmem:[#allocation7 + $0x170] sm:$0xff]
    %v492 = vld [vmem:[#allocation7 + $0x178] sm:$0xff]
    %v493 = vld [vmem:[#allocation7 + $0x180] sm:$0xff]
    %v494 = vld [vmem:[#allocation7 + $0x188] sm:$0xff]
    %v495 = vld [vmem:[#allocation7 + $0x190] sm:$0xff]
    %v496 = vld [vmem:[#allocation7 + $0x198] sm:$0xff]
    %v497 = vld [vmem:[#allocation7 + $0x1a0] sm:$0xff]
    %v498 = vld [vmem:[#allocation7 + $0x1a8] sm:$0xff]
    %v499 = vld [vmem:[#allocation7 + $0x1b0] sm:$0xff]
    %v500 = vld [vmem:[#allocation7 + $0x1b8] sm:$0xff]
    %v501 = vld [vmem:[#allocation7 + $0x1c0] sm:$0xff]
    %v502 = vld [vmem:[#allocation7 + $0x1c8] sm:$0xff]
    %v503 = vld [vmem:[#allocation7 + $0x1d0] sm:$0xff]
    %v504 = vld [vmem:[#allocation7 + $0x1d8] sm:$0xff]
    %v505 = vld [vmem:[#allocation7 + $0x1e0] sm:$0xff]
    %v506 = vld [vmem:[#allocation7 + $0x1e8] sm:$0xff]
    %v507 = vld [vmem:[#allocation7 + $0x1f0] sm:$0xff]
    %v508 = vld [vmem:[#allocation7 + $0x1f8] sm:$0xff]
    %509 = vmatpush.msra.mxu0 %v505
    %510 = vmatpush.msra.mxu0 %v501
    %511 = vmatpush.msra.mxu0 %v497
    %512 = vmatpush.msra.mxu0 %v493
    %513 = vmatpush.msra.mxu0 %v489
    %514 = vmatpush.msra.mxu0 %v485
    %515 = vmatpush.msra.mxu0 %v481
    %516 = vmatpush.msra.mxu0 %v477
    %517 = vmatpush.msra.mxu0 %v473
    %518 = vmatpush.msra.mxu0 %v469
    %519 = vmatpush.msra.mxu0 %v465
    %520 = vmatpush.msra.mxu0 %v461
    %521 = vmatpush.msra.mxu0 %v457
    %522 = vmatpush.msra.mxu0 %v453
    %523 = vmatpush.msra.mxu0 %v449
    %524 = vmatpush.msra.mxu0 %v445
    %525 = vmatmul.f32.gmra.mxu0 0.0
    %v526 = vpop.f32.mrf.mxu0
    %v527 = vadd.f32 %v401, %v526
    %528 = vdwg.mxu0
    %529 = vmatpush.msra.mxu0 %v506
    %530 = vmatpush.msra.mxu0 %v502
    %531 = vmatpush.msra.mxu0 %v498
    %532 = vmatpush.msra.mxu0 %v494
    %533 = vmatpush.msra.mxu0 %v490
    %534 = vmatpush.msra.mxu0 %v486
    %535 = vmatpush.msra.mxu0 %v482
    %536 = vmatpush.msra.mxu0 %v478
    %537 = vmatpush.msra.mxu0 %v474
    %538 = vmatpush.msra.mxu0 %v470
    %539 = vmatpush.msra.mxu0 %v466
    %540 = vmatpush.msra.mxu0 %v462
    %541 = vmatpush.msra.mxu0 %v458
    %542 = vmatpush.msra.mxu0 %v454
    %543 = vmatpush.msra.mxu0 %v450
    %544 = vmatpush.msra.mxu0 %v446
    %545 = vmatmul.f32.gmra.mxu0 0.0
    %v546 = vpop.f32.mrf.mxu0
    %v547 = vadd.f32 %v402, %v546
    %548 = vdwg.mxu0
    %549 = vmatpush.msra.mxu0 %v507
    %550 = vmatpush.msra.mxu0 %v503
    %551 = vmatpush.msra.mxu0 %v499
    %552 = vmatpush.msra.mxu0 %v495
    %553 = vmatpush.msra.mxu0 %v491
    %554 = vmatpush.msra.mxu0 %v487
    %555 = vmatpush.msra.mxu0 %v483
    %556 = vmatpush.msra.mxu0 %v479
    %557 = vmatpush.msra.mxu0 %v475
    %558 = vmatpush.msra.mxu0 %v471
    %559 = vmatpush.msra.mxu0 %v467
    %560 = vmatpush.msra.mxu0 %v463
    %561 = vmatpush.msra.mxu0 %v459
    %562 = vmatpush.msra.mxu0 %v455
    %563 = vmatpush.msra.mxu0 %v451
    %564 = vmatpush.msra.mxu0 %v447
    %565 = vmatmul.f32.gmra.mxu0 0.0
    %v566 = vpop.f32.mrf.mxu0
    %v567 = vadd.f32 %v403, %v566
    %568 = vdwg.mxu0
    %569 = vmatpush.msra.mxu0 %v508
    %570 = vmatpush.msra.mxu0 %v504
    %571 = vmatpush.msra.mxu0 %v500
    %572 = vmatpush.msra.mxu0 %v496
    %573 = vmatpush.msra.mxu0 %v492
    %574 = vmatpush.msra.mxu0 %v488
    %575 = vmatpush.msra.mxu0 %v484
    %576 = vmatpush.msra.mxu0 %v480
    %577 = vmatpush.msra.mxu0 %v476
    %578 = vmatpush.msra.mxu0 %v472
    %579 = vmatpush.msra.mxu0 %v468
    %580 = vmatpush.msra.mxu0 %v464
    %581 = vmatpush.msra.mxu0 %v460
    %582 = vmatpush.msra.mxu0 %v456
    %583 = vmatpush.msra.mxu0 %v452
    %584 = vmatpush.msra.mxu0 %v448
    %585 = vmatmul.f32.gmra.mxu0 0.0
    %v586 = vpop.f32.mrf.mxu0
    %v587 = vadd.f32 %v404, %v586
    %588 = vdwg.mxu0
    %v589 = vsub.f32 0.0, %v527
    %v590 = vmul.f32 %v589, 1.442695
    %v591 = vpow.pop %v590
    %v592 = vadd.f32 %v591, 1.0
    %v593 = vrcp.pop %v592
    %v594 = vmul.f32 %v592, %v593
    %v595 = vsub.f32 1.0, %v594
    %v596 = vmul.f32 %v593, %v595
    %v597 = vadd.f32 %v593, %v596
    %vm598 = vweird.f32 %v592
    %vm599 = vweird.f32 %v593
    %vm600 = vmor %vm598, %vm599
    %v601 = vsel %vm600, %v593, %v597
    %v602 = vand.u32 2147483647, %v592
    %vm603 = vcmp.eq.f32.partialorder %v602, 8.507059e+37
    %v604 = vand.u32 %v592, 2147483648
    %v605 = vor.u32 1.1754944e-38, %v604
    %v606 = vsel %vm603, %v605, %v601
    %v607 = vmul.f32 1.0, %v606
    %v608 = vsub.f32 0.0, %v547
    %v609 = vmul.f32 %v608, 1.442695
    %v610 = vpow.pop %v609
    %v611 = vadd.f32 %v610, 1.0
    %v612 = vrcp.pop %v611
    %v613 = vmul.f32 %v611, %v612
    %v614 = vsub.f32 1.0, %v613
    %v615 = vmul.f32 %v612, %v614
    %v616 = vadd.f32 %v612, %v615
    %vm617 = vweird.f32 %v611
    %vm618 = vweird.f32 %v612
    %vm619 = vmor %vm617, %vm618
    %v620 = vsel %vm619, %v612, %v616
    %v621 = vand.u32 2147483647, %v611
    %vm622 = vcmp.eq.f32.partialorder %v621, 8.507059e+37
    %v623 = vand.u32 %v611, 2147483648
    %v624 = vor.u32 1.1754944e-38, %v623
    %v625 = vsel %vm622, %v624, %v620
    %v626 = vmul.f32 1.0, %v625
    %v627 = vtanh.pop %v567
    %v628 = vsub.f32 0.0, %v587
    %v629 = vmul.f32 %v628, 1.442695
    %v630 = vpow.pop %v629
    %v631 = vadd.f32 %v630, 1.0
    %v632 = vrcp.pop %v631
    %v633 = vmul.f32 %v631, %v632
    %v634 = vsub.f32 1.0, %v633
    %v635 = vmul.f32 %v632, %v634
    %v636 = vadd.f32 %v632, %v635
    %vm637 = vweird.f32 %v631
    %vm638 = vweird.f32 %v632
    %vm639 = vmor %vm637, %vm638
    %v640 = vsel %vm639, %v632, %v636
    %v641 = vand.u32 2147483647, %v631
    %vm642 = vcmp.eq.f32.partialorder %v641, 8.507059e+37
    %v643 = vand.u32 %v631, 2147483648
    %v644 = vor.u32 1.1754944e-38, %v643
    %v645 = vsel %vm642, %v644, %v640
    %v646 = vmul.f32 1.0, %v645
    %v647 = vmul.f32 %v626, 0.0
    %v648 = vmul.f32 %v607, %v627
    %v649 = vadd.f32 %v647, %v648
    %v650 = vtanh.pop %v649
    %v651 = vmul.f32 %v646, %v650
    %v656 = vrot.slane %v413, 2
    %v657 = vrot.slane %v414, 2
    %v658 = vrot.slane %v415, 2
    %v659 = vrot.slane %v416, 2
    %664 = vmatpush.msra.mxu0 %v505
    %665 = vmatpush.msra.mxu0 %v501
    %666 = vmatpush.msra.mxu0 %v497
    %667 = vmatpush.msra.mxu0 %v493
    %668 = vmatpush.msra.mxu0 %v489
    %669 = vmatpush.msra.mxu0 %v485
    %670 = vmatpush.msra.mxu0 %v481
    %671 = vmatpush.msra.mxu0 %v477
    %672 = vmatpush.msra.mxu0 %v473
    %673 = vmatpush.msra.mxu0 %v469
    %674 = vmatpush.msra.mxu0 %v465
    %675 = vmatpush.msra.mxu0 %v461
    %676 = vmatpush.msra.mxu0 %v457
    %677 = vmatpush.msra.mxu0 %v453
    %678 = vmatpush.msra.mxu0 %v449
    %679 = vmatpush.msra.mxu0 %v445
    %680 = vmatmul.f32.gmra.mxu0 %v651
    %v681 = vpop.f32.mrf.mxu0
    %v682 = vadd.f32 %v656, %v681
    %683 = vdwg.mxu0
    %684 = vmatpush.msra.mxu0 %v506
    %685 = vmatpush.msra.mxu0 %v502
    %686 = vmatpush.msra.mxu0 %v498
    %687 = vmatpush.msra.mxu0 %v494
    %688 = vmatpush.msra.mxu0 %v490
    %689 = vmatpush.msra.mxu0 %v486
    %690 = vmatpush.msra.mxu0 %v482
    %691 = vmatpush.msra.mxu0 %v478
    %692 = vmatpush.msra.mxu0 %v474
    %693 = vmatpush.msra.mxu0 %v470
    %694 = vmatpush.msra.mxu0 %v466
    %695 = vmatpush.msra.mxu0 %v462
    %696 = vmatpush.msra.mxu0 %v458
    %697 = vmatpush.msra.mxu0 %v454
    %698 = vmatpush.msra.mxu0 %v450
    %699 = vmatpush.msra.mxu0 %v446
    %700 = vmatmul.f32.gmra.mxu0 %v651
    %v701 = vpop.f32.mrf.mxu0
    %v702 = vadd.f32 %v657, %v701
    %703 = vdwg.mxu0
    %704 = vmatpush.msra.mxu0 %v507
    %705 = vmatpush.msra.mxu0 %v503
    %706 = vmatpush.msra.mxu0 %v499
    %707 = vmatpush.msra.mxu0 %v495
    %708 = vmatpush.msra.mxu0 %v491
    %709 = vmatpush.msra.mxu0 %v487
    %710 = vmatpush.msra.mxu0 %v483
    %711 = vmatpush.msra.mxu0 %v479
    %712 = vmatpush.msra.mxu0 %v475
    %713 = vmatpush.msra.mxu0 %v471
    %714 = vmatpush.msra.mxu0 %v467
    %715 = vmatpush.msra.mxu0 %v463
    %716 = vmatpush.msra.mxu0 %v459
    %717 = vmatpush.msra.mxu0 %v455
    %718 = vmatpush.msra.mxu0 %v451
    %719 = vmatpush.msra.mxu0 %v447
    %720 = vmatmul.f32.gmra.mxu0 %v651
    %v721 = vpop.f32.mrf.mxu0
    %v722 = vadd.f32 %v658, %v721
    %723 = vdwg.mxu0
    %724 = vmatpush.msra.mxu0 %v508
    %725 = vmatpush.msra.mxu0 %v504
    %726 = vmatpush.msra.mxu0 %v500
    %727 = vmatpush.msra.mxu0 %v496
    %728 = vmatpush.msra.mxu0 %v492
    %729 = vmatpush.msra.mxu0 %v488
    %730 = vmatpush.msra.mxu0 %v484
    %731 = vmatpush.msra.mxu0 %v480
    %732 = vmatpush.msra.mxu0 %v476
    %733 = vmatpush.msra.mxu0 %v472
    %734 = vmatpush.msra.mxu0 %v468
    %735 = vmatpush.msra.mxu0 %v464
    %736 = vmatpush.msra.mxu0 %v460
    %737 = vmatpush.msra.mxu0 %v456
    %738 = vmatpush.msra.mxu0 %v452
    %739 = vmatpush.msra.mxu0 %v448
    %740 = vmatmul.f32.gmra.mxu0 %v651
    %v741 = vpop.f32.mrf.mxu0
    %v742 = vadd.f32 %v659, %v741
    %743 = vdwg.mxu0
    %v744 = vsub.f32 0.0, %v682
    %v745 = vmul.f32 %v744, 1.442695
    %v746 = vpow.pop %v745
    %v747 = vadd.f32 %v746, 1.0
    %v748 = vrcp.pop %v747
    %v749 = vmul.f32 %v747, %v748
    %v750 = vsub.f32 1.0, %v749
    %v751 = vmul.f32 %v748, %v750
    %v752 = vadd.f32 %v748, %v751
    %vm753 = vweird.f32 %v747
    %vm754 = vweird.f32 %v748
    %vm755 = vmor %vm753, %vm754
    %v756 = vsel %vm755, %v748, %v752
    %v757 = vand.u32 2147483647, %v747
    %vm758 = vcmp.eq.f32.partialorder %v757, 8.507059e+37
    %v759 = vand.u32 %v747, 2147483648
    %v760 = vor.u32 1.1754944e-38, %v759
    %v761 = vsel %vm758, %v760, %v756
    %v762 = vmul.f32 1.0, %v761
    %v763 = vsub.f32 0.0, %v702
    %v764 = vmul.f32 %v763, 1.442695
    %v765 = vpow.pop %v764
    %v766 = vadd.f32 %v765, 1.0
    %v767 = vrcp.pop %v766
    %v768 = vmul.f32 %v766, %v767
    %v769 = vsub.f32 1.0, %v768
    %v770 = vmul.f32 %v767, %v769
    %v771 = vadd.f32 %v767, %v770
    %vm772 = vweird.f32 %v766
    %vm773 = vweird.f32 %v767
    %vm774 = vmor %vm772, %vm773
    %v775 = vsel %vm774, %v767, %v771
    %v776 = vand.u32 2147483647, %v766
    %vm777 = vcmp.eq.f32.partialorder %v776, 8.507059e+37
    %v778 = vand.u32 %v766, 2147483648
    %v779 = vor.u32 1.1754944e-38, %v778
    %v780 = vsel %vm777, %v779, %v775
    %v781 = vmul.f32 1.0, %v780
    %v782 = vtanh.pop %v722
    %v783 = vsub.f32 0.0, %v742
    %v784 = vmul.f32 %v783, 1.442695
    %v785 = vpow.pop %v784
    %v786 = vadd.f32 %v785, 1.0
    %v787 = vrcp.pop %v786
    %v788 = vmul.f32 %v786, %v787
    %v789 = vsub.f32 1.0, %v788
    %v790 = vmul.f32 %v787, %v789
    %v791 = vadd.f32 %v787, %v790
    %vm792 = vweird.f32 %v786
    %vm793 = vweird.f32 %v787
    %vm794 = vmor %vm792, %vm793
    %v795 = vsel %vm794, %v787, %v791
    %v796 = vand.u32 2147483647, %v786
    %vm797 = vcmp.eq.f32.partialorder %v796, 8.507059e+37
    %v798 = vand.u32 %v786, 2147483648
    %v799 = vor.u32 1.1754944e-38, %v798
    %v800 = vsel %vm797, %v799, %v795
    %v801 = vmul.f32 1.0, %v800
    %v802 = vmul.f32 %v781, %v649
    %v803 = vmul.f32 %v762, %v782
    %v804 = vadd.f32 %v802, %v803
    %v805 = vtanh.pop %v804
    %v806 = vmul.f32 %v801, %v805
    %v811 = vrot.slane %v401, 4
    %v812 = vrot.slane %v402, 4
    %v813 = vrot.slane %v403, 4
    %v814 = vrot.slane %v404, 4
    %819 = vmatpush.msra.mxu0 %v505
    %820 = vmatpush.msra.mxu0 %v501
    %821 = vmatpush.msra.mxu0 %v497
    %822 = vmatpush.msra.mxu0 %v493
    %823 = vmatpush.msra.mxu0 %v489
    %824 = vmatpush.msra.mxu0 %v485
    %825 = vmatpush.msra.mxu0 %v481
    %826 = vmatpush.msra.mxu0 %v477
    %827 = vmatpush.msra.mxu0 %v473
    %828 = vmatpush.msra.mxu0 %v469
    %829 = vmatpush.msra.mxu0 %v465
    %830 = vmatpush.msra.mxu0 %v461
    %831 = vmatpush.msra.mxu0 %v457
    %832 = vmatpush.msra.mxu0 %v453
    %833 = vmatpush.msra.mxu0 %v449
    %834 = vmatpush.msra.mxu0 %v445
    %835 = vmatmul.f32.gmra.mxu0 %v806
    %v836 = vpop.f32.mrf.mxu0
    %v837 = vadd.f32 %v811, %v836
    %838 = vdwg.mxu0
    %839 = vmatpush.msra.mxu0 %v506
    %840 = vmatpush.msra.mxu0 %v502
    %841 = vmatpush.msra.mxu0 %v498
    %842 = vmatpush.msra.mxu0 %v494
    %843 = vmatpush.msra.mxu0 %v490
    %844 = vmatpush.msra.mxu0 %v486
    %845 = vmatpush.msra.mxu0 %v482
    %846 = vmatpush.msra.mxu0 %v478
    %847 = vmatpush.msra.mxu0 %v474
    %848 = vmatpush.msra.mxu0 %v470
    %849 = vmatpush.msra.mxu0 %v466
    %850 = vmatpush.msra.mxu0 %v462
    %851 = vmatpush.msra.mxu0 %v458
    %852 = vmatpush.msra.mxu0 %v454
    %853 = vmatpush.msra.mxu0 %v450
    %854 = vmatpush.msra.mxu0 %v446
    %855 = vmatmul.f32.gmra.mxu0 %v806
    %v856 = vpop.f32.mrf.mxu0
    %v857 = vadd.f32 %v812, %v856
    %858 = vdwg.mxu0
    %859 = vmatpush.msra.mxu0 %v507
    %860 = vmatpush.msra.mxu0 %v503
    %861 = vmatpush.msra.mxu0 %v499
    %862 = vmatpush.msra.mxu0 %v495
    %863 = vmatpush.msra.mxu0 %v491
    %864 = vmatpush.msra.mxu0 %v487
    %865 = vmatpush.msra.mxu0 %v483
    %866 = vmatpush.msra.mxu0 %v479
    %867 = vmatpush.msra.mxu0 %v475
    %868 = vmatpush.msra.mxu0 %v471
    %869 = vmatpush.msra.mxu0 %v467
    %870 = vmatpush.msra.mxu0 %v463
    %871 = vmatpush.msra.mxu0 %v459
    %872 = vmatpush.msra.mxu0 %v455
    %873 = vmatpush.msra.mxu0 %v451
    %874 = vmatpush.msra.mxu0 %v447
    %875 = vmatmul.f32.gmra.mxu0 %v806
    %v876 = vpop.f32.mrf.mxu0
    %v877 = vadd.f32 %v813, %v876
    %878 = vdwg.mxu0
    %879 = vmatpush.msra.mxu0 %v508
    %880 = vmatpush.msra.mxu0 %v504
    %881 = vmatpush.msra.mxu0 %v500
    %882 = vmatpush.msra.mxu0 %v496
    %883 = vmatpush.msra.mxu0 %v492
    %884 = vmatpush.msra.mxu0 %v488
    %885 = vmatpush.msra.mxu0 %v484
    %886 = vmatpush.msra.mxu0 %v480
    %887 = vmatpush.msra.mxu0 %v476
    %888 = vmatpush.msra.mxu0 %v472
    %889 = vmatpush.msra.mxu0 %v468
    %890 = vmatpush.msra.mxu0 %v464
    %891 = vmatpush.msra.mxu0 %v460
    %892 = vmatpush.msra.mxu0 %v456
    %893 = vmatpush.msra.mxu0 %v452
    %894 = vmatpush.msra.mxu0 %v448
    %895 = vmatmul.f32.gmra.mxu0 %v806
    %v896 = vpop.f32.mrf.mxu0
    %v897 = vadd.f32 %v814, %v896
    %898 = vdwg.mxu0
    %v899 = vsub.f32 0.0, %v837
    %v900 = vmul.f32 %v899, 1.442695
    %v901 = vpow.pop %v900
    %v902 = vadd.f32 %v901, 1.0
    %v903 = vrcp.pop %v902
    %v904 = vmul.f32 %v902, %v903
    %v905 = vsub.f32 1.0, %v904
    %v906 = vmul.f32 %v903, %v905
    %v907 = vadd.f32 %v903, %v906
    %vm908 = vweird.f32 %v902
    %vm909 = vweird.f32 %v903
    %vm910 = vmor %vm908, %vm909
    %v911 = vsel %vm910, %v903, %v907
    %v912 = vand.u32 2147483647, %v902
    %vm913 = vcmp.eq.f32.partialorder %v912, 8.507059e+37
    %v914 = vand.u32 %v902, 2147483648
    %v915 = vor.u32 1.1754944e-38, %v914
    %v916 = vsel %vm913, %v915, %v911
    %v917 = vmul.f32 1.0, %v916
    %v918 = vsub.f32 0.0, %v857
    %v919 = vmul.f32 %v918, 1.442695
    %v920 = vpow.pop %v919
    %v921 = vadd.f32 %v920, 1.0
    %v922 = vrcp.pop %v921
    %v923 = vmul.f32 %v921, %v922
    %v924 = vsub.f32 1.0, %v923
    %v925 = vmul.f32 %v922, %v924
    %v926 = vadd.f32 %v922, %v925
    %vm927 = vweird.f32 %v921
    %vm928 = vweird.f32 %v922
    %vm929 = vmor %vm927, %vm928
    %v930 = vsel %vm929, %v922, %v926
    %v931 = vand.u32 2147483647, %v921
    %vm932 = vcmp.eq.f32.partialorder %v931, 8.507059e+37
    %v933 = vand.u32 %v921, 2147483648
    %v934 = vor.u32 1.1754944e-38, %v933
    %v935 = vsel %vm932, %v934, %v930
    %v936 = vmul.f32 1.0, %v935
    %v937 = vtanh.pop %v877
    %v938 = vsub.f32 0.0, %v897
    %v939 = vmul.f32 %v938, 1.442695
    %v940 = vpow.pop %v939
    %v941 = vadd.f32 %v940, 1.0
    %v942 = vrcp.pop %v941
    %v943 = vmul.f32 %v941, %v942
    %v944 = vsub.f32 1.0, %v943
    %v945 = vmul.f32 %v942, %v944
    %v946 = vadd.f32 %v942, %v945
    %vm947 = vweird.f32 %v941
    %vm948 = vweird.f32 %v942
    %vm949 = vmor %vm947, %vm948
    %v950 = vsel %vm949, %v942, %v946
    %v951 = vand.u32 2147483647, %v941
    %vm952 = vcmp.eq.f32.partialorder %v951, 8.507059e+37
    %v953 = vand.u32 %v941, 2147483648
    %v954 = vor.u32 1.1754944e-38, %v953
    %v955 = vsel %vm952, %v954, %v950
    %v956 = vmul.f32 1.0, %v955
    %v957 = vmul.f32 %v936, %v804
    %v958 = vmul.f32 %v917, %v937
    %v959 = vadd.f32 %v957, %v958
    %v960 = vtanh.pop %v959
    %v961 = vmul.f32 %v956, %v960
    %v962 = vrot.slane %v413, 6
    %v963 = vrot.slane %v414, 6
    %v964 = vrot.slane %v415, 6
    %v965 = vrot.slane %v416, 6
    %970 = vmatpush.msra.mxu0 %v505
    %971 = vmatpush.msra.mxu0 %v501
    %972 = vmatpush.msra.mxu0 %v497
    %973 = vmatpush.msra.mxu0 %v493
    %974 = vmatpush.msra.mxu0 %v489
    %975 = vmatpush.msra.mxu0 %v485
    %976 = vmatpush.msra.mxu0 %v481
    %977 = vmatpush.msra.mxu0 %v477
    %978 = vmatpush.msra.mxu0 %v473
    %979 = vmatpush.msra.mxu0 %v469
    %980 = vmatpush.msra.mxu0 %v465
    %981 = vmatpush.msra.mxu0 %v461
    %982 = vmatpush.msra.mxu0 %v457
    %983 = vmatpush.msra.mxu0 %v453
    %984 = vmatpush.msra.mxu0 %v449
    %985 = vmatpush.msra.mxu0 %v445
    %986 = vmatmul.f32.gmra.mxu0 %v961
    %v987 = vpop.f32.mrf.mxu0
    %v988 = vadd.f32 %v962, %v987
    %989 = vdwg.mxu0
    %990 = vmatpush.msra.mxu0 %v506
    %991 = vmatpush.msra.mxu0 %v502
    %992 = vmatpush.msra.mxu0 %v498
    %993 = vmatpush.msra.mxu0 %v494
    %994 = vmatpush.msra.mxu0 %v490
    %995 = vmatpush.msra.mxu0 %v486
    %996 = vmatpush.msra.mxu0 %v482
    %997 = vmatpush.msra.mxu0 %v478
    %998 = vmatpush.msra.mxu0 %v474
    %999 = vmatpush.msra.mxu0 %v470
    %1000 = vmatpush.msra.mxu0 %v466
    %1001 = vmatpush.msra.mxu0 %v462
    %1002 = vmatpush.msra.mxu0 %v458
    %1003 = vmatpush.msra.mxu0 %v454
    %1004 = vmatpush.msra.mxu0 %v450
    %1005 = vmatpush.msra.mxu0 %v446
    %1006 = vmatmul.f32.gmra.mxu0 %v961
    %v1007 = vpop.f32.mrf.mxu0
    %v1008 = vadd.f32 %v963, %v1007
    %1009 = vdwg.mxu0
    %1010 = vmatpush.msra.mxu0 %v507
    %1011 = vmatpush.msra.mxu0 %v503
    %1012 = vmatpush.msra.mxu0 %v499
    %1013 = vmatpush.msra.mxu0 %v495
    %1014 = vmatpush.msra.mxu0 %v491
    %1015 = vmatpush.msra.mxu0 %v487
    %1016 = vmatpush.msra.mxu0 %v483
    %1017 = vmatpush.msra.mxu0 %v479
    %1018 = vmatpush.msra.mxu0 %v475
    %1019 = vmatpush.msra.mxu0 %v471
    %1020 = vmatpush.msra.mxu0 %v467
    %1021 = vmatpush.msra.mxu0 %v463
    %1022 = vmatpush.msra.mxu0 %v459
    %1023 = vmatpush.msra.mxu0 %v455
    %1024 = vmatpush.msra.mxu0 %v451
    %1025 = vmatpush.msra.mxu0 %v447
    %1026 = vmatmul.f32.gmra.mxu0 %v961
    %v1027 = vpop.f32.mrf.mxu0
    %v1028 = vadd.f32 %v964, %v1027
    %1029 = vdwg.mxu0
    %1030 = vmatpush.msra.mxu0 %v508
    %1031 = vmatpush.msra.mxu0 %v504
    %1032 = vmatpush.msra.mxu0 %v500
    %1033 = vmatpush.msra.mxu0 %v496
    %1034 = vmatpush.msra.mxu0 %v492
    %1035 = vmatpush.msra.mxu0 %v488
    %1036 = vmatpush.msra.mxu0 %v484
    %1037 = vmatpush.msra.mxu0 %v480
    %1038 = vmatpush.msra.mxu0 %v476
    %1039 = vmatpush.msra.mxu0 %v472
    %1040 = vmatpush.msra.mxu0 %v468
    %1041 = vmatpush.msra.mxu0 %v464
    %1042 = vmatpush.msra.mxu0 %v460
    %1043 = vmatpush.msra.mxu0 %v456
    %1044 = vmatpush.msra.mxu0 %v452
    %1045 = vmatpush.msra.mxu0 %v448
    %1046 = vmatmul.f32.gmra.mxu0 %v961
    %v1047 = vpop.f32.mrf.mxu0
    %v1048 = vadd.f32 %v965, %v1047
    %1049 = vdwg.mxu0
    %v1050 = vsub.f32 0.0, %v988
    %v1051 = vmul.f32 %v1050, 1.442695
    %v1052 = vpow.pop %v1051
    %v1053 = vadd.f32 %v1052, 1.0
    %v1054 = vrcp.pop %v1053
    %v1055 = vmul.f32 %v1053, %v1054
    %v1056 = vsub.f32 1.0, %v1055
    %v1057 = vmul.f32 %v1054, %v1056
    %v1058 = vadd.f32 %v1054, %v1057
    %vm1059 = vweird.f32 %v1053
    %vm1060 = vweird.f32 %v1054
    %vm1061 = vmor %vm1059, %vm1060
    %v1062 = vsel %vm1061, %v1054, %v1058
    %v1063 = vand.u32 2147483647, %v1053
    %vm1064 = vcmp.eq.f32.partialorder %v1063, 8.507059e+37
    %v1065 = vand.u32 %v1053, 2147483648
    %v1066 = vor.u32 1.1754944e-38, %v1065
    %v1067 = vsel %vm1064, %v1066, %v1062
    %v1068 = vmul.f32 1.0, %v1067
    %v1069 = vsub.f32 0.0, %v1008
    %v1070 = vmul.f32 %v1069, 1.442695
    %v1071 = vpow.pop %v1070
    %v1072 = vadd.f32 %v1071, 1.0
    %v1073 = vrcp.pop %v1072
    %v1074 = vmul.f32 %v1072, %v1073
    %v1075 = vsub.f32 1.0, %v1074
    %v1076 = vmul.f32 %v1073, %v1075
    %v1077 = vadd.f32 %v1073, %v1076
    %vm1078 = vweird.f32 %v1072
    %vm1079 = vweird.f32 %v1073
    %vm1080 = vmor %vm1078, %vm1079
    %v1081 = vsel %vm1080, %v1073, %v1077
    %v1082 = vand.u32 2147483647, %v1072
    %vm1083 = vcmp.eq.f32.partialorder %v1082, 8.507059e+37
    %v1084 = vand.u32 %v1072, 2147483648
    %v1085 = vor.u32 1.1754944e-38, %v1084
    %v1086 = vsel %vm1083, %v1085, %v1081
    %v1087 = vmul.f32 1.0, %v1086
    %v1088 = vtanh.pop %v1028
    %v1089 = vsub.f32 0.0, %v1048
    %v1090 = vmul.f32 %v1089, 1.442695
    %v1091 = vpow.pop %v1090
    %v1092 = vadd.f32 %v1091, 1.0
    %v1093 = vrcp.pop %v1092
    %v1094 = vmul.f32 %v1092, %v1093
    %v1095 = vsub.f32 1.0, %v1094
    %v1096 = vmul.f32 %v1093, %v1095
    %v1097 = vadd.f32 %v1093, %v1096
    %vm1098 = vweird.f32 %v1092
    %vm1099 = vweird.f32 %v1093
    %vm1100 = vmor %vm1098, %vm1099
    %v1101 = vsel %vm1100, %v1093, %v1097
    %v1102 = vand.u32 2147483647, %v1092
    %vm1103 = vcmp.eq.f32.partialorder %v1102, 8.507059e+37
    %v1104 = vand.u32 %v1092, 2147483648
    %v1105 = vor.u32 1.1754944e-38, %v1104
    %v1106 = vsel %vm1103, %v1105, %v1101
    %v1107 = vmul.f32 1.0, %v1106
    %v1108 = vmul.f32 %v1087, %v959
    %v1109 = vmul.f32 %v1068, %v1088
    %v1110 = vadd.f32 %v1108, %v1109
    %v1111 = vtanh.pop %v1110
    %v1112 = vmul.f32 %v1107, %v1111
    %1113 = vmatpush.msra.mxu0 %v505
    %1114 = vmatpush.msra.mxu0 %v501
    %1115 = vmatpush.msra.mxu0 %v497
    %1116 = vmatpush.msra.mxu0 %v493
    %1117 = vmatpush.msra.mxu0 %v489
    %1118 = vmatpush.msra.mxu0 %v485
    %1119 = vmatpush.msra.mxu0 %v481
    %1120 = vmatpush.msra.mxu0 %v477
    %1121 = vmatpush.msra.mxu0 %v473
    %1122 = vmatpush.msra.mxu0 %v469
    %1123 = vmatpush.msra.mxu0 %v465
    %1124 = vmatpush.msra.mxu0 %v461
    %1125 = vmatpush.msra.mxu0 %v457
    %1126 = vmatpush.msra.mxu0 %v453
    %1127 = vmatpush.msra.mxu0 %v449
    %1128 = vmatpush.msra.mxu0 %v445
    %1129 = vmatmul.f32.gmra.mxu0 %v1112
    %v1130 = vpop.f32.mrf.mxu0
    %v1131 = vadd.f32 %v429, %v1130
    %1132 = vdwg.mxu0
    %1133 = vmatpush.msra.mxu0 %v506
    %1134 = vmatpush.msra.mxu0 %v502
    %1135 = vmatpush.msra.mxu0 %v498
    %1136 = vmatpush.msra.mxu0 %v494
    %1137 = vmatpush.msra.mxu0 %v490
    %1138 = vmatpush.msra.mxu0 %v486
    %1139 = vmatpush.msra.mxu0 %v482
    %1140 = vmatpush.msra.mxu0 %v478
    %1141 = vmatpush.msra.mxu0 %v474
    %1142 = vmatpush.msra.mxu0 %v470
    %1143 = vmatpush.msra.mxu0 %v466
    %1144 = vmatpush.msra.mxu0 %v462
    %1145 = vmatpush.msra.mxu0 %v458
    %1146 = vmatpush.msra.mxu0 %v454
    %1147 = vmatpush.msra.mxu0 %v450
    %1148 = vmatpush.msra.mxu0 %v446
    %1149 = vmatmul.f32.gmra.mxu0 %v1112
    %v1150 = vpop.f32.mrf.mxu0
    %v1151 = vadd.f32 %v430, %v1150
    %1152 = vdwg.mxu0
    %1153 = vmatpush.msra.mxu0 %v507
    %1154 = vmatpush.msra.mxu0 %v503
    %1155 = vmatpush.msra.mxu0 %v499
    %1156 = vmatpush.msra.mxu0 %v495
    %1157 = vmatpush.msra.mxu0 %v491
    %1158 = vmatpush.msra.mxu0 %v487
    %1159 = vmatpush.msra.mxu0 %v483
    %1160 = vmatpush.msra.mxu0 %v479
    %1161 = vmatpush.msra.mxu0 %v475
    %1162 = vmatpush.msra.mxu0 %v471
    %1163 = vmatpush.msra.mxu0 %v467
    %1164 = vmatpush.msra.mxu0 %v463
    %1165 = vmatpush.msra.mxu0 %v459
    %1166 = vmatpush.msra.mxu0 %v455
    %1167 = vmatpush.msra.mxu0 %v451
    %1168 = vmatpush.msra.mxu0 %v447
    %1169 = vmatmul.f32.gmra.mxu0 %v1112
    %v1170 = vpop.f32.mrf.mxu0
    %v1171 = vadd.f32 %v431, %v1170
    %1172 = vdwg.mxu0
    %1173 = vmatpush.msra.mxu0 %v508
    %1174 = vmatpush.msra.mxu0 %v504
    %1175 = vmatpush.msra.mxu0 %v500
    %1176 = vmatpush.msra.mxu0 %v496
    %1177 = vmatpush.msra.mxu0 %v492
    %1178 = vmatpush.msra.mxu0 %v488
    %1179 = vmatpush.msra.mxu0 %v484
    %1180 = vmatpush.msra.mxu0 %v480
    %1181 = vmatpush.msra.mxu0 %v476
    %1182 = vmatpush.msra.mxu0 %v472
    %1183 = vmatpush.msra.mxu0 %v468
    %1184 = vmatpush.msra.mxu0 %v464
    %1185 = vmatpush.msra.mxu0 %v460
    %1186 = vmatpush.msra.mxu0 %v456
    %1187 = vmatpush.msra.mxu0 %v452
    %1188 = vmatpush.msra.mxu0 %v448
    %1189 = vmatmul.f32.gmra.mxu0 %v1112
    %v1190 = vpop.f32.mrf.mxu0
    %v1191 = vadd.f32 %v432, %v1190
    %1192 = vdwg.mxu0
    %v1193 = vsub.f32 0.0, %v1131
    %v1194 = vmul.f32 %v1193, 1.442695
    %v1195 = vpow.pop %v1194
    %v1196 = vadd.f32 %v1195, 1.0
    %v1197 = vrcp.pop %v1196
    %v1198 = vmul.f32 %v1196, %v1197
    %v1199 = vsub.f32 1.0, %v1198
    %v1200 = vmul.f32 %v1197, %v1199
    %v1201 = vadd.f32 %v1197, %v1200
    %vm1202 = vweird.f32 %v1196
    %vm1203 = vweird.f32 %v1197
    %vm1204 = vmor %vm1202, %vm1203
    %v1205 = vsel %vm1204, %v1197, %v1201
    %v1206 = vand.u32 2147483647, %v1196
    %vm1207 = vcmp.eq.f32.partialorder %v1206, 8.507059e+37
    %v1208 = vand.u32 %v1196, 2147483648
    %v1209 = vor.u32 1.1754944e-38, %v1208
    %v1210 = vsel %vm1207, %v1209, %v1205
    %v1211 = vmul.f32 1.0, %v1210
    %v1212 = vsub.f32 0.0, %v1151
    %v1213 = vmul.f32 %v1212, 1.442695
    %v1214 = vpow.pop %v1213
    %v1215 = vadd.f32 %v1214, 1.0
    %v1216 = vrcp.pop %v1215
    %v1217 = vmul.f32 %v1215, %v1216
    %v1218 = vsub.f32 1.0, %v1217
    %v1219 = vmul.f32 %v1216, %v1218
    %v1220 = vadd.f32 %v1216, %v1219
    %vm1221 = vweird.f32 %v1215
    %vm1222 = vweird.f32 %v1216
    %vm1223 = vmor %vm1221, %vm1222
    %v1224 = vsel %vm1223, %v1216, %v1220
    %v1225 = vand.u32 2147483647, %v1215
    %vm1226 = vcmp.eq.f32.partialorder %v1225, 8.507059e+37
    %v1227 = vand.u32 %v1215, 2147483648
    %v1228 = vor.u32 1.1754944e-38, %v1227
    %v1229 = vsel %vm1226, %v1228, %v1224
    %v1230 = vmul.f32 1.0, %v1229
    %v1231 = vtanh.pop %v1171
    %v1232 = vsub.f32 0.0, %v1191
    %v1233 = vmul.f32 %v1232, 1.442695
    %v1234 = vpow.pop %v1233
    %v1235 = vadd.f32 %v1234, 1.0
    %v1236 = vrcp.pop %v1235
    %v1237 = vmul.f32 %v1235, %v1236
    %v1238 = vsub.f32 1.0, %v1237
    %v1239 = vmul.f32 %v1236, %v1238
    %v1240 = vadd.f32 %v1236, %v1239
    %vm1241 = vweird.f32 %v1235
    %vm1242 = vweird.f32 %v1236
    %vm1243 = vmor %vm1241, %vm1242
    %v1244 = vsel %vm1243, %v1236, %v1240
    %v1245 = vand.u32 2147483647, %v1235
    %vm1246 = vcmp.eq.f32.partialorder %v1245, 8.507059e+37
    %v1247 = vand.u32 %v1235, 2147483648
    %v1248 = vor.u32 1.1754944e-38, %v1247
    %v1249 = vsel %vm1246, %v1248, %v1244
    %v1250 = vmul.f32 1.0, %v1249
    %v1251 = vmul.f32 %v1230, %v1110
    %v1252 = vmul.f32 %v1211, %v1231
    %v1253 = vadd.f32 %v1251, %v1252
    %v1254 = vtanh.pop %v1253
    %v1255 = vmul.f32 %v1250, %v1254
    %v1260 = vrot.slane %v441, 2
    %v1261 = vrot.slane %v442, 2
    %v1262 = vrot.slane %v443, 2
    %v1263 = vrot.slane %v444, 2
    %1268 = vmatpush.msra.mxu0 %v505
    %1269 = vmatpush.msra.mxu0 %v501
    %1270 = vmatpush.msra.mxu0 %v497
    %1271 = vmatpush.msra.mxu0 %v493
    %1272 = vmatpush.msra.mxu0 %v489
    %1273 = vmatpush.msra.mxu0 %v485
    %1274 = vmatpush.msra.mxu0 %v481
    %1275 = vmatpush.msra.mxu0 %v477
    %1276 = vmatpush.msra.mxu0 %v473
    %1277 = vmatpush.msra.mxu0 %v469
    %1278 = vmatpush.msra.mxu0 %v465
    %1279 = vmatpush.msra.mxu0 %v461
    %1280 = vmatpush.msra.mxu0 %v457
    %1281 = vmatpush.msra.mxu0 %v453
    %1282 = vmatpush.msra.mxu0 %v449
    %1283 = vmatpush.msra.mxu0 %v445
    %1284 = vmatmul.f32.gmra.mxu0 %v1255
    %v1285 = vpop.f32.mrf.mxu0
    %v1286 = vadd.f32 %v1260, %v1285
    %1287 = vdwg.mxu0
    %1288 = vmatpush.msra.mxu0 %v506
    %1289 = vmatpush.msra.mxu0 %v502
    %1290 = vmatpush.msra.mxu0 %v498
    %1291 = vmatpush.msra.mxu0 %v494
    %1292 = vmatpush.msra.mxu0 %v490
    %1293 = vmatpush.msra.mxu0 %v486
    %1294 = vmatpush.msra.mxu0 %v482
    %1295 = vmatpush.msra.mxu0 %v478
    %1296 = vmatpush.msra.mxu0 %v474
    %1297 = vmatpush.msra.mxu0 %v470
    %1298 = vmatpush.msra.mxu0 %v466
    %1299 = vmatpush.msra.mxu0 %v462
    %1300 = vmatpush.msra.mxu0 %v458
    %1301 = vmatpush.msra.mxu0 %v454
    %1302 = vmatpush.msra.mxu0 %v450
    %1303 = vmatpush.msra.mxu0 %v446
    %1304 = vmatmul.f32.gmra.mxu0 %v1255
    %v1305 = vpop.f32.mrf.mxu0
    %v1306 = vadd.f32 %v1261, %v1305
    %1307 = vdwg.mxu0
    %1308 = vmatpush.msra.mxu0 %v507
    %1309 = vmatpush.msra.mxu0 %v503
    %1310 = vmatpush.msra.mxu0 %v499
    %1311 = vmatpush.msra.mxu0 %v495
    %1312 = vmatpush.msra.mxu0 %v491
    %1313 = vmatpush.msra.mxu0 %v487
    %1314 = vmatpush.msra.mxu0 %v483
    %1315 = vmatpush.msra.mxu0 %v479
    %1316 = vmatpush.msra.mxu0 %v475
    %1317 = vmatpush.msra.mxu0 %v471
    %1318 = vmatpush.msra.mxu0 %v467
    %1319 = vmatpush.msra.mxu0 %v463
    %1320 = vmatpush.msra.mxu0 %v459
    %1321 = vmatpush.msra.mxu0 %v455
    %1322 = vmatpush.msra.mxu0 %v451
    %1323 = vmatpush.msra.mxu0 %v447
    %1324 = vmatmul.f32.gmra.mxu0 %v1255
    %v1325 = vpop.f32.mrf.mxu0
    %v1326 = vadd.f32 %v1262, %v1325
    %1327 = vdwg.mxu0
    %1328 = vmatpush.msra.mxu0 %v508
    %1329 = vmatpush.msra.mxu0 %v504
    %1330 = vmatpush.msra.mxu0 %v500
    %1331 = vmatpush.msra.mxu0 %v496
    %1332 = vmatpush.msra.mxu0 %v492
    %1333 = vmatpush.msra.mxu0 %v488
    %1334 = vmatpush.msra.mxu0 %v484
    %1335 = vmatpush.msra.mxu0 %v480
    %1336 = vmatpush.msra.mxu0 %v476
    %1337 = vmatpush.msra.mxu0 %v472
    %1338 = vmatpush.msra.mxu0 %v468
    %1339 = vmatpush.msra.mxu0 %v464
    %1340 = vmatpush.msra.mxu0 %v460
    %1341 = vmatpush.msra.mxu0 %v456
    %1342 = vmatpush.msra.mxu0 %v452
    %1343 = vmatpush.msra.mxu0 %v448
    %1344 = vmatmul.f32.gmra.mxu0 %v1255
    %v1345 = vpop.f32.mrf.mxu0
    %v1346 = vadd.f32 %v1263, %v1345
    %1347 = vdwg.mxu0
    %v1348 = vsub.f32 0.0, %v1286
    %v1349 = vmul.f32 %v1348, 1.442695
    %v1350 = vpow.pop %v1349
    %v1351 = vadd.f32 %v1350, 1.0
    %v1352 = vrcp.pop %v1351
    %v1353 = vmul.f32 %v1351, %v1352
    %v1354 = vsub.f32 1.0, %v1353
    %v1355 = vmul.f32 %v1352, %v1354
    %v1356 = vadd.f32 %v1352, %v1355
    %vm1357 = vweird.f32 %v1351
    %vm1358 = vweird.f32 %v1352
    %vm1359 = vmor %vm1357, %vm1358
    %v1360 = vsel %vm1359, %v1352, %v1356
    %v1361 = vand.u32 2147483647, %v1351
    %vm1362 = vcmp.eq.f32.partialorder %v1361, 8.507059e+37
    %v1363 = vand.u32 %v1351, 2147483648
    %v1364 = vor.u32 1.1754944e-38, %v1363
    %v1365 = vsel %vm1362, %v1364, %v1360
    %v1366 = vmul.f32 1.0, %v1365
    %v1367 = vsub.f32 0.0, %v1306
    %v1368 = vmul.f32 %v1367, 1.442695
    %v1369 = vpow.pop %v1368
    %v1370 = vadd.f32 %v1369, 1.0
    %v1371 = vrcp.pop %v1370
    %v1372 = vmul.f32 %v1370, %v1371
    %v1373 = vsub.f32 1.0, %v1372
    %v1374 = vmul.f32 %v1371, %v1373
    %v1375 = vadd.f32 %v1371, %v1374
    %vm1376 = vweird.f32 %v1370
    %vm1377 = vweird.f32 %v1371
    %vm1378 = vmor %vm1376, %vm1377
    %v1379 = vsel %vm1378, %v1371, %v1375
    %v1380 = vand.u32 2147483647, %v1370
    %vm1381 = vcmp.eq.f32.partialorder %v1380, 8.507059e+37
    %v1382 = vand.u32 %v1370, 2147483648
    %v1383 = vor.u32 1.1754944e-38, %v1382
    %v1384 = vsel %vm1381, %v1383, %v1379
    %v1385 = vmul.f32 1.0, %v1384
    %v1386 = vtanh.pop %v1326
    %v1387 = vsub.f32 0.0, %v1346
    %v1388 = vmul.f32 %v1387, 1.442695
    %v1389 = vpow.pop %v1388
    %v1390 = vadd.f32 %v1389, 1.0
    %v1391 = vrcp.pop %v1390
    %v1392 = vmul.f32 %v1390, %v1391
    %v1393 = vsub.f32 1.0, %v1392
    %v1394 = vmul.f32 %v1391, %v1393
    %v1395 = vadd.f32 %v1391, %v1394
    %vm1396 = vweird.f32 %v1390
    %vm1397 = vweird.f32 %v1391
    %vm1398 = vmor %vm1396, %vm1397
    %v1399 = vsel %vm1398, %v1391, %v1395
    %v1400 = vand.u32 2147483647, %v1390
    %vm1401 = vcmp.eq.f32.partialorder %v1400, 8.507059e+37
    %v1402 = vand.u32 %v1390, 2147483648
    %v1403 = vor.u32 1.1754944e-38, %v1402
    %v1404 = vsel %vm1401, %v1403, %v1399
    %v1405 = vmul.f32 1.0, %v1404
    %v1406 = vmul.f32 %v1385, %v1253
    %v1407 = vmul.f32 %v1366, %v1386
    %v1408 = vadd.f32 %v1406, %v1407
    %v1409 = vtanh.pop %v1408
    %v1410 = vmul.f32 %v1405, %v1409
    %v1415 = vrot.slane %v429, 4
    %v1416 = vrot.slane %v430, 4
    %v1417 = vrot.slane %v431, 4
    %v1418 = vrot.slane %v432, 4
    %1423 = vmatpush.msra.mxu0 %v505
    %1424 = vmatpush.msra.mxu0 %v501
    %1425 = vmatpush.msra.mxu0 %v497
    %1426 = vmatpush.msra.mxu0 %v493
    %1427 = vmatpush.msra.mxu0 %v489
    %1428 = vmatpush.msra.mxu0 %v485
    %1429 = vmatpush.msra.mxu0 %v481
    %1430 = vmatpush.msra.mxu0 %v477
    %1431 = vmatpush.msra.mxu0 %v473
    %1432 = vmatpush.msra.mxu0 %v469
    %1433 = vmatpush.msra.mxu0 %v465
    %1434 = vmatpush.msra.mxu0 %v461
    %1435 = vmatpush.msra.mxu0 %v457
    %1436 = vmatpush.msra.mxu0 %v453
    %1437 = vmatpush.msra.mxu0 %v449
    %1438 = vmatpush.msra.mxu0 %v445
    %1439 = vmatmul.f32.gmra.mxu0 %v1410
    %v1440 = vpop.f32.mrf.mxu0
    %v1441 = vadd.f32 %v1415, %v1440
    %1442 = vdwg.mxu0
    %1443 = vmatpush.msra.mxu0 %v506
    %1444 = vmatpush.msra.mxu0 %v502
    %1445 = vmatpush.msra.mxu0 %v498
    %1446 = vmatpush.msra.mxu0 %v494
    %1447 = vmatpush.msra.mxu0 %v490
    %1448 = vmatpush.msra.mxu0 %v486
    %1449 = vmatpush.msra.mxu0 %v482
    %1450 = vmatpush.msra.mxu0 %v478
    %1451 = vmatpush.msra.mxu0 %v474
    %1452 = vmatpush.msra.mxu0 %v470
    %1453 = vmatpush.msra.mxu0 %v466
    %1454 = vmatpush.msra.mxu0 %v462
    %1455 = vmatpush.msra.mxu0 %v458
    %1456 = vmatpush.msra.mxu0 %v454
    %1457 = vmatpush.msra.mxu0 %v450
    %1458 = vmatpush.msra.mxu0 %v446
    %1459 = vmatmul.f32.gmra.mxu0 %v1410
    %v1460 = vpop.f32.mrf.mxu0
    %v1461 = vadd.f32 %v1416, %v1460
    %1462 = vdwg.mxu0
    %1463 = vmatpush.msra.mxu0 %v507
    %1464 = vmatpush.msra.mxu0 %v503
    %1465 = vmatpush.msra.mxu0 %v499
    %1466 = vmatpush.msra.mxu0 %v495
    %1467 = vmatpush.msra.mxu0 %v491
    %1468 = vmatpush.msra.mxu0 %v487
    %1469 = vmatpush.msra.mxu0 %v483
    %1470 = vmatpush.msra.mxu0 %v479
    %1471 = vmatpush.msra.mxu0 %v475
    %1472 = vmatpush.msra.mxu0 %v471
    %1473 = vmatpush.msra.mxu0 %v467
    %1474 = vmatpush.msra.mxu0 %v463
    %1475 = vmatpush.msra.mxu0 %v459
    %1476 = vmatpush.msra.mxu0 %v455
    %1477 = vmatpush.msra.mxu0 %v451
    %1478 = vmatpush.msra.mxu0 %v447
    %1479 = vmatmul.f32.gmra.mxu0 %v1410
    %v1480 = vpop.f32.mrf.mxu0
    %v1481 = vadd.f32 %v1417, %v1480
    %1482 = vdwg.mxu0
    %1483 = vmatpush.msra.mxu0 %v508
    %1484 = vmatpush.msra.mxu0 %v504
    %1485 = vmatpush.msra.mxu0 %v500
    %1486 = vmatpush.msra.mxu0 %v496
    %1487 = vmatpush.msra.mxu0 %v492
    %1488 = vmatpush.msra.mxu0 %v488
    %1489 = vmatpush.msra.mxu0 %v484
    %1490 = vmatpush.msra.mxu0 %v480
    %1491 = vmatpush.msra.mxu0 %v476
    %1492 = vmatpush.msra.mxu0 %v472
    %1493 = vmatpush.msra.mxu0 %v468
    %1494 = vmatpush.msra.mxu0 %v464
    %1495 = vmatpush.msra.mxu0 %v460
    %1496 = vmatpush.msra.mxu0 %v456
    %1497 = vmatpush.msra.mxu0 %v452
    %1498 = vmatpush.msra.mxu0 %v448
    %1499 = vmatmul.f32.gmra.mxu0 %v1410
    %v1500 = vpop.f32.mrf.mxu0
    %v1501 = vadd.f32 %v1418, %v1500
    %1502 = vdwg.mxu0
    %v1503 = vsub.f32 0.0, %v1441
    %v1504 = vmul.f32 %v1503, 1.442695
    %v1505 = vpow.pop %v1504
    %v1506 = vadd.f32 %v1505, 1.0
    %v1507 = vrcp.pop %v1506
    %v1508 = vmul.f32 %v1506, %v1507
    %v1509 = vsub.f32 1.0, %v1508
    %v1510 = vmul.f32 %v1507, %v1509
    %v1511 = vadd.f32 %v1507, %v1510
    %vm1512 = vweird.f32 %v1506
    %vm1513 = vweird.f32 %v1507
    %vm1514 = vmor %vm1512, %vm1513
    %v1515 = vsel %vm1514, %v1507, %v1511
    %v1516 = vand.u32 2147483647, %v1506
    %vm1517 = vcmp.eq.f32.partialorder %v1516, 8.507059e+37
    %v1518 = vand.u32 %v1506, 2147483648
    %v1519 = vor.u32 1.1754944e-38, %v1518
    %v1520 = vsel %vm1517, %v1519, %v1515
    %v1521 = vmul.f32 1.0, %v1520
    %v1522 = vsub.f32 0.0, %v1461
    %v1523 = vmul.f32 %v1522, 1.442695
    %v1524 = vpow.pop %v1523
    %v1525 = vadd.f32 %v1524, 1.0
    %v1526 = vrcp.pop %v1525
    %v1527 = vmul.f32 %v1525, %v1526
    %v1528 = vsub.f32 1.0, %v1527
    %v1529 = vmul.f32 %v1526, %v1528
    %v1530 = vadd.f32 %v1526, %v1529
    %vm1531 = vweird.f32 %v1525
    %vm1532 = vweird.f32 %v1526
    %vm1533 = vmor %vm1531, %vm1532
    %v1534 = vsel %vm1533, %v1526, %v1530
    %v1535 = vand.u32 2147483647, %v1525
    %vm1536 = vcmp.eq.f32.partialorder %v1535, 8.507059e+37
    %v1537 = vand.u32 %v1525, 2147483648
    %v1538 = vor.u32 1.1754944e-38, %v1537
    %v1539 = vsel %vm1536, %v1538, %v1534
    %v1540 = vmul.f32 1.0, %v1539
    %v1541 = vtanh.pop %v1481
    %v1542 = vsub.f32 0.0, %v1501
    %v1543 = vmul.f32 %v1542, 1.442695
    %v1544 = vpow.pop %v1543
    %v1545 = vadd.f32 %v1544, 1.0
    %v1546 = vrcp.pop %v1545
    %v1547 = vmul.f32 %v1545, %v1546
    %v1548 = vsub.f32 1.0, %v1547
    %v1549 = vmul.f32 %v1546, %v1548
    %v1550 = vadd.f32 %v1546, %v1549
    %vm1551 = vweird.f32 %v1545
    %vm1552 = vweird.f32 %v1546
    %vm1553 = vmor %vm1551, %vm1552
    %v1554 = vsel %vm1553, %v1546, %v1550
    %v1555 = vand.u32 2147483647, %v1545
    %vm1556 = vcmp.eq.f32.partialorder %v1555, 8.507059e+37
    %v1557 = vand.u32 %v1545, 2147483648
    %v1558 = vor.u32 1.1754944e-38, %v1557
    %v1559 = vsel %vm1556, %v1558, %v1554
    %v1560 = vmul.f32 1.0, %v1559
    %v1561 = vmul.f32 %v1540, %v1408
    %v1562 = vmul.f32 %v1521, %v1541
    %v1563 = vadd.f32 %v1561, %v1562
    %v1564 = vtanh.pop %v1563
    %v1565 = vmul.f32 %v1560, %v1564
    %v1566 = vrot.slane %v441, 6
    %v1567 = vrot.slane %v442, 6
    %v1568 = vrot.slane %v443, 6
    %v1569 = vrot.slane %v444, 6
    %1574 = vmatpush.msra.mxu0 %v505
    %1575 = vmatpush.msra.mxu0 %v501
    %1576 = vmatpush.msra.mxu0 %v497
    %1577 = vmatpush.msra.mxu0 %v493
    %1578 = vmatpush.msra.mxu0 %v489
    %1579 = vmatpush.msra.mxu0 %v485
    %1580 = vmatpush.msra.mxu0 %v481
    %1581 = vmatpush.msra.mxu0 %v477
    %1582 = vmatpush.msra.mxu0 %v473
    %1583 = vmatpush.msra.mxu0 %v469
    %1584 = vmatpush.msra.mxu0 %v465
    %1585 = vmatpush.msra.mxu0 %v461
    %1586 = vmatpush.msra.mxu0 %v457
    %1587 = vmatpush.msra.mxu0 %v453
    %1588 = vmatpush.msra.mxu0 %v449
    %1589 = vmatpush.msra.mxu0 %v445
    %1590 = vmatmul.f32.gmra.mxu0 %v1565
    %v1591 = vpop.f32.mrf.mxu0
    %v1592 = vadd.f32 %v1566, %v1591
    %1593 = vdwg.mxu0
    %1594 = vmatpush.msra.mxu0 %v506
    %1595 = vmatpush.msra.mxu0 %v502
    %1596 = vmatpush.msra.mxu0 %v498
    %1597 = vmatpush.msra.mxu0 %v494
    %1598 = vmatpush.msra.mxu0 %v490
    %1599 = vmatpush.msra.mxu0 %v486
    %1600 = vmatpush.msra.mxu0 %v482
    %1601 = vmatpush.msra.mxu0 %v478
    %1602 = vmatpush.msra.mxu0 %v474
    %1603 = vmatpush.msra.mxu0 %v470
    %1604 = vmatpush.msra.mxu0 %v466
    %1605 = vmatpush.msra.mxu0 %v462
    %1606 = vmatpush.msra.mxu0 %v458
    %1607 = vmatpush.msra.mxu0 %v454
    %1608 = vmatpush.msra.mxu0 %v450
    %1609 = vmatpush.msra.mxu0 %v446
    %1610 = vmatmul.f32.gmra.mxu0 %v1565
    %v1611 = vpop.f32.mrf.mxu0
    %v1612 = vadd.f32 %v1567, %v1611
    %1613 = vdwg.mxu0
    %1614 = vmatpush.msra.mxu0 %v507
    %1615 = vmatpush.msra.mxu0 %v503
    %1616 = vmatpush.msra.mxu0 %v499
    %1617 = vmatpush.msra.mxu0 %v495
    %1618 = vmatpush.msra.mxu0 %v491
    %1619 = vmatpush.msra.mxu0 %v487
    %1620 = vmatpush.msra.mxu0 %v483
    %1621 = vmatpush.msra.mxu0 %v479
    %1622 = vmatpush.msra.mxu0 %v475
    %1623 = vmatpush.msra.mxu0 %v471
    %1624 = vmatpush.msra.mxu0 %v467
    %1625 = vmatpush.msra.mxu0 %v463
    %1626 = vmatpush.msra.mxu0 %v459
    %1627 = vmatpush.msra.mxu0 %v455
    %1628 = vmatpush.msra.mxu0 %v451
    %1629 = vmatpush.msra.mxu0 %v447
    %1630 = vmatmul.f32.gmra.mxu0 %v1565
    %v1631 = vpop.f32.mrf.mxu0
    %v1632 = vadd.f32 %v1568, %v1631
    %1633 = vdwg.mxu0
    %1634 = vmatpush.msra.mxu0 %v508
    %1635 = vmatpush.msra.mxu0 %v504
    %1636 = vmatpush.msra.mxu0 %v500
    %1637 = vmatpush.msra.mxu0 %v496
    %1638 = vmatpush.msra.mxu0 %v492
    %1639 = vmatpush.msra.mxu0 %v488
    %1640 = vmatpush.msra.mxu0 %v484
    %1641 = vmatpush.msra.mxu0 %v480
    %1642 = vmatpush.msra.mxu0 %v476
    %1643 = vmatpush.msra.mxu0 %v472
    %1644 = vmatpush.msra.mxu0 %v468
    %1645 = vmatpush.msra.mxu0 %v464
    %1646 = vmatpush.msra.mxu0 %v460
    %1647 = vmatpush.msra.mxu0 %v456
    %1648 = vmatpush.msra.mxu0 %v452
    %1649 = vmatpush.msra.mxu0 %v448
    %1650 = vmatmul.f32.gmra.mxu0 %v1565
    %v1651 = vpop.f32.mrf.mxu0
    %v1652 = vadd.f32 %v1569, %v1651
    %1653 = vdwg.mxu0
    %v1654 = vsub.f32 0.0, %v1592
    %v1655 = vmul.f32 %v1654, 1.442695
    %v1656 = vpow.pop %v1655
    %v1657 = vadd.f32 %v1656, 1.0
    %v1658 = vrcp.pop %v1657
    %v1659 = vmul.f32 %v1657, %v1658
    %v1660 = vsub.f32 1.0, %v1659
    %v1661 = vmul.f32 %v1658, %v1660
    %v1662 = vadd.f32 %v1658, %v1661
    %vm1663 = vweird.f32 %v1657
    %vm1664 = vweird.f32 %v1658
    %vm1665 = vmor %vm1663, %vm1664
    %v1666 = vsel %vm1665, %v1658, %v1662
    %v1667 = vand.u32 2147483647, %v1657
    %vm1668 = vcmp.eq.f32.partialorder %v1667, 8.507059e+37
    %v1669 = vand.u32 %v1657, 2147483648
    %v1670 = vor.u32 1.1754944e-38, %v1669
    %v1671 = vsel %vm1668, %v1670, %v1666
    %v1672 = vmul.f32 1.0, %v1671
    %v1673 = vsub.f32 0.0, %v1612
    %v1674 = vmul.f32 %v1673, 1.442695
    %v1675 = vpow.pop %v1674
    %v1676 = vadd.f32 %v1675, 1.0
    %v1677 = vrcp.pop %v1676
    %v1678 = vmul.f32 %v1676, %v1677
    %v1679 = vsub.f32 1.0, %v1678
    %v1680 = vmul.f32 %v1677, %v1679
    %v1681 = vadd.f32 %v1677, %v1680
    %vm1682 = vweird.f32 %v1676
    %vm1683 = vweird.f32 %v1677
    %vm1684 = vmor %vm1682, %vm1683
    %v1685 = vsel %vm1684, %v1677, %v1681
    %v1686 = vand.u32 2147483647, %v1676
    %vm1687 = vcmp.eq.f32.partialorder %v1686, 8.507059e+37
    %v1688 = vand.u32 %v1676, 2147483648
    %v1689 = vor.u32 1.1754944e-38, %v1688
    %v1690 = vsel %vm1687, %v1689, %v1685
    %v1691 = vmul.f32 1.0, %v1690
    %v1692 = vtanh.pop %v1632
    %v1693 = vsub.f32 0.0, %v1652
    %v1694 = vmul.f32 %v1693, 1.442695
    %v1695 = vpow.pop %v1694
    %v1696 = vadd.f32 %v1695, 1.0
    %v1697 = vrcp.pop %v1696
    %v1698 = vmul.f32 %v1696, %v1697
    %v1699 = vsub.f32 1.0, %v1698
    %v1700 = vmul.f32 %v1697, %v1699
    %v1701 = vadd.f32 %v1697, %v1700
    %vm1702 = vweird.f32 %v1696
    %vm1703 = vweird.f32 %v1697
    %vm1704 = vmor %vm1702, %vm1703
    %v1705 = vsel %vm1704, %v1697, %v1701
    %v1706 = vand.u32 2147483647, %v1696
    %vm1707 = vcmp.eq.f32.partialorder %v1706, 8.507059e+37
    %v1708 = vand.u32 %v1696, 2147483648
    %v1709 = vor.u32 1.1754944e-38, %v1708
    %v1710 = vsel %vm1707, %v1709, %v1705
    %v1711 = vmul.f32 1.0, %v1710
    %v1712 = vmul.f32 %v1691, %v1563
    %v1713 = vmul.f32 %v1672, %v1692
    %v1714 = vadd.f32 %v1712, %v1713
    %v1715 = vtanh.pop %v1714
    %v1716 = vmul.f32 %v1711, %v1715
    %v1718 = vrot.slane %v806, 6
    %v1721 = vrot.slane %v961, 4
    %v1724 = vrot.slane %v1112, 2
    %v1727 = vrot.slane %v1410, 6
    %v1730 = vrot.slane %v1565, 4
    %v1733 = vrot.slane %v1716, 2
    %vm1735 = vcmask 1041408
    %v1736 = vsel %vm1735, %v651, %v1718
    %vm1737 = vcmask 1043456
    %v1738 = vsel %vm1737, %v1736, %v1721
    %vm1739 = vcmask 1045504
    %v1740 = vsel %vm1739, %v1738, %v1724
    %v1741 = vsel %vm1735, %v1255, %v1727
    %v1742 = vsel %vm1737, %v1741, %v1730
    %v1743 = vsel %vm1739, %v1742, %v1733
    %v1744 = vld [vmem:[#allocation8] sm:$0xff]
    %v1745 = vld [vmem:[#allocation8 + $0x8] sm:$0xff]
    %v1746 = vld [vmem:[#allocation8 + $0x10] sm:$0xff]
    %v1747 = vld [vmem:[#allocation8 + $0x18] sm:$0xff]
    %v1748 = vld [vmem:[#allocation8 + $0x20] sm:$0xff]
    %v1749 = vld [vmem:[#allocation8 + $0x28] sm:$0xff]
    %v1750 = vld [vmem:[#allocation8 + $0x30] sm:$0xff]
    %v1751 = vld [vmem:[#allocation8 + $0x38] sm:$0xff]
    %v1752 = vld [vmem:[#allocation8 + $0x40] sm:$0xff]
    %v1753 = vld [vmem:[#allocation8 + $0x48] sm:$0xff]
    %v1754 = vld [vmem:[#allocation8 + $0x50] sm:$0xff]
    %v1755 = vld [vmem:[#allocation8 + $0x58] sm:$0xff]
    %v1756 = vld [vmem:[#allocation8 + $0x60] sm:$0xff]
    %v1757 = vld [vmem:[#allocation8 + $0x68] sm:$0xff]
    %v1758 = vld [vmem:[#allocation8 + $0x70] sm:$0xff]
    %v1759 = vld [vmem:[#allocation8 + $0x78] sm:$0xff]
    %v1760 = vld [vmem:[#allocation8 + $0x80] sm:$0xff]
    %v1761 = vld [vmem:[#allocation8 + $0x88] sm:$0xff]
    %v1762 = vld [vmem:[#allocation8 + $0x90] sm:$0xff]
    %v1763 = vld [vmem:[#allocation8 + $0x98] sm:$0xff]
    %v1764 = vld [vmem:[#allocation8 + $0xa0] sm:$0xff]
    %v1765 = vld [vmem:[#allocation8 + $0xa8] sm:$0xff]
    %v1766 = vld [vmem:[#allocation8 + $0xb0] sm:$0xff]
    %v1767 = vld [vmem:[#allocation8 + $0xb8] sm:$0xff]
    %v1768 = vld [vmem:[#allocation8 + $0xc0] sm:$0xff]
    %v1769 = vld [vmem:[#allocation8 + $0xc8] sm:$0xff]
    %v1770 = vld [vmem:[#allocation8 + $0xd0] sm:$0xff]
    %v1771 = vld [vmem:[#allocation8 + $0xd8] sm:$0xff]
    %v1772 = vld [vmem:[#allocation8 + $0xe0] sm:$0xff]
    %v1773 = vld [vmem:[#allocation8 + $0xe8] sm:$0xff]
    %v1774 = vld [vmem:[#allocation8 + $0xf0] sm:$0xff]
    %v1775 = vld [vmem:[#allocation8 + $0xf8] sm:$0xff]
    %v1776 = vld [vmem:[#allocation8 + $0x100] sm:$0xff]
    %v1777 = vld [vmem:[#allocation8 + $0x108] sm:$0xff]
    %v1778 = vld [vmem:[#allocation8 + $0x110] sm:$0xff]
    %v1779 = vld [vmem:[#allocation8 + $0x118] sm:$0xff]
    %v1780 = vld [vmem:[#allocation8 + $0x120] sm:$0xff]
    %v1781 = vld [vmem:[#allocation8 + $0x128] sm:$0xff]
    %v1782 = vld [vmem:[#allocation8 + $0x130] sm:$0xff]
    %v1783 = vld [vmem:[#allocation8 + $0x138] sm:$0xff]
    %v1784 = vld [vmem:[#allocation8 + $0x140] sm:$0xff]
    %v1785 = vld [vmem:[#allocation8 + $0x148] sm:$0xff]
    %v1786 = vld [vmem:[#allocation8 + $0x150] sm:$0xff]
    %v1787 = vld [vmem:[#allocation8 + $0x158] sm:$0xff]
    %v1788 = vld [vmem:[#allocation8 + $0x160] sm:$0xff]
    %v1789 = vld [vmem:[#allocation8 + $0x168] sm:$0xff]
    %v1790 = vld [vmem:[#allocation8 + $0x170] sm:$0xff]
    %v1791 = vld [vmem:[#allocation8 + $0x178] sm:$0xff]
    %v1792 = vld [vmem:[#allocation8 + $0x180] sm:$0xff]
    %v1793 = vld [vmem:[#allocation8 + $0x188] sm:$0xff]
    %v1794 = vld [vmem:[#allocation8 + $0x190] sm:$0xff]
    %v1795 = vld [vmem:[#allocation8 + $0x198] sm:$0xff]
    %v1796 = vld [vmem:[#allocation8 + $0x1a0] sm:$0xff]
    %v1797 = vld [vmem:[#allocation8 + $0x1a8] sm:$0xff]
    %v1798 = vld [vmem:[#allocation8 + $0x1b0] sm:$0xff]
    %v1799 = vld [vmem:[#allocation8 + $0x1b8] sm:$0xff]
    %v1800 = vld [vmem:[#allocation8 + $0x1c0] sm:$0xff]
    %v1801 = vld [vmem:[#allocation8 + $0x1c8] sm:$0xff]
    %v1802 = vld [vmem:[#allocation8 + $0x1d0] sm:$0xff]
    %v1803 = vld [vmem:[#allocation8 + $0x1d8] sm:$0xff]
    %v1804 = vld [vmem:[#allocation8 + $0x1e0] sm:$0xff]
    %v1805 = vld [vmem:[#allocation8 + $0x1e8] sm:$0xff]
    %v1806 = vld [vmem:[#allocation8 + $0x1f0] sm:$0xff]
    %v1807 = vld [vmem:[#allocation8 + $0x1f8] sm:$0xff]
    %v1808 = vld [vmem:[%s7] sm:$0xf]
    %v1810 = vperm.slane %v1808, 0
    %v1811 = vperm.slane %v1808, 1
    %v1812 = vperm.slane %v1808, 2
    %v1813 = vperm.slane %v1808, 3
    %1818 = vmatpush.msra.mxu0 %v1804
    %1819 = vmatpush.msra.mxu0 %v1800
    %1820 = vmatpush.msra.mxu0 %v1796
    %1821 = vmatpush.msra.mxu0 %v1792
    %1822 = vmatpush.msra.mxu0 %v1788
    %1823 = vmatpush.msra.mxu0 %v1784
    %1824 = vmatpush.msra.mxu0 %v1780
    %1825 = vmatpush.msra.mxu0 %v1776
    %1826 = vmatpush.msra.mxu0 %v1772
    %1827 = vmatpush.msra.mxu0 %v1768
    %1828 = vmatpush.msra.mxu0 %v1764
    %1829 = vmatpush.msra.mxu0 %v1760
    %1830 = vmatpush.msra.mxu0 %v1756
    %1831 = vmatpush.msra.mxu0 %v1752
    %1832 = vmatpush.msra.mxu0 %v1748
    %1833 = vmatpush.msra.mxu0 %v1744
    %1834 = vmatmul.f32.gmra.mxu0 %v1740
    %v1835 = vpop.f32.mrf.mxu0
    %v1836 = vadd.f32 %v1810, %v1835
    %1837 = vmatmul.f32.gmra.mxu0 %v1743
    %v1838 = vpop.f32.mrf.mxu0
    %v1839 = vadd.f32 %v1810, %v1838
    %1840 = vdwg.mxu0
    %1841 = vmatpush.msra.mxu0 %v1805
    %1842 = vmatpush.msra.mxu0 %v1801
    %1843 = vmatpush.msra.mxu0 %v1797
    %1844 = vmatpush.msra.mxu0 %v1793
    %1845 = vmatpush.msra.mxu0 %v1789
    %1846 = vmatpush.msra.mxu0 %v1785
    %1847 = vmatpush.msra.mxu0 %v1781
    %1848 = vmatpush.msra.mxu0 %v1777
    %1849 = vmatpush.msra.mxu0 %v1773
    %1850 = vmatpush.msra.mxu0 %v1769
    %1851 = vmatpush.msra.mxu0 %v1765
    %1852 = vmatpush.msra.mxu0 %v1761
    %1853 = vmatpush.msra.mxu0 %v1757
    %1854 = vmatpush.msra.mxu0 %v1753
    %1855 = vmatpush.msra.mxu0 %v1749
    %1856 = vmatpush.msra.mxu0 %v1745
    %1857 = vmatmul.f32.gmra.mxu0 %v1740
    %v1858 = vpop.f32.mrf.mxu0
    %v1859 = vadd.f32 %v1811, %v1858
    %1860 = vmatmul.f32.gmra.mxu0 %v1743
    %v1861 = vpop.f32.mrf.mxu0
    %v1862 = vadd.f32 %v1811, %v1861
    %1863 = vdwg.mxu0
    %1864 = vmatpush.msra.mxu0 %v1806
    %1865 = vmatpush.msra.mxu0 %v1802
    %1866 = vmatpush.msra.mxu0 %v1798
    %1867 = vmatpush.msra.mxu0 %v1794
    %1868 = vmatpush.msra.mxu0 %v1790
    %1869 = vmatpush.msra.mxu0 %v1786
    %1870 = vmatpush.msra.mxu0 %v1782
    %1871 = vmatpush.msra.mxu0 %v1778
    %1872 = vmatpush.msra.mxu0 %v1774
    %1873 = vmatpush.msra.mxu0 %v1770
    %1874 = vmatpush.msra.mxu0 %v1766
    %1875 = vmatpush.msra.mxu0 %v1762
    %1876 = vmatpush.msra.mxu0 %v1758
    %1877 = vmatpush.msra.mxu0 %v1754
    %1878 = vmatpush.msra.mxu0 %v1750
    %1879 = vmatpush.msra.mxu0 %v1746
    %1880 = vmatmul.f32.gmra.mxu0 %v1740
    %v1881 = vpop.f32.mrf.mxu0
    %v1882 = vadd.f32 %v1812, %v1881
    %1883 = vmatmul.f32.gmra.mxu0 %v1743
    %v1884 = vpop.f32.mrf.mxu0
    %v1885 = vadd.f32 %v1812, %v1884
    %1886 = vdwg.mxu0
    %1887 = vmatpush.msra.mxu0 %v1807
    %1888 = vmatpush.msra.mxu0 %v1803
    %1889 = vmatpush.msra.mxu0 %v1799
    %1890 = vmatpush.msra.mxu0 %v1795
    %1891 = vmatpush.msra.mxu0 %v1791
    %1892 = vmatpush.msra.mxu0 %v1787
    %1893 = vmatpush.msra.mxu0 %v1783
    %1894 = vmatpush.msra.mxu0 %v1779
    %1895 = vmatpush.msra.mxu0 %v1775
    %1896 = vmatpush.msra.mxu0 %v1771
    %1897 = vmatpush.msra.mxu0 %v1767
    %1898 = vmatpush.msra.mxu0 %v1763
    %1899 = vmatpush.msra.mxu0 %v1759
    %1900 = vmatpush.msra.mxu0 %v1755
    %1901 = vmatpush.msra.mxu0 %v1751
    %1902 = vmatpush.msra.mxu0 %v1747
    %1903 = vmatmul.f32.gmra.mxu0 %v1740
    %v1904 = vpop.f32.mrf.mxu0
    %v1905 = vadd.f32 %v1813, %v1904
    %1906 = vmatmul.f32.gmra.mxu0 %v1743
    %v1907 = vpop.f32.mrf.mxu0
    %v1908 = vadd.f32 %v1813, %v1907
    %1909 = vdwg.mxu0
    %v1910 = vld [vmem:[#allocation10] sm:$0xff]
    %v1911 = vld [vmem:[#allocation10 + $0x8] sm:$0xff]
    %v1912 = vld [vmem:[#allocation10 + $0x10] sm:$0xff]
    %v1913 = vld [vmem:[#allocation10 + $0x18] sm:$0xff]
    %v1914 = vld [vmem:[#allocation10 + $0x20] sm:$0xff]
    %v1915 = vld [vmem:[#allocation10 + $0x28] sm:$0xff]
    %v1916 = vld [vmem:[#allocation10 + $0x30] sm:$0xff]
    %v1917 = vld [vmem:[#allocation10 + $0x38] sm:$0xff]
    %v1918 = vld [vmem:[#allocation10 + $0x40] sm:$0xff]
    %v1919 = vld [vmem:[#allocation10 + $0x48] sm:$0xff]
    %v1920 = vld [vmem:[#allocation10 + $0x50] sm:$0xff]
    %v1921 = vld [vmem:[#allocation10 + $0x58] sm:$0xff]
    %v1922 = vld [vmem:[#allocation10 + $0x60] sm:$0xff]
    %v1923 = vld [vmem:[#allocation10 + $0x68] sm:$0xff]
    %v1924 = vld [vmem:[#allocation10 + $0x70] sm:$0xff]
    %v1925 = vld [vmem:[#allocation10 + $0x78] sm:$0xff]
    %v1926 = vld [vmem:[#allocation10 + $0x80] sm:$0xff]
    %v1927 = vld [vmem:[#allocation10 + $0x88] sm:$0xff]
    %v1928 = vld [vmem:[#allocation10 + $0x90] sm:$0xff]
    %v1929 = vld [vmem:[#allocation10 + $0x98] sm:$0xff]
    %v1930 = vld [vmem:[#allocation10 + $0xa0] sm:$0xff]
    %v1931 = vld [vmem:[#allocation10 + $0xa8] sm:$0xff]
    %v1932 = vld [vmem:[#allocation10 + $0xb0] sm:$0xff]
    %v1933 = vld [vmem:[#allocation10 + $0xb8] sm:$0xff]
    %v1934 = vld [vmem:[#allocation10 + $0xc0] sm:$0xff]
    %v1935 = vld [vmem:[#allocation10 + $0xc8] sm:$0xff]
    %v1936 = vld [vmem:[#allocation10 + $0xd0] sm:$0xff]
    %v1937 = vld [vmem:[#allocation10 + $0xd8] sm:$0xff]
    %v1938 = vld [vmem:[#allocation10 + $0xe0] sm:$0xff]
    %v1939 = vld [vmem:[#allocation10 + $0xe8] sm:$0xff]
    %v1940 = vld [vmem:[#allocation10 + $0xf0] sm:$0xff]
    %v1941 = vld [vmem:[#allocation10 + $0xf8] sm:$0xff]
    %v1942 = vld [vmem:[#allocation10 + $0x100] sm:$0xff]
    %v1943 = vld [vmem:[#allocation10 + $0x108] sm:$0xff]
    %v1944 = vld [vmem:[#allocation10 + $0x110] sm:$0xff]
    %v1945 = vld [vmem:[#allocation10 + $0x118] sm:$0xff]
    %v1946 = vld [vmem:[#allocation10 + $0x120] sm:$0xff]
    %v1947 = vld [vmem:[#allocation10 + $0x128] sm:$0xff]
    %v1948 = vld [vmem:[#allocation10 + $0x130] sm:$0xff]
    %v1949 = vld [vmem:[#allocation10 + $0x138] sm:$0xff]
    %v1950 = vld [vmem:[#allocation10 + $0x140] sm:$0xff]
    %v1951 = vld [vmem:[#allocation10 + $0x148] sm:$0xff]
    %v1952 = vld [vmem:[#allocation10 + $0x150] sm:$0xff]
    %v1953 = vld [vmem:[#allocation10 + $0x158] sm:$0xff]
    %v1954 = vld [vmem:[#allocation10 + $0x160] sm:$0xff]
    %v1955 = vld [vmem:[#allocation10 + $0x168] sm:$0xff]
    %v1956 = vld [vmem:[#allocation10 + $0x170] sm:$0xff]
    %v1957 = vld [vmem:[#allocation10 + $0x178] sm:$0xff]
    %v1958 = vld [vmem:[#allocation10 + $0x180] sm:$0xff]
    %v1959 = vld [vmem:[#allocation10 + $0x188] sm:$0xff]
    %v1960 = vld [vmem:[#allocation10 + $0x190] sm:$0xff]
    %v1961 = vld [vmem:[#allocation10 + $0x198] sm:$0xff]
    %v1962 = vld [vmem:[#allocation10 + $0x1a0] sm:$0xff]
    %v1963 = vld [vmem:[#allocation10 + $0x1a8] sm:$0xff]
    %v1964 = vld [vmem:[#allocation10 + $0x1b0] sm:$0xff]
    %v1965 = vld [vmem:[#allocation10 + $0x1b8] sm:$0xff]
    %v1966 = vld [vmem:[#allocation10 + $0x1c0] sm:$0xff]
    %v1967 = vld [vmem:[#allocation10 + $0x1c8] sm:$0xff]
    %v1968 = vld [vmem:[#allocation10 + $0x1d0] sm:$0xff]
    %v1969 = vld [vmem:[#allocation10 + $0x1d8] sm:$0xff]
    %v1970 = vld [vmem:[#allocation10 + $0x1e0] sm:$0xff]
    %v1971 = vld [vmem:[#allocation10 + $0x1e8] sm:$0xff]
    %v1972 = vld [vmem:[#allocation10 + $0x1f0] sm:$0xff]
    %v1973 = vld [vmem:[#allocation10 + $0x1f8] sm:$0xff]
    %1974 = vmatpush.msra.mxu0 %v1970
    %1975 = vmatpush.msra.mxu0 %v1966
    %1976 = vmatpush.msra.mxu0 %v1962
    %1977 = vmatpush.msra.mxu0 %v1958
    %1978 = vmatpush.msra.mxu0 %v1954
    %1979 = vmatpush.msra.mxu0 %v1950
    %1980 = vmatpush.msra.mxu0 %v1946
    %1981 = vmatpush.msra.mxu0 %v1942
    %1982 = vmatpush.msra.mxu0 %v1938
    %1983 = vmatpush.msra.mxu0 %v1934
    %1984 = vmatpush.msra.mxu0 %v1930
    %1985 = vmatpush.msra.mxu0 %v1926
    %1986 = vmatpush.msra.mxu0 %v1922
    %1987 = vmatpush.msra.mxu0 %v1918
    %1988 = vmatpush.msra.mxu0 %v1914
    %1989 = vmatpush.msra.mxu0 %v1910
    %1990 = vmatmul.f32.gmra.mxu0 %v1740
    %v1991 = vpop.f32.mrf.mxu0
    %v1992 = vadd.f32 0.0, %v1991
    %1993 = vmatmul.f32.gmra.mxu0 %v1743
    %v1994 = vpop.f32.mrf.mxu0
    %v1995 = vadd.f32 0.0, %v1994
    %1996 = vdwg.mxu0
    %1997 = vmatpush.msra.mxu0 %v1971
    %1998 = vmatpush.msra.mxu0 %v1967
    %1999 = vmatpush.msra.mxu0 %v1963
    %2000 = vmatpush.msra.mxu0 %v1959
    %2001 = vmatpush.msra.mxu0 %v1955
    %2002 = vmatpush.msra.mxu0 %v1951
    %2003 = vmatpush.msra.mxu0 %v1947
    %2004 = vmatpush.msra.mxu0 %v1943
    %2005 = vmatpush.msra.mxu0 %v1939
    %2006 = vmatpush.msra.mxu0 %v1935
    %2007 = vmatpush.msra.mxu0 %v1931
    %2008 = vmatpush.msra.mxu0 %v1927
    %2009 = vmatpush.msra.mxu0 %v1923
    %2010 = vmatpush.msra.mxu0 %v1919
    %2011 = vmatpush.msra.mxu0 %v1915
    %2012 = vmatpush.msra.mxu0 %v1911
    %2013 = vmatmul.f32.gmra.mxu0 %v1740
    %v2014 = vpop.f32.mrf.mxu0
    %v2015 = vadd.f32 0.0, %v2014
    %2016 = vmatmul.f32.gmra.mxu0 %v1743
    %v2017 = vpop.f32.mrf.mxu0
    %v2018 = vadd.f32 0.0, %v2017
    %2019 = vdwg.mxu0
    %2020 = vmatpush.msra.mxu0 %v1972
    %2021 = vmatpush.msra.mxu0 %v1968
    %2022 = vmatpush.msra.mxu0 %v1964
    %2023 = vmatpush.msra.mxu0 %v1960
    %2024 = vmatpush.msra.mxu0 %v1956
    %2025 = vmatpush.msra.mxu0 %v1952
    %2026 = vmatpush.msra.mxu0 %v1948
    %2027 = vmatpush.msra.mxu0 %v1944
    %2028 = vmatpush.msra.mxu0 %v1940
    %2029 = vmatpush.msra.mxu0 %v1936
    %2030 = vmatpush.msra.mxu0 %v1932
    %2031 = vmatpush.msra.mxu0 %v1928
    %2032 = vmatpush.msra.mxu0 %v1924
    %2033 = vmatpush.msra.mxu0 %v1920
    %2034 = vmatpush.msra.mxu0 %v1916
    %2035 = vmatpush.msra.mxu0 %v1912
    %2036 = vmatmul.f32.gmra.mxu0 %v1740
    %v2037 = vpop.f32.mrf.mxu0
    %v2038 = vadd.f32 0.0, %v2037
    %2039 = vmatmul.f32.gmra.mxu0 %v1743
    %v2040 = vpop.f32.mrf.mxu0
    %v2041 = vadd.f32 0.0, %v2040
    %2042 = vdwg.mxu0
    %2043 = vmatpush.msra.mxu0 %v1973
    %2044 = vmatpush.msra.mxu0 %v1969
    %2045 = vmatpush.msra.mxu0 %v1965
    %2046 = vmatpush.msra.mxu0 %v1961
    %2047 = vmatpush.msra.mxu0 %v1957
    %2048 = vmatpush.msra.mxu0 %v1953
    %2049 = vmatpush.msra.mxu0 %v1949
    %2050 = vmatpush.msra.mxu0 %v1945
    %2051 = vmatpush.msra.mxu0 %v1941
    %2052 = vmatpush.msra.mxu0 %v1937
    %2053 = vmatpush.msra.mxu0 %v1933
    %2054 = vmatpush.msra.mxu0 %v1929
    %2055 = vmatpush.msra.mxu0 %v1925
    %2056 = vmatpush.msra.mxu0 %v1921
    %2057 = vmatpush.msra.mxu0 %v1917
    %2058 = vmatpush.msra.mxu0 %v1913
    %2059 = vmatmul.f32.gmra.mxu0 %v1740
    %v2060 = vpop.f32.mrf.mxu0
    %v2061 = vadd.f32 0.0, %v2060
    %2062 = vmatmul.f32.gmra.mxu0 %v1743
    %v2063 = vpop.f32.mrf.mxu0
    %v2064 = vadd.f32 0.0, %v2063
    %2065 = vdwg.mxu0
    %v2070 = vrot.slane %v1995, 6
    %v2071 = vrot.slane %v2018, 6
    %v2072 = vrot.slane %v2041, 6
    %v2073 = vrot.slane %v2064, 6
    %v2078 = vadd.f32 %v1836, %v2070
    %v2079 = vadd.f32 %v1859, %v2071
    %v2080 = vadd.f32 %v1882, %v2072
    %v2081 = vadd.f32 %v1905, %v2073
    %v2082 = vrot.slane %v1995, 2
    %v2083 = vrot.slane %v2018, 2
    %v2084 = vrot.slane %v2041, 2
    %v2085 = vrot.slane %v2064, 2
    %v2090 = vadd.f32 %v1836, %v2082
    %v2091 = vadd.f32 %v1859, %v2083
    %v2092 = vadd.f32 %v1882, %v2084
    %v2093 = vadd.f32 %v1905, %v2085
    %v2098 = vrot.slane %v1992, 6
    %v2099 = vrot.slane %v2015, 6
    %v2100 = vrot.slane %v2038, 6
    %v2101 = vrot.slane %v2061, 6
    %v2106 = vadd.f32 %v1839, %v2098
    %v2107 = vadd.f32 %v1862, %v2099
    %v2108 = vadd.f32 %v1885, %v2100
    %v2109 = vadd.f32 %v1908, %v2101
    %v2110 = vrot.slane %v1992, 2
    %v2111 = vrot.slane %v2015, 2
    %v2112 = vrot.slane %v2038, 2
    %v2113 = vrot.slane %v2061, 2
    %v2118 = vadd.f32 %v1839, %v2110
    %v2119 = vadd.f32 %v1862, %v2111
    %v2120 = vadd.f32 %v1885, %v2112
    %v2121 = vadd.f32 %v1908, %v2113
    %v2122 = vld [vmem:[#allocation11] sm:$0xff]
    %v2123 = vld [vmem:[#allocation11 + $0x8] sm:$0xff]
    %v2124 = vld [vmem:[#allocation11 + $0x10] sm:$0xff]
    %v2125 = vld [vmem:[#allocation11 + $0x18] sm:$0xff]
    %v2126 = vld [vmem:[#allocation11 + $0x20] sm:$0xff]
    %v2127 = vld [vmem:[#allocation11 + $0x28] sm:$0xff]
    %v2128 = vld [vmem:[#allocation11 + $0x30] sm:$0xff]
    %v2129 = vld [vmem:[#allocation11 + $0x38] sm:$0xff]
    %v2130 = vld [vmem:[#allocation11 + $0x40] sm:$0xff]
    %v2131 = vld [vmem:[#allocation11 + $0x48] sm:$0xff]
    %v2132 = vld [vmem:[#allocation11 + $0x50] sm:$0xff]
    %v2133 = vld [vmem:[#allocation11 + $0x58] sm:$0xff]
    %v2134 = vld [vmem:[#allocation11 + $0x60] sm:$0xff]
    %v2135 = vld [vmem:[#allocation11 + $0x68] sm:$0xff]
    %v2136 = vld [vmem:[#allocation11 + $0x70] sm:$0xff]
    %v2137 = vld [vmem:[#allocation11 + $0x78] sm:$0xff]
    %v2138 = vld [vmem:[#allocation11 + $0x80] sm:$0xff]
    %v2139 = vld [vmem:[#allocation11 + $0x88] sm:$0xff]
    %v2140 = vld [vmem:[#allocation11 + $0x90] sm:$0xff]
    %v2141 = vld [vmem:[#allocation11 + $0x98] sm:$0xff]
    %v2142 = vld [vmem:[#allocation11 + $0xa0] sm:$0xff]
    %v2143 = vld [vmem:[#allocation11 + $0xa8] sm:$0xff]
    %v2144 = vld [vmem:[#allocation11 + $0xb0] sm:$0xff]
    %v2145 = vld [vmem:[#allocation11 + $0xb8] sm:$0xff]
    %v2146 = vld [vmem:[#allocation11 + $0xc0] sm:$0xff]
    %v2147 = vld [vmem:[#allocation11 + $0xc8] sm:$0xff]
    %v2148 = vld [vmem:[#allocation11 + $0xd0] sm:$0xff]
    %v2149 = vld [vmem:[#allocation11 + $0xd8] sm:$0xff]
    %v2150 = vld [vmem:[#allocation11 + $0xe0] sm:$0xff]
    %v2151 = vld [vmem:[#allocation11 + $0xe8] sm:$0xff]
    %v2152 = vld [vmem:[#allocation11 + $0xf0] sm:$0xff]
    %v2153 = vld [vmem:[#allocation11 + $0xf8] sm:$0xff]
    %v2154 = vld [vmem:[#allocation11 + $0x100] sm:$0xff]
    %v2155 = vld [vmem:[#allocation11 + $0x108] sm:$0xff]
    %v2156 = vld [vmem:[#allocation11 + $0x110] sm:$0xff]
    %v2157 = vld [vmem:[#allocation11 + $0x118] sm:$0xff]
    %v2158 = vld [vmem:[#allocation11 + $0x120] sm:$0xff]
    %v2159 = vld [vmem:[#allocation11 + $0x128] sm:$0xff]
    %v2160 = vld [vmem:[#allocation11 + $0x130] sm:$0xff]
    %v2161 = vld [vmem:[#allocation11 + $0x138] sm:$0xff]
    %v2162 = vld [vmem:[#allocation11 + $0x140] sm:$0xff]
    %v2163 = vld [vmem:[#allocation11 + $0x148] sm:$0xff]
    %v2164 = vld [vmem:[#allocation11 + $0x150] sm:$0xff]
    %v2165 = vld [vmem:[#allocation11 + $0x158] sm:$0xff]
    %v2166 = vld [vmem:[#allocation11 + $0x160] sm:$0xff]
    %v2167 = vld [vmem:[#allocation11 + $0x168] sm:$0xff]
    %v2168 = vld [vmem:[#allocation11 + $0x170] sm:$0xff]
    %v2169 = vld [vmem:[#allocation11 + $0x178] sm:$0xff]
    %v2170 = vld [vmem:[#allocation11 + $0x180] sm:$0xff]
    %v2171 = vld [vmem:[#allocation11 + $0x188] sm:$0xff]
    %v2172 = vld [vmem:[#allocation11 + $0x190] sm:$0xff]
    %v2173 = vld [vmem:[#allocation11 + $0x198] sm:$0xff]
    %v2174 = vld [vmem:[#allocation11 + $0x1a0] sm:$0xff]
    %v2175 = vld [vmem:[#allocation11 + $0x1a8] sm:$0xff]
    %v2176 = vld [vmem:[#allocation11 + $0x1b0] sm:$0xff]
    %v2177 = vld [vmem:[#allocation11 + $0x1b8] sm:$0xff]
    %v2178 = vld [vmem:[#allocation11 + $0x1c0] sm:$0xff]
    %v2179 = vld [vmem:[#allocation11 + $0x1c8] sm:$0xff]
    %v2180 = vld [vmem:[#allocation11 + $0x1d0] sm:$0xff]
    %v2181 = vld [vmem:[#allocation11 + $0x1d8] sm:$0xff]
    %v2182 = vld [vmem:[#allocation11 + $0x1e0] sm:$0xff]
    %v2183 = vld [vmem:[#allocation11 + $0x1e8] sm:$0xff]
    %v2184 = vld [vmem:[#allocation11 + $0x1f0] sm:$0xff]
    %v2185 = vld [vmem:[#allocation11 + $0x1f8] sm:$0xff]
    %2186 = vmatpush.msra.mxu0 %v2182
    %2187 = vmatpush.msra.mxu0 %v2178
    %2188 = vmatpush.msra.mxu0 %v2174
    %2189 = vmatpush.msra.mxu0 %v2170
    %2190 = vmatpush.msra.mxu0 %v2166
    %2191 = vmatpush.msra.mxu0 %v2162
    %2192 = vmatpush.msra.mxu0 %v2158
    %2193 = vmatpush.msra.mxu0 %v2154
    %2194 = vmatpush.msra.mxu0 %v2150
    %2195 = vmatpush.msra.mxu0 %v2146
    %2196 = vmatpush.msra.mxu0 %v2142
    %2197 = vmatpush.msra.mxu0 %v2138
    %2198 = vmatpush.msra.mxu0 %v2134
    %2199 = vmatpush.msra.mxu0 %v2130
    %2200 = vmatpush.msra.mxu0 %v2126
    %2201 = vmatpush.msra.mxu0 %v2122
    %2202 = vmatmul.f32.gmra.mxu0 0.0
    %v2203 = vpop.f32.mrf.mxu0
    %v2204 = vadd.f32 %v2078, %v2203
    %2205 = vdwg.mxu0
    %2206 = vmatpush.msra.mxu0 %v2183
    %2207 = vmatpush.msra.mxu0 %v2179
    %2208 = vmatpush.msra.mxu0 %v2175
    %2209 = vmatpush.msra.mxu0 %v2171
    %2210 = vmatpush.msra.mxu0 %v2167
    %2211 = vmatpush.msra.mxu0 %v2163
    %2212 = vmatpush.msra.mxu0 %v2159
    %2213 = vmatpush.msra.mxu0 %v2155
    %2214 = vmatpush.msra.mxu0 %v2151
    %2215 = vmatpush.msra.mxu0 %v2147
    %2216 = vmatpush.msra.mxu0 %v2143
    %2217 = vmatpush.msra.mxu0 %v2139
    %2218 = vmatpush.msra.mxu0 %v2135
    %2219 = vmatpush.msra.mxu0 %v2131
    %2220 = vmatpush.msra.mxu0 %v2127
    %2221 = vmatpush.msra.mxu0 %v2123
    %2222 = vmatmul.f32.gmra.mxu0 0.0
    %v2223 = vpop.f32.mrf.mxu0
    %v2224 = vadd.f32 %v2079, %v2223
    %2225 = vdwg.mxu0
    %2226 = vmatpush.msra.mxu0 %v2184
    %2227 = vmatpush.msra.mxu0 %v2180
    %2228 = vmatpush.msra.mxu0 %v2176
    %2229 = vmatpush.msra.mxu0 %v2172
    %2230 = vmatpush.msra.mxu0 %v2168
    %2231 = vmatpush.msra.mxu0 %v2164
    %2232 = vmatpush.msra.mxu0 %v2160
    %2233 = vmatpush.msra.mxu0 %v2156
    %2234 = vmatpush.msra.mxu0 %v2152
    %2235 = vmatpush.msra.mxu0 %v2148
    %2236 = vmatpush.msra.mxu0 %v2144
    %2237 = vmatpush.msra.mxu0 %v2140
    %2238 = vmatpush.msra.mxu0 %v2136
    %2239 = vmatpush.msra.mxu0 %v2132
    %2240 = vmatpush.msra.mxu0 %v2128
    %2241 = vmatpush.msra.mxu0 %v2124
    %2242 = vmatmul.f32.gmra.mxu0 0.0
    %v2243 = vpop.f32.mrf.mxu0
    %v2244 = vadd.f32 %v2080, %v2243
    %2245 = vdwg.mxu0
    %2246 = vmatpush.msra.mxu0 %v2185
    %2247 = vmatpush.msra.mxu0 %v2181
    %2248 = vmatpush.msra.mxu0 %v2177
    %2249 = vmatpush.msra.mxu0 %v2173
    %2250 = vmatpush.msra.mxu0 %v2169
    %2251 = vmatpush.msra.mxu0 %v2165
    %2252 = vmatpush.msra.mxu0 %v2161
    %2253 = vmatpush.msra.mxu0 %v2157
    %2254 = vmatpush.msra.mxu0 %v2153
    %2255 = vmatpush.msra.mxu0 %v2149
    %2256 = vmatpush.msra.mxu0 %v2145
    %2257 = vmatpush.msra.mxu0 %v2141
    %2258 = vmatpush.msra.mxu0 %v2137
    %2259 = vmatpush.msra.mxu0 %v2133
    %2260 = vmatpush.msra.mxu0 %v2129
    %2261 = vmatpush.msra.mxu0 %v2125
    %2262 = vmatmul.f32.gmra.mxu0 0.0
    %v2263 = vpop.f32.mrf.mxu0
    %v2264 = vadd.f32 %v2081, %v2263
    %2265 = vdwg.mxu0
    %v2266 = vsub.f32 0.0, %v2204
    %v2267 = vmul.f32 %v2266, 1.442695
    %v2268 = vpow.pop %v2267
    %v2269 = vadd.f32 %v2268, 1.0
    %v2270 = vrcp.pop %v2269
    %v2271 = vmul.f32 %v2269, %v2270
    %v2272 = vsub.f32 1.0, %v2271
    %v2273 = vmul.f32 %v2270, %v2272
    %v2274 = vadd.f32 %v2270, %v2273
    %vm2275 = vweird.f32 %v2269
    %vm2276 = vweird.f32 %v2270
    %vm2277 = vmor %vm2275, %vm2276
    %v2278 = vsel %vm2277, %v2270, %v2274
    %v2279 = vand.u32 2147483647, %v2269
    %vm2280 = vcmp.eq.f32.partialorder %v2279, 8.507059e+37
    %v2281 = vand.u32 %v2269, 2147483648
    %v2282 = vor.u32 1.1754944e-38, %v2281
    %v2283 = vsel %vm2280, %v2282, %v2278
    %v2284 = vmul.f32 1.0, %v2283
    %v2285 = vsub.f32 0.0, %v2224
    %v2286 = vmul.f32 %v2285, 1.442695
    %v2287 = vpow.pop %v2286
    %v2288 = vadd.f32 %v2287, 1.0
    %v2289 = vrcp.pop %v2288
    %v2290 = vmul.f32 %v2288, %v2289
    %v2291 = vsub.f32 1.0, %v2290
    %v2292 = vmul.f32 %v2289, %v2291
    %v2293 = vadd.f32 %v2289, %v2292
    %vm2294 = vweird.f32 %v2288
    %vm2295 = vweird.f32 %v2289
    %vm2296 = vmor %vm2294, %vm2295
    %v2297 = vsel %vm2296, %v2289, %v2293
    %v2298 = vand.u32 2147483647, %v2288
    %vm2299 = vcmp.eq.f32.partialorder %v2298, 8.507059e+37
    %v2300 = vand.u32 %v2288, 2147483648
    %v2301 = vor.u32 1.1754944e-38, %v2300
    %v2302 = vsel %vm2299, %v2301, %v2297
    %v2303 = vmul.f32 1.0, %v2302
    %v2304 = vtanh.pop %v2244
    %v2305 = vsub.f32 0.0, %v2264
    %v2306 = vmul.f32 %v2305, 1.442695
    %v2307 = vpow.pop %v2306
    %v2308 = vadd.f32 %v2307, 1.0
    %v2309 = vrcp.pop %v2308
    %v2310 = vmul.f32 %v2308, %v2309
    %v2311 = vsub.f32 1.0, %v2310
    %v2312 = vmul.f32 %v2309, %v2311
    %v2313 = vadd.f32 %v2309, %v2312
    %vm2314 = vweird.f32 %v2308
    %vm2315 = vweird.f32 %v2309
    %vm2316 = vmor %vm2314, %vm2315
    %v2317 = vsel %vm2316, %v2309, %v2313
    %v2318 = vand.u32 2147483647, %v2308
    %vm2319 = vcmp.eq.f32.partialorder %v2318, 8.507059e+37
    %v2320 = vand.u32 %v2308, 2147483648
    %v2321 = vor.u32 1.1754944e-38, %v2320
    %v2322 = vsel %vm2319, %v2321, %v2317
    %v2323 = vmul.f32 1.0, %v2322
    %v2324 = vmul.f32 %v2303, 0.0
    %v2325 = vmul.f32 %v2284, %v2304
    %v2326 = vadd.f32 %v2324, %v2325
    %v2327 = vtanh.pop %v2326
    %v2328 = vmul.f32 %v2323, %v2327
    %v2333 = vrot.slane %v2090, 2
    %v2334 = vrot.slane %v2091, 2
    %v2335 = vrot.slane %v2092, 2
    %v2336 = vrot.slane %v2093, 2
    %2341 = vmatpush.msra.mxu0 %v2182
    %2342 = vmatpush.msra.mxu0 %v2178
    %2343 = vmatpush.msra.mxu0 %v2174
    %2344 = vmatpush.msra.mxu0 %v2170
    %2345 = vmatpush.msra.mxu0 %v2166
    %2346 = vmatpush.msra.mxu0 %v2162
    %2347 = vmatpush.msra.mxu0 %v2158
    %2348 = vmatpush.msra.mxu0 %v2154
    %2349 = vmatpush.msra.mxu0 %v2150
    %2350 = vmatpush.msra.mxu0 %v2146
    %2351 = vmatpush.msra.mxu0 %v2142
    %2352 = vmatpush.msra.mxu0 %v2138
    %2353 = vmatpush.msra.mxu0 %v2134
    %2354 = vmatpush.msra.mxu0 %v2130
    %2355 = vmatpush.msra.mxu0 %v2126
    %2356 = vmatpush.msra.mxu0 %v2122
    %2357 = vmatmul.f32.gmra.mxu0 %v2328
    %v2358 = vpop.f32.mrf.mxu0
    %v2359 = vadd.f32 %v2333, %v2358
    %2360 = vdwg.mxu0
    %2361 = vmatpush.msra.mxu0 %v2183
    %2362 = vmatpush.msra.mxu0 %v2179
    %2363 = vmatpush.msra.mxu0 %v2175
    %2364 = vmatpush.msra.mxu0 %v2171
    %2365 = vmatpush.msra.mxu0 %v2167
    %2366 = vmatpush.msra.mxu0 %v2163
    %2367 = vmatpush.msra.mxu0 %v2159
    %2368 = vmatpush.msra.mxu0 %v2155
    %2369 = vmatpush.msra.mxu0 %v2151
    %2370 = vmatpush.msra.mxu0 %v2147
    %2371 = vmatpush.msra.mxu0 %v2143
    %2372 = vmatpush.msra.mxu0 %v2139
    %2373 = vmatpush.msra.mxu0 %v2135
    %2374 = vmatpush.msra.mxu0 %v2131
    %2375 = vmatpush.msra.mxu0 %v2127
    %2376 = vmatpush.msra.mxu0 %v2123
    %2377 = vmatmul.f32.gmra.mxu0 %v2328
    %v2378 = vpop.f32.mrf.mxu0
    %v2379 = vadd.f32 %v2334, %v2378
    %2380 = vdwg.mxu0
    %2381 = vmatpush.msra.mxu0 %v2184
    %2382 = vmatpush.msra.mxu0 %v2180
    %2383 = vmatpush.msra.mxu0 %v2176
    %2384 = vmatpush.msra.mxu0 %v2172
    %2385 = vmatpush.msra.mxu0 %v2168
    %2386 = vmatpush.msra.mxu0 %v2164
    %2387 = vmatpush.msra.mxu0 %v2160
    %2388 = vmatpush.msra.mxu0 %v2156
    %2389 = vmatpush.msra.mxu0 %v2152
    %2390 = vmatpush.msra.mxu0 %v2148
    %2391 = vmatpush.msra.mxu0 %v2144
    %2392 = vmatpush.msra.mxu0 %v2140
    %2393 = vmatpush.msra.mxu0 %v2136
    %2394 = vmatpush.msra.mxu0 %v2132
    %2395 = vmatpush.msra.mxu0 %v2128
    %2396 = vmatpush.msra.mxu0 %v2124
    %2397 = vmatmul.f32.gmra.mxu0 %v2328
    %v2398 = vpop.f32.mrf.mxu0
    %v2399 = vadd.f32 %v2335, %v2398
    %2400 = vdwg.mxu0
    %2401 = vmatpush.msra.mxu0 %v2185
    %2402 = vmatpush.msra.mxu0 %v2181
    %2403 = vmatpush.msra.mxu0 %v2177
    %2404 = vmatpush.msra.mxu0 %v2173
    %2405 = vmatpush.msra.mxu0 %v2169
    %2406 = vmatpush.msra.mxu0 %v2165
    %2407 = vmatpush.msra.mxu0 %v2161
    %2408 = vmatpush.msra.mxu0 %v2157
    %2409 = vmatpush.msra.mxu0 %v2153
    %2410 = vmatpush.msra.mxu0 %v2149
    %2411 = vmatpush.msra.mxu0 %v2145
    %2412 = vmatpush.msra.mxu0 %v2141
    %2413 = vmatpush.msra.mxu0 %v2137
    %2414 = vmatpush.msra.mxu0 %v2133
    %2415 = vmatpush.msra.mxu0 %v2129
    %2416 = vmatpush.msra.mxu0 %v2125
    %2417 = vmatmul.f32.gmra.mxu0 %v2328
    %v2418 = vpop.f32.mrf.mxu0
    %v2419 = vadd.f32 %v2336, %v2418
    %2420 = vdwg.mxu0
    %v2421 = vsub.f32 0.0, %v2359
    %v2422 = vmul.f32 %v2421, 1.442695
    %v2423 = vpow.pop %v2422
    %v2424 = vadd.f32 %v2423, 1.0
    %v2425 = vrcp.pop %v2424
    %v2426 = vmul.f32 %v2424, %v2425
    %v2427 = vsub.f32 1.0, %v2426
    %v2428 = vmul.f32 %v2425, %v2427
    %v2429 = vadd.f32 %v2425, %v2428
    %vm2430 = vweird.f32 %v2424
    %vm2431 = vweird.f32 %v2425
    %vm2432 = vmor %vm2430, %vm2431
    %v2433 = vsel %vm2432, %v2425, %v2429
    %v2434 = vand.u32 2147483647, %v2424
    %vm2435 = vcmp.eq.f32.partialorder %v2434, 8.507059e+37
    %v2436 = vand.u32 %v2424, 2147483648
    %v2437 = vor.u32 1.1754944e-38, %v2436
    %v2438 = vsel %vm2435, %v2437, %v2433
    %v2439 = vmul.f32 1.0, %v2438
    %v2440 = vsub.f32 0.0, %v2379
    %v2441 = vmul.f32 %v2440, 1.442695
    %v2442 = vpow.pop %v2441
    %v2443 = vadd.f32 %v2442, 1.0
    %v2444 = vrcp.pop %v2443
    %v2445 = vmul.f32 %v2443, %v2444
    %v2446 = vsub.f32 1.0, %v2445
    %v2447 = vmul.f32 %v2444, %v2446
    %v2448 = vadd.f32 %v2444, %v2447
    %vm2449 = vweird.f32 %v2443
    %vm2450 = vweird.f32 %v2444
    %vm2451 = vmor %vm2449, %vm2450
    %v2452 = vsel %vm2451, %v2444, %v2448
    %v2453 = vand.u32 2147483647, %v2443
    %vm2454 = vcmp.eq.f32.partialorder %v2453, 8.507059e+37
    %v2455 = vand.u32 %v2443, 2147483648
    %v2456 = vor.u32 1.1754944e-38, %v2455
    %v2457 = vsel %vm2454, %v2456, %v2452
    %v2458 = vmul.f32 1.0, %v2457
    %v2459 = vtanh.pop %v2399
    %v2460 = vsub.f32 0.0, %v2419
    %v2461 = vmul.f32 %v2460, 1.442695
    %v2462 = vpow.pop %v2461
    %v2463 = vadd.f32 %v2462, 1.0
    %v2464 = vrcp.pop %v2463
    %v2465 = vmul.f32 %v2463, %v2464
    %v2466 = vsub.f32 1.0, %v2465
    %v2467 = vmul.f32 %v2464, %v2466
    %v2468 = vadd.f32 %v2464, %v2467
    %vm2469 = vweird.f32 %v2463
    %vm2470 = vweird.f32 %v2464
    %vm2471 = vmor %vm2469, %vm2470
    %v2472 = vsel %vm2471, %v2464, %v2468
    %v2473 = vand.u32 2147483647, %v2463
    %vm2474 = vcmp.eq.f32.partialorder %v2473, 8.507059e+37
    %v2475 = vand.u32 %v2463, 2147483648
    %v2476 = vor.u32 1.1754944e-38, %v2475
    %v2477 = vsel %vm2474, %v2476, %v2472
    %v2478 = vmul.f32 1.0, %v2477
    %v2479 = vmul.f32 %v2458, %v2326
    %v2480 = vmul.f32 %v2439, %v2459
    %v2481 = vadd.f32 %v2479, %v2480
    %v2482 = vtanh.pop %v2481
    %v2483 = vmul.f32 %v2478, %v2482
    %v2488 = vrot.slane %v2078, 4
    %v2489 = vrot.slane %v2079, 4
    %v2490 = vrot.slane %v2080, 4
    %v2491 = vrot.slane %v2081, 4
    %2496 = vmatpush.msra.mxu0 %v2182
    %2497 = vmatpush.msra.mxu0 %v2178
    %2498 = vmatpush.msra.mxu0 %v2174
    %2499 = vmatpush.msra.mxu0 %v2170
    %2500 = vmatpush.msra.mxu0 %v2166
    %2501 = vmatpush.msra.mxu0 %v2162
    %2502 = vmatpush.msra.mxu0 %v2158
    %2503 = vmatpush.msra.mxu0 %v2154
    %2504 = vmatpush.msra.mxu0 %v2150
    %2505 = vmatpush.msra.mxu0 %v2146
    %2506 = vmatpush.msra.mxu0 %v2142
    %2507 = vmatpush.msra.mxu0 %v2138
    %2508 = vmatpush.msra.mxu0 %v2134
    %2509 = vmatpush.msra.mxu0 %v2130
    %2510 = vmatpush.msra.mxu0 %v2126
    %2511 = vmatpush.msra.mxu0 %v2122
    %2512 = vmatmul.f32.gmra.mxu0 %v2483
    %v2513 = vpop.f32.mrf.mxu0
    %v2514 = vadd.f32 %v2488, %v2513
    %2515 = vdwg.mxu0
    %2516 = vmatpush.msra.mxu0 %v2183
    %2517 = vmatpush.msra.mxu0 %v2179
    %2518 = vmatpush.msra.mxu0 %v2175
    %2519 = vmatpush.msra.mxu0 %v2171
    %2520 = vmatpush.msra.mxu0 %v2167
    %2521 = vmatpush.msra.mxu0 %v2163
    %2522 = vmatpush.msra.mxu0 %v2159
    %2523 = vmatpush.msra.mxu0 %v2155
    %2524 = vmatpush.msra.mxu0 %v2151
    %2525 = vmatpush.msra.mxu0 %v2147
    %2526 = vmatpush.msra.mxu0 %v2143
    %2527 = vmatpush.msra.mxu0 %v2139
    %2528 = vmatpush.msra.mxu0 %v2135
    %2529 = vmatpush.msra.mxu0 %v2131
    %2530 = vmatpush.msra.mxu0 %v2127
    %2531 = vmatpush.msra.mxu0 %v2123
    %2532 = vmatmul.f32.gmra.mxu0 %v2483
    %v2533 = vpop.f32.mrf.mxu0
    %v2534 = vadd.f32 %v2489, %v2533
    %2535 = vdwg.mxu0
    %2536 = vmatpush.msra.mxu0 %v2184
    %2537 = vmatpush.msra.mxu0 %v2180
    %2538 = vmatpush.msra.mxu0 %v2176
    %2539 = vmatpush.msra.mxu0 %v2172
    %2540 = vmatpush.msra.mxu0 %v2168
    %2541 = vmatpush.msra.mxu0 %v2164
    %2542 = vmatpush.msra.mxu0 %v2160
    %2543 = vmatpush.msra.mxu0 %v2156
    %2544 = vmatpush.msra.mxu0 %v2152
    %2545 = vmatpush.msra.mxu0 %v2148
    %2546 = vmatpush.msra.mxu0 %v2144
    %2547 = vmatpush.msra.mxu0 %v2140
    %2548 = vmatpush.msra.mxu0 %v2136
    %2549 = vmatpush.msra.mxu0 %v2132
    %2550 = vmatpush.msra.mxu0 %v2128
    %2551 = vmatpush.msra.mxu0 %v2124
    %2552 = vmatmul.f32.gmra.mxu0 %v2483
    %v2553 = vpop.f32.mrf.mxu0
    %v2554 = vadd.f32 %v2490, %v2553
    %2555 = vdwg.mxu0
    %2556 = vmatpush.msra.mxu0 %v2185
    %2557 = vmatpush.msra.mxu0 %v2181
    %2558 = vmatpush.msra.mxu0 %v2177
    %2559 = vmatpush.msra.mxu0 %v2173
    %2560 = vmatpush.msra.mxu0 %v2169
    %2561 = vmatpush.msra.mxu0 %v2165
    %2562 = vmatpush.msra.mxu0 %v2161
    %2563 = vmatpush.msra.mxu0 %v2157
    %2564 = vmatpush.msra.mxu0 %v2153
    %2565 = vmatpush.msra.mxu0 %v2149
    %2566 = vmatpush.msra.mxu0 %v2145
    %2567 = vmatpush.msra.mxu0 %v2141
    %2568 = vmatpush.msra.mxu0 %v2137
    %2569 = vmatpush.msra.mxu0 %v2133
    %2570 = vmatpush.msra.mxu0 %v2129
    %2571 = vmatpush.msra.mxu0 %v2125
    %2572 = vmatmul.f32.gmra.mxu0 %v2483
    %v2573 = vpop.f32.mrf.mxu0
    %v2574 = vadd.f32 %v2491, %v2573
    %2575 = vdwg.mxu0
    %v2576 = vsub.f32 0.0, %v2514
    %v2577 = vmul.f32 %v2576, 1.442695
    %v2578 = vpow.pop %v2577
    %v2579 = vadd.f32 %v2578, 1.0
    %v2580 = vrcp.pop %v2579
    %v2581 = vmul.f32 %v2579, %v2580
    %v2582 = vsub.f32 1.0, %v2581
    %v2583 = vmul.f32 %v2580, %v2582
    %v2584 = vadd.f32 %v2580, %v2583
    %vm2585 = vweird.f32 %v2579
    %vm2586 = vweird.f32 %v2580
    %vm2587 = vmor %vm2585, %vm2586
    %v2588 = vsel %vm2587, %v2580, %v2584
    %v2589 = vand.u32 2147483647, %v2579
    %vm2590 = vcmp.eq.f32.partialorder %v2589, 8.507059e+37
    %v2591 = vand.u32 %v2579, 2147483648
    %v2592 = vor.u32 1.1754944e-38, %v2591
    %v2593 = vsel %vm2590, %v2592, %v2588
    %v2594 = vmul.f32 1.0, %v2593
    %v2595 = vsub.f32 0.0, %v2534
    %v2596 = vmul.f32 %v2595, 1.442695
    %v2597 = vpow.pop %v2596
    %v2598 = vadd.f32 %v2597, 1.0
    %v2599 = vrcp.pop %v2598
    %v2600 = vmul.f32 %v2598, %v2599
    %v2601 = vsub.f32 1.0, %v2600
    %v2602 = vmul.f32 %v2599, %v2601
    %v2603 = vadd.f32 %v2599, %v2602
    %vm2604 = vweird.f32 %v2598
    %vm2605 = vweird.f32 %v2599
    %vm2606 = vmor %vm2604, %vm2605
    %v2607 = vsel %vm2606, %v2599, %v2603
    %v2608 = vand.u32 2147483647, %v2598
    %vm2609 = vcmp.eq.f32.partialorder %v2608, 8.507059e+37
    %v2610 = vand.u32 %v2598, 2147483648
    %v2611 = vor.u32 1.1754944e-38, %v2610
    %v2612 = vsel %vm2609, %v2611, %v2607
    %v2613 = vmul.f32 1.0, %v2612
    %v2614 = vtanh.pop %v2554
    %v2615 = vsub.f32 0.0, %v2574
    %v2616 = vmul.f32 %v2615, 1.442695
    %v2617 = vpow.pop %v2616
    %v2618 = vadd.f32 %v2617, 1.0
    %v2619 = vrcp.pop %v2618
    %v2620 = vmul.f32 %v2618, %v2619
    %v2621 = vsub.f32 1.0, %v2620
    %v2622 = vmul.f32 %v2619, %v2621
    %v2623 = vadd.f32 %v2619, %v2622
    %vm2624 = vweird.f32 %v2618
    %vm2625 = vweird.f32 %v2619
    %vm2626 = vmor %vm2624, %vm2625
    %v2627 = vsel %vm2626, %v2619, %v2623
    %v2628 = vand.u32 2147483647, %v2618
    %vm2629 = vcmp.eq.f32.partialorder %v2628, 8.507059e+37
    %v2630 = vand.u32 %v2618, 2147483648
    %v2631 = vor.u32 1.1754944e-38, %v2630
    %v2632 = vsel %vm2629, %v2631, %v2627
    %v2633 = vmul.f32 1.0, %v2632
    %v2634 = vmul.f32 %v2613, %v2481
    %v2635 = vmul.f32 %v2594, %v2614
    %v2636 = vadd.f32 %v2634, %v2635
    %v2637 = vtanh.pop %v2636
    %v2638 = vmul.f32 %v2633, %v2637
    %v2639 = vrot.slane %v2090, 6
    %v2640 = vrot.slane %v2091, 6
    %v2641 = vrot.slane %v2092, 6
    %v2642 = vrot.slane %v2093, 6
    %2647 = vmatpush.msra.mxu0 %v2182
    %2648 = vmatpush.msra.mxu0 %v2178
    %2649 = vmatpush.msra.mxu0 %v2174
    %2650 = vmatpush.msra.mxu0 %v2170
    %2651 = vmatpush.msra.mxu0 %v2166
    %2652 = vmatpush.msra.mxu0 %v2162
    %2653 = vmatpush.msra.mxu0 %v2158
    %2654 = vmatpush.msra.mxu0 %v2154
    %2655 = vmatpush.msra.mxu0 %v2150
    %2656 = vmatpush.msra.mxu0 %v2146
    %2657 = vmatpush.msra.mxu0 %v2142
    %2658 = vmatpush.msra.mxu0 %v2138
    %2659 = vmatpush.msra.mxu0 %v2134
    %2660 = vmatpush.msra.mxu0 %v2130
    %2661 = vmatpush.msra.mxu0 %v2126
    %2662 = vmatpush.msra.mxu0 %v2122
    %2663 = vmatmul.f32.gmra.mxu0 %v2638
    %v2664 = vpop.f32.mrf.mxu0
    %v2665 = vadd.f32 %v2639, %v2664
    %2666 = vdwg.mxu0
    %2667 = vmatpush.msra.mxu0 %v2183
    %2668 = vmatpush.msra.mxu0 %v2179
    %2669 = vmatpush.msra.mxu0 %v2175
    %2670 = vmatpush.msra.mxu0 %v2171
    %2671 = vmatpush.msra.mxu0 %v2167
    %2672 = vmatpush.msra.mxu0 %v2163
    %2673 = vmatpush.msra.mxu0 %v2159
    %2674 = vmatpush.msra.mxu0 %v2155
    %2675 = vmatpush.msra.mxu0 %v2151
    %2676 = vmatpush.msra.mxu0 %v2147
    %2677 = vmatpush.msra.mxu0 %v2143
    %2678 = vmatpush.msra.mxu0 %v2139
    %2679 = vmatpush.msra.mxu0 %v2135
    %2680 = vmatpush.msra.mxu0 %v2131
    %2681 = vmatpush.msra.mxu0 %v2127
    %2682 = vmatpush.msra.mxu0 %v2123
    %2683 = vmatmul.f32.gmra.mxu0 %v2638
    %v2684 = vpop.f32.mrf.mxu0
    %v2685 = vadd.f32 %v2640, %v2684
    %2686 = vdwg.mxu0
    %2687 = vmatpush.msra.mxu0 %v2184
    %2688 = vmatpush.msra.mxu0 %v2180
    %2689 = vmatpush.msra.mxu0 %v2176
    %2690 = vmatpush.msra.mxu0 %v2172
    %2691 = vmatpush.msra.mxu0 %v2168
    %2692 = vmatpush.msra.mxu0 %v2164
    %2693 = vmatpush.msra.mxu0 %v2160
    %2694 = vmatpush.msra.mxu0 %v2156
    %2695 = vmatpush.msra.mxu0 %v2152
    %2696 = vmatpush.msra.mxu0 %v2148
    %2697 = vmatpush.msra.mxu0 %v2144
    %2698 = vmatpush.msra.mxu0 %v2140
    %2699 = vmatpush.msra.mxu0 %v2136
    %2700 = vmatpush.msra.mxu0 %v2132
    %2701 = vmatpush.msra.mxu0 %v2128
    %2702 = vmatpush.msra.mxu0 %v2124
    %2703 = vmatmul.f32.gmra.mxu0 %v2638
    %v2704 = vpop.f32.mrf.mxu0
    %v2705 = vadd.f32 %v2641, %v2704
    %2706 = vdwg.mxu0
    %2707 = vmatpush.msra.mxu0 %v2185
    %2708 = vmatpush.msra.mxu0 %v2181
    %2709 = vmatpush.msra.mxu0 %v2177
    %2710 = vmatpush.msra.mxu0 %v2173
    %2711 = vmatpush.msra.mxu0 %v2169
    %2712 = vmatpush.msra.mxu0 %v2165
    %2713 = vmatpush.msra.mxu0 %v2161
    %2714 = vmatpush.msra.mxu0 %v2157
    %2715 = vmatpush.msra.mxu0 %v2153
    %2716 = vmatpush.msra.mxu0 %v2149
    %2717 = vmatpush.msra.mxu0 %v2145
    %2718 = vmatpush.msra.mxu0 %v2141
    %2719 = vmatpush.msra.mxu0 %v2137
    %2720 = vmatpush.msra.mxu0 %v2133
    %2721 = vmatpush.msra.mxu0 %v2129
    %2722 = vmatpush.msra.mxu0 %v2125
    %2723 = vmatmul.f32.gmra.mxu0 %v2638
    %v2724 = vpop.f32.mrf.mxu0
    %v2725 = vadd.f32 %v2642, %v2724
    %2726 = vdwg.mxu0
    %v2727 = vsub.f32 0.0, %v2665
    %v2728 = vmul.f32 %v2727, 1.442695
    %v2729 = vpow.pop %v2728
    %v2730 = vadd.f32 %v2729, 1.0
    %v2731 = vrcp.pop %v2730
    %v2732 = vmul.f32 %v2730, %v2731
    %v2733 = vsub.f32 1.0, %v2732
    %v2734 = vmul.f32 %v2731, %v2733
    %v2735 = vadd.f32 %v2731, %v2734
    %vm2736 = vweird.f32 %v2730
    %vm2737 = vweird.f32 %v2731
    %vm2738 = vmor %vm2736, %vm2737
    %v2739 = vsel %vm2738, %v2731, %v2735
    %v2740 = vand.u32 2147483647, %v2730
    %vm2741 = vcmp.eq.f32.partialorder %v2740, 8.507059e+37
    %v2742 = vand.u32 %v2730, 2147483648
    %v2743 = vor.u32 1.1754944e-38, %v2742
    %v2744 = vsel %vm2741, %v2743, %v2739
    %v2745 = vmul.f32 1.0, %v2744
    %v2746 = vsub.f32 0.0, %v2685
    %v2747 = vmul.f32 %v2746, 1.442695
    %v2748 = vpow.pop %v2747
    %v2749 = vadd.f32 %v2748, 1.0
    %v2750 = vrcp.pop %v2749
    %v2751 = vmul.f32 %v2749, %v2750
    %v2752 = vsub.f32 1.0, %v2751
    %v2753 = vmul.f32 %v2750, %v2752
    %v2754 = vadd.f32 %v2750, %v2753
    %vm2755 = vweird.f32 %v2749
    %vm2756 = vweird.f32 %v2750
    %vm2757 = vmor %vm2755, %vm2756
    %v2758 = vsel %vm2757, %v2750, %v2754
    %v2759 = vand.u32 2147483647, %v2749
    %vm2760 = vcmp.eq.f32.partialorder %v2759, 8.507059e+37
    %v2761 = vand.u32 %v2749, 2147483648
    %v2762 = vor.u32 1.1754944e-38, %v2761
    %v2763 = vsel %vm2760, %v2762, %v2758
    %v2764 = vmul.f32 1.0, %v2763
    %v2765 = vtanh.pop %v2705
    %v2766 = vsub.f32 0.0, %v2725
    %v2767 = vmul.f32 %v2766, 1.442695
    %v2768 = vpow.pop %v2767
    %v2769 = vadd.f32 %v2768, 1.0
    %v2770 = vrcp.pop %v2769
    %v2771 = vmul.f32 %v2769, %v2770
    %v2772 = vsub.f32 1.0, %v2771
    %v2773 = vmul.f32 %v2770, %v2772
    %v2774 = vadd.f32 %v2770, %v2773
    %vm2775 = vweird.f32 %v2769
    %vm2776 = vweird.f32 %v2770
    %vm2777 = vmor %vm2775, %vm2776
    %v2778 = vsel %vm2777, %v2770, %v2774
    %v2779 = vand.u32 2147483647, %v2769
    %vm2780 = vcmp.eq.f32.partialorder %v2779, 8.507059e+37
    %v2781 = vand.u32 %v2769, 2147483648
    %v2782 = vor.u32 1.1754944e-38, %v2781
    %v2783 = vsel %vm2780, %v2782, %v2778
    %v2784 = vmul.f32 1.0, %v2783
    %v2785 = vmul.f32 %v2764, %v2636
    %v2786 = vmul.f32 %v2745, %v2765
    %v2787 = vadd.f32 %v2785, %v2786
    %v2788 = vtanh.pop %v2787
    %v2789 = vmul.f32 %v2784, %v2788
    %2790 = vmatpush.msra.mxu0 %v2182
    %2791 = vmatpush.msra.mxu0 %v2178
    %2792 = vmatpush.msra.mxu0 %v2174
    %2793 = vmatpush.msra.mxu0 %v2170
    %2794 = vmatpush.msra.mxu0 %v2166
    %2795 = vmatpush.msra.mxu0 %v2162
    %2796 = vmatpush.msra.mxu0 %v2158
    %2797 = vmatpush.msra.mxu0 %v2154
    %2798 = vmatpush.msra.mxu0 %v2150
    %2799 = vmatpush.msra.mxu0 %v2146
    %2800 = vmatpush.msra.mxu0 %v2142
    %2801 = vmatpush.msra.mxu0 %v2138
    %2802 = vmatpush.msra.mxu0 %v2134
    %2803 = vmatpush.msra.mxu0 %v2130
    %2804 = vmatpush.msra.mxu0 %v2126
    %2805 = vmatpush.msra.mxu0 %v2122
    %2806 = vmatmul.f32.gmra.mxu0 %v2789
    %v2807 = vpop.f32.mrf.mxu0
    %v2808 = vadd.f32 %v2106, %v2807
    %2809 = vdwg.mxu0
    %2810 = vmatpush.msra.mxu0 %v2183
    %2811 = vmatpush.msra.mxu0 %v2179
    %2812 = vmatpush.msra.mxu0 %v2175
    %2813 = vmatpush.msra.mxu0 %v2171
    %2814 = vmatpush.msra.mxu0 %v2167
    %2815 = vmatpush.msra.mxu0 %v2163
    %2816 = vmatpush.msra.mxu0 %v2159
    %2817 = vmatpush.msra.mxu0 %v2155
    %2818 = vmatpush.msra.mxu0 %v2151
    %2819 = vmatpush.msra.mxu0 %v2147
    %2820 = vmatpush.msra.mxu0 %v2143
    %2821 = vmatpush.msra.mxu0 %v2139
    %2822 = vmatpush.msra.mxu0 %v2135
    %2823 = vmatpush.msra.mxu0 %v2131
    %2824 = vmatpush.msra.mxu0 %v2127
    %2825 = vmatpush.msra.mxu0 %v2123
    %2826 = vmatmul.f32.gmra.mxu0 %v2789
    %v2827 = vpop.f32.mrf.mxu0
    %v2828 = vadd.f32 %v2107, %v2827
    %2829 = vdwg.mxu0
    %2830 = vmatpush.msra.mxu0 %v2184
    %2831 = vmatpush.msra.mxu0 %v2180
    %2832 = vmatpush.msra.mxu0 %v2176
    %2833 = vmatpush.msra.mxu0 %v2172
    %2834 = vmatpush.msra.mxu0 %v2168
    %2835 = vmatpush.msra.mxu0 %v2164
    %2836 = vmatpush.msra.mxu0 %v2160
    %2837 = vmatpush.msra.mxu0 %v2156
    %2838 = vmatpush.msra.mxu0 %v2152
    %2839 = vmatpush.msra.mxu0 %v2148
    %2840 = vmatpush.msra.mxu0 %v2144
    %2841 = vmatpush.msra.mxu0 %v2140
    %2842 = vmatpush.msra.mxu0 %v2136
    %2843 = vmatpush.msra.mxu0 %v2132
    %2844 = vmatpush.msra.mxu0 %v2128
    %2845 = vmatpush.msra.mxu0 %v2124
    %2846 = vmatmul.f32.gmra.mxu0 %v2789
    %v2847 = vpop.f32.mrf.mxu0
    %v2848 = vadd.f32 %v2108, %v2847
    %2849 = vdwg.mxu0
    %2850 = vmatpush.msra.mxu0 %v2185
    %2851 = vmatpush.msra.mxu0 %v2181
    %2852 = vmatpush.msra.mxu0 %v2177
    %2853 = vmatpush.msra.mxu0 %v2173
    %2854 = vmatpush.msra.mxu0 %v2169
    %2855 = vmatpush.msra.mxu0 %v2165
    %2856 = vmatpush.msra.mxu0 %v2161
    %2857 = vmatpush.msra.mxu0 %v2157
    %2858 = vmatpush.msra.mxu0 %v2153
    %2859 = vmatpush.msra.mxu0 %v2149
    %2860 = vmatpush.msra.mxu0 %v2145
    %2861 = vmatpush.msra.mxu0 %v2141
    %2862 = vmatpush.msra.mxu0 %v2137
    %2863 = vmatpush.msra.mxu0 %v2133
    %2864 = vmatpush.msra.mxu0 %v2129
    %2865 = vmatpush.msra.mxu0 %v2125
    %2866 = vmatmul.f32.gmra.mxu0 %v2789
    %v2867 = vpop.f32.mrf.mxu0
    %v2868 = vadd.f32 %v2109, %v2867
    %2869 = vdwg.mxu0
    %v2870 = vsub.f32 0.0, %v2808
    %v2871 = vmul.f32 %v2870, 1.442695
    %v2872 = vpow.pop %v2871
    %v2873 = vadd.f32 %v2872, 1.0
    %v2874 = vrcp.pop %v2873
    %v2875 = vmul.f32 %v2873, %v2874
    %v2876 = vsub.f32 1.0, %v2875
    %v2877 = vmul.f32 %v2874, %v2876
    %v2878 = vadd.f32 %v2874, %v2877
    %vm2879 = vweird.f32 %v2873
    %vm2880 = vweird.f32 %v2874
    %vm2881 = vmor %vm2879, %vm2880
    %v2882 = vsel %vm2881, %v2874, %v2878
    %v2883 = vand.u32 2147483647, %v2873
    %vm2884 = vcmp.eq.f32.partialorder %v2883, 8.507059e+37
    %v2885 = vand.u32 %v2873, 2147483648
    %v2886 = vor.u32 1.1754944e-38, %v2885
    %v2887 = vsel %vm2884, %v2886, %v2882
    %v2888 = vmul.f32 1.0, %v2887
    %v2889 = vsub.f32 0.0, %v2828
    %v2890 = vmul.f32 %v2889, 1.442695
    %v2891 = vpow.pop %v2890
    %v2892 = vadd.f32 %v2891, 1.0
    %v2893 = vrcp.pop %v2892
    %v2894 = vmul.f32 %v2892, %v2893
    %v2895 = vsub.f32 1.0, %v2894
    %v2896 = vmul.f32 %v2893, %v2895
    %v2897 = vadd.f32 %v2893, %v2896
    %vm2898 = vweird.f32 %v2892
    %vm2899 = vweird.f32 %v2893
    %vm2900 = vmor %vm2898, %vm2899
    %v2901 = vsel %vm2900, %v2893, %v2897
    %v2902 = vand.u32 2147483647, %v2892
    %vm2903 = vcmp.eq.f32.partialorder %v2902, 8.507059e+37
    %v2904 = vand.u32 %v2892, 2147483648
    %v2905 = vor.u32 1.1754944e-38, %v2904
    %v2906 = vsel %vm2903, %v2905, %v2901
    %v2907 = vmul.f32 1.0, %v2906
    %v2908 = vtanh.pop %v2848
    %v2909 = vsub.f32 0.0, %v2868
    %v2910 = vmul.f32 %v2909, 1.442695
    %v2911 = vpow.pop %v2910
    %v2912 = vadd.f32 %v2911, 1.0
    %v2913 = vrcp.pop %v2912
    %v2914 = vmul.f32 %v2912, %v2913
    %v2915 = vsub.f32 1.0, %v2914
    %v2916 = vmul.f32 %v2913, %v2915
    %v2917 = vadd.f32 %v2913, %v2916
    %vm2918 = vweird.f32 %v2912
    %vm2919 = vweird.f32 %v2913
    %vm2920 = vmor %vm2918, %vm2919
    %v2921 = vsel %vm2920, %v2913, %v2917
    %v2922 = vand.u32 2147483647, %v2912
    %vm2923 = vcmp.eq.f32.partialorder %v2922, 8.507059e+37
    %v2924 = vand.u32 %v2912, 2147483648
    %v2925 = vor.u32 1.1754944e-38, %v2924
    %v2926 = vsel %vm2923, %v2925, %v2921
    %v2927 = vmul.f32 1.0, %v2926
    %v2928 = vmul.f32 %v2907, %v2787
    %v2929 = vmul.f32 %v2888, %v2908
    %v2930 = vadd.f32 %v2928, %v2929
    %v2931 = vtanh.pop %v2930
    %v2932 = vmul.f32 %v2927, %v2931
    %v2937 = vrot.slane %v2118, 2
    %v2938 = vrot.slane %v2119, 2
    %v2939 = vrot.slane %v2120, 2
    %v2940 = vrot.slane %v2121, 2
    %2945 = vmatpush.msra.mxu0 %v2182
    %2946 = vmatpush.msra.mxu0 %v2178
    %2947 = vmatpush.msra.mxu0 %v2174
    %2948 = vmatpush.msra.mxu0 %v2170
    %2949 = vmatpush.msra.mxu0 %v2166
    %2950 = vmatpush.msra.mxu0 %v2162
    %2951 = vmatpush.msra.mxu0 %v2158
    %2952 = vmatpush.msra.mxu0 %v2154
    %2953 = vmatpush.msra.mxu0 %v2150
    %2954 = vmatpush.msra.mxu0 %v2146
    %2955 = vmatpush.msra.mxu0 %v2142
    %2956 = vmatpush.msra.mxu0 %v2138
    %2957 = vmatpush.msra.mxu0 %v2134
    %2958 = vmatpush.msra.mxu0 %v2130
    %2959 = vmatpush.msra.mxu0 %v2126
    %2960 = vmatpush.msra.mxu0 %v2122
    %2961 = vmatmul.f32.gmra.mxu0 %v2932
    %v2962 = vpop.f32.mrf.mxu0
    %v2963 = vadd.f32 %v2937, %v2962
    %2964 = vdwg.mxu0
    %2965 = vmatpush.msra.mxu0 %v2183
    %2966 = vmatpush.msra.mxu0 %v2179
    %2967 = vmatpush.msra.mxu0 %v2175
    %2968 = vmatpush.msra.mxu0 %v2171
    %2969 = vmatpush.msra.mxu0 %v2167
    %2970 = vmatpush.msra.mxu0 %v2163
    %2971 = vmatpush.msra.mxu0 %v2159
    %2972 = vmatpush.msra.mxu0 %v2155
    %2973 = vmatpush.msra.mxu0 %v2151
    %2974 = vmatpush.msra.mxu0 %v2147
    %2975 = vmatpush.msra.mxu0 %v2143
    %2976 = vmatpush.msra.mxu0 %v2139
    %2977 = vmatpush.msra.mxu0 %v2135
    %2978 = vmatpush.msra.mxu0 %v2131
    %2979 = vmatpush.msra.mxu0 %v2127
    %2980 = vmatpush.msra.mxu0 %v2123
    %2981 = vmatmul.f32.gmra.mxu0 %v2932
    %v2982 = vpop.f32.mrf.mxu0
    %v2983 = vadd.f32 %v2938, %v2982
    %2984 = vdwg.mxu0
    %2985 = vmatpush.msra.mxu0 %v2184
    %2986 = vmatpush.msra.mxu0 %v2180
    %2987 = vmatpush.msra.mxu0 %v2176
    %2988 = vmatpush.msra.mxu0 %v2172
    %2989 = vmatpush.msra.mxu0 %v2168
    %2990 = vmatpush.msra.mxu0 %v2164
    %2991 = vmatpush.msra.mxu0 %v2160
    %2992 = vmatpush.msra.mxu0 %v2156
    %2993 = vmatpush.msra.mxu0 %v2152
    %2994 = vmatpush.msra.mxu0 %v2148
    %2995 = vmatpush.msra.mxu0 %v2144
    %2996 = vmatpush.msra.mxu0 %v2140
    %2997 = vmatpush.msra.mxu0 %v2136
    %2998 = vmatpush.msra.mxu0 %v2132
    %2999 = vmatpush.msra.mxu0 %v2128
    %3000 = vmatpush.msra.mxu0 %v2124
    %3001 = vmatmul.f32.gmra.mxu0 %v2932
    %v3002 = vpop.f32.mrf.mxu0
    %v3003 = vadd.f32 %v2939, %v3002
    %3004 = vdwg.mxu0
    %3005 = vmatpush.msra.mxu0 %v2185
    %3006 = vmatpush.msra.mxu0 %v2181
    %3007 = vmatpush.msra.mxu0 %v2177
    %3008 = vmatpush.msra.mxu0 %v2173
    %3009 = vmatpush.msra.mxu0 %v2169
    %3010 = vmatpush.msra.mxu0 %v2165
    %3011 = vmatpush.msra.mxu0 %v2161
    %3012 = vmatpush.msra.mxu0 %v2157
    %3013 = vmatpush.msra.mxu0 %v2153
    %3014 = vmatpush.msra.mxu0 %v2149
    %3015 = vmatpush.msra.mxu0 %v2145
    %3016 = vmatpush.msra.mxu0 %v2141
    %3017 = vmatpush.msra.mxu0 %v2137
    %3018 = vmatpush.msra.mxu0 %v2133
    %3019 = vmatpush.msra.mxu0 %v2129
    %3020 = vmatpush.msra.mxu0 %v2125
    %3021 = vmatmul.f32.gmra.mxu0 %v2932
    %v3022 = vpop.f32.mrf.mxu0
    %v3023 = vadd.f32 %v2940, %v3022
    %3024 = vdwg.mxu0
    %v3025 = vsub.f32 0.0, %v2963
    %v3026 = vmul.f32 %v3025, 1.442695
    %v3027 = vpow.pop %v3026
    %v3028 = vadd.f32 %v3027, 1.0
    %v3029 = vrcp.pop %v3028
    %v3030 = vmul.f32 %v3028, %v3029
    %v3031 = vsub.f32 1.0, %v3030
    %v3032 = vmul.f32 %v3029, %v3031
    %v3033 = vadd.f32 %v3029, %v3032
    %vm3034 = vweird.f32 %v3028
    %vm3035 = vweird.f32 %v3029
    %vm3036 = vmor %vm3034, %vm3035
    %v3037 = vsel %vm3036, %v3029, %v3033
    %v3038 = vand.u32 2147483647, %v3028
    %vm3039 = vcmp.eq.f32.partialorder %v3038, 8.507059e+37
    %v3040 = vand.u32 %v3028, 2147483648
    %v3041 = vor.u32 1.1754944e-38, %v3040
    %v3042 = vsel %vm3039, %v3041, %v3037
    %v3043 = vmul.f32 1.0, %v3042
    %v3044 = vsub.f32 0.0, %v2983
    %v3045 = vmul.f32 %v3044, 1.442695
    %v3046 = vpow.pop %v3045
    %v3047 = vadd.f32 %v3046, 1.0
    %v3048 = vrcp.pop %v3047
    %v3049 = vmul.f32 %v3047, %v3048
    %v3050 = vsub.f32 1.0, %v3049
    %v3051 = vmul.f32 %v3048, %v3050
    %v3052 = vadd.f32 %v3048, %v3051
    %vm3053 = vweird.f32 %v3047
    %vm3054 = vweird.f32 %v3048
    %vm3055 = vmor %vm3053, %vm3054
    %v3056 = vsel %vm3055, %v3048, %v3052
    %v3057 = vand.u32 2147483647, %v3047
    %vm3058 = vcmp.eq.f32.partialorder %v3057, 8.507059e+37
    %v3059 = vand.u32 %v3047, 2147483648
    %v3060 = vor.u32 1.1754944e-38, %v3059
    %v3061 = vsel %vm3058, %v3060, %v3056
    %v3062 = vmul.f32 1.0, %v3061
    %v3063 = vtanh.pop %v3003
    %v3064 = vsub.f32 0.0, %v3023
    %v3065 = vmul.f32 %v3064, 1.442695
    %v3066 = vpow.pop %v3065
    %v3067 = vadd.f32 %v3066, 1.0
    %v3068 = vrcp.pop %v3067
    %v3069 = vmul.f32 %v3067, %v3068
    %v3070 = vsub.f32 1.0, %v3069
    %v3071 = vmul.f32 %v3068, %v3070
    %v3072 = vadd.f32 %v3068, %v3071
    %vm3073 = vweird.f32 %v3067
    %vm3074 = vweird.f32 %v3068
    %vm3075 = vmor %vm3073, %vm3074
    %v3076 = vsel %vm3075, %v3068, %v3072
    %v3077 = vand.u32 2147483647, %v3067
    %vm3078 = vcmp.eq.f32.partialorder %v3077, 8.507059e+37
    %v3079 = vand.u32 %v3067, 2147483648
    %v3080 = vor.u32 1.1754944e-38, %v3079
    %v3081 = vsel %vm3078, %v3080, %v3076
    %v3082 = vmul.f32 1.0, %v3081
    %v3083 = vmul.f32 %v3062, %v2930
    %v3084 = vmul.f32 %v3043, %v3063
    %v3085 = vadd.f32 %v3083, %v3084
    %v3086 = vtanh.pop %v3085
    %v3087 = vmul.f32 %v3082, %v3086
    %v3092 = vrot.slane %v2106, 4
    %v3093 = vrot.slane %v2107, 4
    %v3094 = vrot.slane %v2108, 4
    %v3095 = vrot.slane %v2109, 4
    %3100 = vmatpush.msra.mxu0 %v2182
    %3101 = vmatpush.msra.mxu0 %v2178
    %3102 = vmatpush.msra.mxu0 %v2174
    %3103 = vmatpush.msra.mxu0 %v2170
    %3104 = vmatpush.msra.mxu0 %v2166
    %3105 = vmatpush.msra.mxu0 %v2162
    %3106 = vmatpush.msra.mxu0 %v2158
    %3107 = vmatpush.msra.mxu0 %v2154
    %3108 = vmatpush.msra.mxu0 %v2150
    %3109 = vmatpush.msra.mxu0 %v2146
    %3110 = vmatpush.msra.mxu0 %v2142
    %3111 = vmatpush.msra.mxu0 %v2138
    %3112 = vmatpush.msra.mxu0 %v2134
    %3113 = vmatpush.msra.mxu0 %v2130
    %3114 = vmatpush.msra.mxu0 %v2126
    %3115 = vmatpush.msra.mxu0 %v2122
    %3116 = vmatmul.f32.gmra.mxu0 %v3087
    %v3117 = vpop.f32.mrf.mxu0
    %v3118 = vadd.f32 %v3092, %v3117
    %3119 = vdwg.mxu0
    %3120 = vmatpush.msra.mxu0 %v2183
    %3121 = vmatpush.msra.mxu0 %v2179
    %3122 = vmatpush.msra.mxu0 %v2175
    %3123 = vmatpush.msra.mxu0 %v2171
    %3124 = vmatpush.msra.mxu0 %v2167
    %3125 = vmatpush.msra.mxu0 %v2163
    %3126 = vmatpush.msra.mxu0 %v2159
    %3127 = vmatpush.msra.mxu0 %v2155
    %3128 = vmatpush.msra.mxu0 %v2151
    %3129 = vmatpush.msra.mxu0 %v2147
    %3130 = vmatpush.msra.mxu0 %v2143
    %3131 = vmatpush.msra.mxu0 %v2139
    %3132 = vmatpush.msra.mxu0 %v2135
    %3133 = vmatpush.msra.mxu0 %v2131
    %3134 = vmatpush.msra.mxu0 %v2127
    %3135 = vmatpush.msra.mxu0 %v2123
    %3136 = vmatmul.f32.gmra.mxu0 %v3087
    %v3137 = vpop.f32.mrf.mxu0
    %v3138 = vadd.f32 %v3093, %v3137
    %3139 = vdwg.mxu0
    %3140 = vmatpush.msra.mxu0 %v2184
    %3141 = vmatpush.msra.mxu0 %v2180
    %3142 = vmatpush.msra.mxu0 %v2176
    %3143 = vmatpush.msra.mxu0 %v2172
    %3144 = vmatpush.msra.mxu0 %v2168
    %3145 = vmatpush.msra.mxu0 %v2164
    %3146 = vmatpush.msra.mxu0 %v2160
    %3147 = vmatpush.msra.mxu0 %v2156
    %3148 = vmatpush.msra.mxu0 %v2152
    %3149 = vmatpush.msra.mxu0 %v2148
    %3150 = vmatpush.msra.mxu0 %v2144
    %3151 = vmatpush.msra.mxu0 %v2140
    %3152 = vmatpush.msra.mxu0 %v2136
    %3153 = vmatpush.msra.mxu0 %v2132
    %3154 = vmatpush.msra.mxu0 %v2128
    %3155 = vmatpush.msra.mxu0 %v2124
    %3156 = vmatmul.f32.gmra.mxu0 %v3087
    %v3157 = vpop.f32.mrf.mxu0
    %v3158 = vadd.f32 %v3094, %v3157
    %3159 = vdwg.mxu0
    %3160 = vmatpush.msra.mxu0 %v2185
    %3161 = vmatpush.msra.mxu0 %v2181
    %3162 = vmatpush.msra.mxu0 %v2177
    %3163 = vmatpush.msra.mxu0 %v2173
    %3164 = vmatpush.msra.mxu0 %v2169
    %3165 = vmatpush.msra.mxu0 %v2165
    %3166 = vmatpush.msra.mxu0 %v2161
    %3167 = vmatpush.msra.mxu0 %v2157
    %3168 = vmatpush.msra.mxu0 %v2153
    %3169 = vmatpush.msra.mxu0 %v2149
    %3170 = vmatpush.msra.mxu0 %v2145
    %3171 = vmatpush.msra.mxu0 %v2141
    %3172 = vmatpush.msra.mxu0 %v2137
    %3173 = vmatpush.msra.mxu0 %v2133
    %3174 = vmatpush.msra.mxu0 %v2129
    %3175 = vmatpush.msra.mxu0 %v2125
    %3176 = vmatmul.f32.gmra.mxu0 %v3087
    %v3177 = vpop.f32.mrf.mxu0
    %v3178 = vadd.f32 %v3095, %v3177
    %3179 = vdwg.mxu0
    %v3180 = vsub.f32 0.0, %v3118
    %v3181 = vmul.f32 %v3180, 1.442695
    %v3182 = vpow.pop %v3181
    %v3183 = vadd.f32 %v3182, 1.0
    %v3184 = vrcp.pop %v3183
    %v3185 = vmul.f32 %v3183, %v3184
    %v3186 = vsub.f32 1.0, %v3185
    %v3187 = vmul.f32 %v3184, %v3186
    %v3188 = vadd.f32 %v3184, %v3187
    %vm3189 = vweird.f32 %v3183
    %vm3190 = vweird.f32 %v3184
    %vm3191 = vmor %vm3189, %vm3190
    %v3192 = vsel %vm3191, %v3184, %v3188
    %v3193 = vand.u32 2147483647, %v3183
    %vm3194 = vcmp.eq.f32.partialorder %v3193, 8.507059e+37
    %v3195 = vand.u32 %v3183, 2147483648
    %v3196 = vor.u32 1.1754944e-38, %v3195
    %v3197 = vsel %vm3194, %v3196, %v3192
    %v3198 = vmul.f32 1.0, %v3197
    %v3199 = vsub.f32 0.0, %v3138
    %v3200 = vmul.f32 %v3199, 1.442695
    %v3201 = vpow.pop %v3200
    %v3202 = vadd.f32 %v3201, 1.0
    %v3203 = vrcp.pop %v3202
    %v3204 = vmul.f32 %v3202, %v3203
    %v3205 = vsub.f32 1.0, %v3204
    %v3206 = vmul.f32 %v3203, %v3205
    %v3207 = vadd.f32 %v3203, %v3206
    %vm3208 = vweird.f32 %v3202
    %vm3209 = vweird.f32 %v3203
    %vm3210 = vmor %vm3208, %vm3209
    %v3211 = vsel %vm3210, %v3203, %v3207
    %v3212 = vand.u32 2147483647, %v3202
    %vm3213 = vcmp.eq.f32.partialorder %v3212, 8.507059e+37
    %v3214 = vand.u32 %v3202, 2147483648
    %v3215 = vor.u32 1.1754944e-38, %v3214
    %v3216 = vsel %vm3213, %v3215, %v3211
    %v3217 = vmul.f32 1.0, %v3216
    %v3218 = vtanh.pop %v3158
    %v3219 = vsub.f32 0.0, %v3178
    %v3220 = vmul.f32 %v3219, 1.442695
    %v3221 = vpow.pop %v3220
    %v3222 = vadd.f32 %v3221, 1.0
    %v3223 = vrcp.pop %v3222
    %v3224 = vmul.f32 %v3222, %v3223
    %v3225 = vsub.f32 1.0, %v3224
    %v3226 = vmul.f32 %v3223, %v3225
    %v3227 = vadd.f32 %v3223, %v3226
    %vm3228 = vweird.f32 %v3222
    %vm3229 = vweird.f32 %v3223
    %vm3230 = vmor %vm3228, %vm3229
    %v3231 = vsel %vm3230, %v3223, %v3227
    %v3232 = vand.u32 2147483647, %v3222
    %vm3233 = vcmp.eq.f32.partialorder %v3232, 8.507059e+37
    %v3234 = vand.u32 %v3222, 2147483648
    %v3235 = vor.u32 1.1754944e-38, %v3234
    %v3236 = vsel %vm3233, %v3235, %v3231
    %v3237 = vmul.f32 1.0, %v3236
    %v3238 = vmul.f32 %v3217, %v3085
    %v3239 = vmul.f32 %v3198, %v3218
    %v3240 = vadd.f32 %v3238, %v3239
    %v3241 = vtanh.pop %v3240
    %v3242 = vmul.f32 %v3237, %v3241
    %v3243 = vrot.slane %v2118, 6
    %v3244 = vrot.slane %v2119, 6
    %v3245 = vrot.slane %v2120, 6
    %v3246 = vrot.slane %v2121, 6
    %3251 = vmatpush.msra.mxu0 %v2182
    %3252 = vmatpush.msra.mxu0 %v2178
    %3253 = vmatpush.msra.mxu0 %v2174
    %3254 = vmatpush.msra.mxu0 %v2170
    %3255 = vmatpush.msra.mxu0 %v2166
    %3256 = vmatpush.msra.mxu0 %v2162
    %3257 = vmatpush.msra.mxu0 %v2158
    %3258 = vmatpush.msra.mxu0 %v2154
    %3259 = vmatpush.msra.mxu0 %v2150
    %3260 = vmatpush.msra.mxu0 %v2146
    %3261 = vmatpush.msra.mxu0 %v2142
    %3262 = vmatpush.msra.mxu0 %v2138
    %3263 = vmatpush.msra.mxu0 %v2134
    %3264 = vmatpush.msra.mxu0 %v2130
    %3265 = vmatpush.msra.mxu0 %v2126
    %3266 = vmatpush.msra.mxu0 %v2122
    %3267 = vmatmul.f32.gmra.mxu0 %v3242
    %v3268 = vpop.f32.mrf.mxu0
    %v3269 = vadd.f32 %v3243, %v3268
    %3270 = vdwg.mxu0
    %3271 = vmatpush.msra.mxu0 %v2183
    %3272 = vmatpush.msra.mxu0 %v2179
    %3273 = vmatpush.msra.mxu0 %v2175
    %3274 = vmatpush.msra.mxu0 %v2171
    %3275 = vmatpush.msra.mxu0 %v2167
    %3276 = vmatpush.msra.mxu0 %v2163
    %3277 = vmatpush.msra.mxu0 %v2159
    %3278 = vmatpush.msra.mxu0 %v2155
    %3279 = vmatpush.msra.mxu0 %v2151
    %3280 = vmatpush.msra.mxu0 %v2147
    %3281 = vmatpush.msra.mxu0 %v2143
    %3282 = vmatpush.msra.mxu0 %v2139
    %3283 = vmatpush.msra.mxu0 %v2135
    %3284 = vmatpush.msra.mxu0 %v2131
    %3285 = vmatpush.msra.mxu0 %v2127
    %3286 = vmatpush.msra.mxu0 %v2123
    %3287 = vmatmul.f32.gmra.mxu0 %v3242
    %v3288 = vpop.f32.mrf.mxu0
    %v3289 = vadd.f32 %v3244, %v3288
    %3290 = vdwg.mxu0
    %3291 = vmatpush.msra.mxu0 %v2184
    %3292 = vmatpush.msra.mxu0 %v2180
    %3293 = vmatpush.msra.mxu0 %v2176
    %3294 = vmatpush.msra.mxu0 %v2172
    %3295 = vmatpush.msra.mxu0 %v2168
    %3296 = vmatpush.msra.mxu0 %v2164
    %3297 = vmatpush.msra.mxu0 %v2160
    %3298 = vmatpush.msra.mxu0 %v2156
    %3299 = vmatpush.msra.mxu0 %v2152
    %3300 = vmatpush.msra.mxu0 %v2148
    %3301 = vmatpush.msra.mxu0 %v2144
    %3302 = vmatpush.msra.mxu0 %v2140
    %3303 = vmatpush.msra.mxu0 %v2136
    %3304 = vmatpush.msra.mxu0 %v2132
    %3305 = vmatpush.msra.mxu0 %v2128
    %3306 = vmatpush.msra.mxu0 %v2124
    %3307 = vmatmul.f32.gmra.mxu0 %v3242
    %v3308 = vpop.f32.mrf.mxu0
    %v3309 = vadd.f32 %v3245, %v3308
    %3310 = vdwg.mxu0
    %3311 = vmatpush.msra.mxu0 %v2185
    %3312 = vmatpush.msra.mxu0 %v2181
    %3313 = vmatpush.msra.mxu0 %v2177
    %3314 = vmatpush.msra.mxu0 %v2173
    %3315 = vmatpush.msra.mxu0 %v2169
    %3316 = vmatpush.msra.mxu0 %v2165
    %3317 = vmatpush.msra.mxu0 %v2161
    %3318 = vmatpush.msra.mxu0 %v2157
    %3319 = vmatpush.msra.mxu0 %v2153
    %3320 = vmatpush.msra.mxu0 %v2149
    %3321 = vmatpush.msra.mxu0 %v2145
    %3322 = vmatpush.msra.mxu0 %v2141
    %3323 = vmatpush.msra.mxu0 %v2137
    %3324 = vmatpush.msra.mxu0 %v2133
    %3325 = vmatpush.msra.mxu0 %v2129
    %3326 = vmatpush.msra.mxu0 %v2125
    %3327 = vmatmul.f32.gmra.mxu0 %v3242
    %v3328 = vpop.f32.mrf.mxu0
    %v3329 = vadd.f32 %v3246, %v3328
    %3330 = vdwg.mxu0
    %v3331 = vsub.f32 0.0, %v3269
    %v3332 = vmul.f32 %v3331, 1.442695
    %v3333 = vpow.pop %v3332
    %v3334 = vadd.f32 %v3333, 1.0
    %v3335 = vrcp.pop %v3334
    %v3336 = vmul.f32 %v3334, %v3335
    %v3337 = vsub.f32 1.0, %v3336
    %v3338 = vmul.f32 %v3335, %v3337
    %v3339 = vadd.f32 %v3335, %v3338
    %vm3340 = vweird.f32 %v3334
    %vm3341 = vweird.f32 %v3335
    %vm3342 = vmor %vm3340, %vm3341
    %v3343 = vsel %vm3342, %v3335, %v3339
    %v3344 = vand.u32 2147483647, %v3334
    %vm3345 = vcmp.eq.f32.partialorder %v3344, 8.507059e+37
    %v3346 = vand.u32 %v3334, 2147483648
    %v3347 = vor.u32 1.1754944e-38, %v3346
    %v3348 = vsel %vm3345, %v3347, %v3343
    %v3349 = vmul.f32 1.0, %v3348
    %v3350 = vsub.f32 0.0, %v3289
    %v3351 = vmul.f32 %v3350, 1.442695
    %v3352 = vpow.pop %v3351
    %v3353 = vadd.f32 %v3352, 1.0
    %v3354 = vrcp.pop %v3353
    %v3355 = vmul.f32 %v3353, %v3354
    %v3356 = vsub.f32 1.0, %v3355
    %v3357 = vmul.f32 %v3354, %v3356
    %v3358 = vadd.f32 %v3354, %v3357
    %vm3359 = vweird.f32 %v3353
    %vm3360 = vweird.f32 %v3354
    %vm3361 = vmor %vm3359, %vm3360
    %v3362 = vsel %vm3361, %v3354, %v3358
    %v3363 = vand.u32 2147483647, %v3353
    %vm3364 = vcmp.eq.f32.partialorder %v3363, 8.507059e+37
    %v3365 = vand.u32 %v3353, 2147483648
    %v3366 = vor.u32 1.1754944e-38, %v3365
    %v3367 = vsel %vm3364, %v3366, %v3362
    %v3368 = vmul.f32 1.0, %v3367
    %v3369 = vtanh.pop %v3309
    %v3370 = vsub.f32 0.0, %v3329
    %v3371 = vmul.f32 %v3370, 1.442695
    %v3372 = vpow.pop %v3371
    %v3373 = vadd.f32 %v3372, 1.0
    %v3374 = vrcp.pop %v3373
    %v3375 = vmul.f32 %v3373, %v3374
    %v3376 = vsub.f32 1.0, %v3375
    %v3377 = vmul.f32 %v3374, %v3376
    %v3378 = vadd.f32 %v3374, %v3377
    %vm3379 = vweird.f32 %v3373
    %vm3380 = vweird.f32 %v3374
    %vm3381 = vmor %vm3379, %vm3380
    %v3382 = vsel %vm3381, %v3374, %v3378
    %v3383 = vand.u32 2147483647, %v3373
    %vm3384 = vcmp.eq.f32.partialorder %v3383, 8.507059e+37
    %v3385 = vand.u32 %v3373, 2147483648
    %v3386 = vor.u32 1.1754944e-38, %v3385
    %v3387 = vsel %vm3384, %v3386, %v3382
    %v3388 = vmul.f32 1.0, %v3387
    %v3389 = vmul.f32 %v3368, %v3240
    %v3390 = vmul.f32 %v3349, %v3369
    %v3391 = vadd.f32 %v3389, %v3390
    %v3392 = vtanh.pop %v3391
    %v3393 = vmul.f32 %v3388, %v3392
    %v3394 = vld [vmem:[#allocation13] sm:$0xff]
    %v3395 = vld [vmem:[#allocation13 + $0x8] sm:$0xff]
    %v3396 = vld [vmem:[#allocation13 + $0x10] sm:$0xff]
    %v3397 = vld [vmem:[#allocation13 + $0x18] sm:$0xff]
    %v3398 = vld [vmem:[#allocation13 + $0x20] sm:$0xff]
    %v3399 = vld [vmem:[#allocation13 + $0x28] sm:$0xff]
    %v3400 = vld [vmem:[#allocation13 + $0x30] sm:$0xff]
    %v3401 = vld [vmem:[#allocation13 + $0x38] sm:$0xff]
    %v3402 = vld [vmem:[#allocation13 + $0x40] sm:$0xff]
    %v3403 = vld [vmem:[#allocation13 + $0x48] sm:$0xff]
    %v3404 = vld [vmem:[#allocation13 + $0x50] sm:$0xff]
    %v3405 = vld [vmem:[#allocation13 + $0x58] sm:$0xff]
    %v3406 = vld [vmem:[#allocation13 + $0x60] sm:$0xff]
    %v3407 = vld [vmem:[#allocation13 + $0x68] sm:$0xff]
    %v3408 = vld [vmem:[#allocation13 + $0x70] sm:$0xff]
    %v3409 = vld [vmem:[#allocation13 + $0x78] sm:$0xff]
    %v3410 = vld [vmem:[%s10] sm:$0x1]
    %v3411 = vld [vmem:[#allocation14] sm:$0xff]
    %v3412 = vld [vmem:[#allocation14 + $0x8] sm:$0xff]
    %v3413 = vld [vmem:[#allocation14 + $0x10] sm:$0xff]
    %v3414 = vld [vmem:[#allocation14 + $0x18] sm:$0xff]
    %v3415 = vld [vmem:[#allocation14 + $0x20] sm:$0xff]
    %v3416 = vld [vmem:[#allocation14 + $0x28] sm:$0xff]
    %v3417 = vld [vmem:[#allocation14 + $0x30] sm:$0xff]
    %v3418 = vld [vmem:[#allocation14 + $0x38] sm:$0xff]
    %v3419 = vld [vmem:[#allocation14 + $0x40] sm:$0xff]
    %v3420 = vld [vmem:[#allocation14 + $0x48] sm:$0xff]
    %v3421 = vld [vmem:[#allocation14 + $0x50] sm:$0xff]
    %v3422 = vld [vmem:[#allocation14 + $0x58] sm:$0xff]
    %v3423 = vld [vmem:[#allocation14 + $0x60] sm:$0xff]
    %v3424 = vld [vmem:[#allocation14 + $0x68] sm:$0xff]
    %v3425 = vld [vmem:[#allocation14 + $0x70] sm:$0xff]
    %v3426 = vld [vmem:[#allocation14 + $0x78] sm:$0xff]
    %v3427 = vld [vmem:[%s12] sm:$0x1]
    %v3429 = vperm.slane %v3410, 0
    %3431 = vmatpush.msra.mxu0 %v3409
    %3432 = vmatpush.msra.mxu0 %v3408
    %3433 = vmatpush.msra.mxu0 %v3407
    %3434 = vmatpush.msra.mxu0 %v3406
    %3435 = vmatpush.msra.mxu0 %v3405
    %3436 = vmatpush.msra.mxu0 %v3404
    %3437 = vmatpush.msra.mxu0 %v3403
    %3438 = vmatpush.msra.mxu0 %v3402
    %3439 = vmatpush.msra.mxu0 %v3401
    %3440 = vmatpush.msra.mxu0 %v3400
    %3441 = vmatpush.msra.mxu0 %v3399
    %3442 = vmatpush.msra.mxu0 %v3398
    %3443 = vmatpush.msra.mxu0 %v3397
    %3444 = vmatpush.msra.mxu0 %v3396
    %3445 = vmatpush.msra.mxu0 %v3395
    %3446 = vmatpush.msra.mxu0 %v3394
    %3447 = vmatmul.f32.gmra.mxu0 %v3393
    %v3448 = vpop.f32.mrf.mxu0
    %v3449 = vadd.f32 %v3429, %v3448
    %3450 = vdwg.mxu0
    %v3451 = vmax.f32 %v3449, 0.0
    %v3453 = vperm.slane %v3427, 0
    %3455 = vmatpush.msra.mxu0 %v3426
    %3456 = vmatpush.msra.mxu0 %v3425
    %3457 = vmatpush.msra.mxu0 %v3424
    %3458 = vmatpush.msra.mxu0 %v3423
    %3459 = vmatpush.msra.mxu0 %v3422
    %3460 = vmatpush.msra.mxu0 %v3421
    %3461 = vmatpush.msra.mxu0 %v3420
    %3462 = vmatpush.msra.mxu0 %v3419
    %3463 = vmatpush.msra.mxu0 %v3418
    %3464 = vmatpush.msra.mxu0 %v3417
    %3465 = vmatpush.msra.mxu0 %v3416
    %3466 = vmatpush.msra.mxu0 %v3415
    %3467 = vmatpush.msra.mxu0 %v3414
    %3468 = vmatpush.msra.mxu0 %v3413
    %3469 = vmatpush.msra.mxu0 %v3412
    %3470 = vmatpush.msra.mxu0 %v3411
    %3471 = vmatmul.f32.gmra.mxu0 %v3451
    %v3472 = vpop.f32.mrf.mxu0
    %v3473 = vadd.f32 %v3453, %v3472
    %3474 = vdwg.mxu0
    %v3475 = vmax.f32 %v3473, 0.0
    %vm3476 = vcmask 33792
    %3477 = vst.msk [vmem:[#allocation16] sm:$0x3] %vm3476, %v3475
    // Predicated region
    $region86: #{lstm_model_forward.1} parent=1 // pred_check
      _
    $region87: #{lstm_model_forward.1} parent=1 // pred_check_branch
      %3479 = sbr.rel (0) target = $region89
    $region88: #{lstm_model_forward.1} parent=1 // pred_region
      %3481 = vsyncadd [#allocation4], 0
      %s3483 = sshll.u32 [#allocation16], 4
      %s3484 = int_to_ptr.vmem [resolvable:$true] %s3483
      %s3485 = sshll.u32 %s13, 4
      %s3486 = int_to_ptr.hbm [resolvable:$true] %s3485
      %3488 = dma.vmem_to_hbm [thread:$0]  %s3484, 32, %s3486, [#allocation4]
    $region89: #{lstm_model_forward.1} parent=1 // pred_fallthru
      _
    // Predicated region
    $region90: #{lstm_model_forward.1} parent=1 // pred_check
      _
    $region91: #{lstm_model_forward.1} parent=1 // pred_check_branch
      %3490 = sbr.rel (0) target = $region93
    $region92: #{lstm_model_forward.1} parent=1 // pred_region
      %3492 = dma.done [#allocation4], 32
    $region93: #{lstm_model_forward.1} parent=1 // pred_fallthru
      _
    %3493 = vsyncpa [#allocation3], 1
    %3494 = vsyncpa [#allocation6], 1
    %3495 = vsyncpa [#allocation9], 1
    %3496 = vsyncpa [#allocation12], 1
    %3497 = vsyncpa [#allocation15], 1
    %3498 = vsyncpa [#allocation4], 1

</llo_original>
